<compile_context>
chip_gen: v7x
topology: tpu7x:2x2x1
jax: 0.10.0
libtpu: 0.0.40
codegen_flags: <defaults>
</compile_context>

<pallas_src>
import functools
import math

import numpy as np
import jax
import jax.numpy as jnp
from jax import lax
from jax.experimental import pallas as pl
from jax.experimental.pallas import tpu as pltpu


# ----------------------------------------------------------------------------
# Fused Pallas kernel: the entire encoder/decoder forward pass.
# ----------------------------------------------------------------------------
def _fused_kernel(a0_ref,
                  s0_ref, b0_ref, c0_ref,
                  s1_ref, b1_ref, c1_ref,
                  s2_ref, b2_ref, c2_ref,
                  s3_ref, b3a_ref, b3b_ref, c3_ref,
                  lf_ref,
                  out_ref, *, slope):
    def dotf(a, b):
        return jnp.dot(a, b, preferred_element_type=jnp.float32)

    def lrelu(v):
        return jnp.where(v >= 0, v, v * slope)

    def conv_layer(x, s_ref, b_ref, c_ref):
        # out = sum_kh (S_kh @ x) @ B_kh + bias_row
        acc = dotf(dotf(s_ref[0], x), b_ref[0])
        for kh in range(1, s_ref.shape[0]):
            acc = acc + dotf(dotf(s_ref[kh], x), b_ref[kh])
        return acc + c_ref[...]

    a0 = a0_ref[...]                                            # (F , N*T*6)
    e0 = conv_layer(a0, s0_ref, b0_ref, c0_ref)                 # (8 , N*T*4)
    e0a = lrelu(e0)
    e1a = lrelu(conv_layer(e0a, s1_ref, b1_ref, c1_ref))        # (4 , N*T*8)
    d0a = lrelu(conv_layer(e1a, s2_ref, b2_ref, c2_ref))        # (8 , N*T*4)

    # decoder 1 over concat([d0, e0]); the concat is folded into split weights.
    acc = dotf(dotf(s3_ref[0], d0a), b3a_ref[0]) + dotf(dotf(s3_ref[0], e0a), b3b_ref[0])
    for kh in range(1, s3_ref.shape[0]):
        acc = acc + dotf(dotf(s3_ref[kh], d0a), b3a_ref[kh])
        acc = acc + dotf(dotf(s3_ref[kh], e0a), b3b_ref[kh])

    out_ref[...] = (acc + c3_ref[...]) * lf_ref[...]            # (F , N*T*2)


def _full_spec(arr):
    nd = arr.ndim
    return pl.BlockSpec(arr.shape, lambda i, _nd=nd: (0,) * _nd)


def _fused_forward_call(prep, a0, *, slope):
    F = a0.shape[0]
    n_out = prep['c3'].shape[1]
    args = (a0,
            prep['S0'], prep['B0'], prep['c0'],
            prep['S1'], prep['B1'], prep['c1'],
            prep['S2'], prep['B2'], prep['c2'],
            prep['S3'], prep['B3a'], prep['B3b'], prep['c3'],
            prep['lf'])
    return pl.pallas_call(
        functools.partial(_fused_kernel, slope=slope),
        out_shape=jax.ShapeDtypeStruct((F, n_out), jnp.float32),
        grid=(1,),
        in_specs=[_full_spec(a) for a in args],
        out_specs=pl.BlockSpec((F, n_out), lambda i: (0, 0)),
        compiler_params=pltpu.CompilerParams(
            dimension_semantics=("arbitrary",)),
    )(*args)


# ----------------------------------------------------------------------------
# Parameter preprocessing: build the S (freq-tap selection) and B
# (time-Toeplitz x channel) matrices, bias rows and the finalizer scale.
# Pure parameter-only work, done once outside the kernel.
# ----------------------------------------------------------------------------
def _sel_conv(Ho, Hi, KH, stride, pad_top, replicate):
    S = np.zeros((KH, Ho, Hi), np.float32)
    for kh in range(KH):
        for ho in range(Ho):
            hi = stride * ho + kh - pad_top
            if replicate:
                S[kh, ho, min(max(hi, 0), Hi - 1)] = 1.0
            elif 0 <= hi < Hi:
                S[kh, ho, hi] = 1.0
    return jnp.asarray(S)


def _sel_deconv(Ho, Hi, KH, stride, pad):
    S = np.zeros((KH, Ho, Hi), np.float32)
    for kh in range(KH):
        for hi in range(Hi):
            ho = stride * hi + kh - pad
            if 0 <= ho < Ho:
                S[kh, ho, hi] = 1.0
    return jnp.asarray(S)


def _wmap_conv(Wo, Wi, KW, pad_left, replicate):
    M = np.zeros((KW, Wi, Wo), np.float32)
    for kw in range(KW):
        for wo in range(Wo):
            wi = wo + kw - pad_left
            if replicate:
                M[kw, min(max(wi, 0), Wi - 1), wo] += 1.0
            elif 0 <= wi < Wi:
                M[kw, wi, wo] = 1.0
    return M


def _wmap_deconv(Wo, Wi, KW, pad):
    M = np.zeros((KW, Wi, Wo), np.float32)
    for kw in range(KW):
        for wi in range(Wi):
            wo = wi + kw - pad
            if 0 <= wo < Wo:
                M[kw, wi, wo] = 1.0
    return M


def _build_B(w_iohw, M, N):
    """w_iohw: (Cin, Cout, KH, KW).  M: (KW, Wi, Wo) 0/1 time map.
    Returns (KH, N*Wi*Cin, N*Wo*Cout) with lane packing (n, w, c)."""
    Cin, Cout, KH, KW = w_iohw.shape
    _, Wi, Wo = M.shape
    Mb = jnp.asarray(M)[None, :, :, None, :, None]            # (1,KW,Wi,1,Wo,1)
    wb = jnp.transpose(w_iohw, (2, 3, 0, 1))                   # (KH,KW,Cin,Cout)
    wb = wb[:, :, None, :, None, :]                            # (KH,KW,1,Cin,1,Cout)
    T = jnp.sum(Mb * wb, axis=1)                               # (KH,Wi,Cin,Wo,Cout)
    T2 = T.reshape(KH, Wi * Cin, Wo * Cout)
    eye = jnp.eye(N, dtype=jnp.float32)
    B = eye[None, :, None, :, None] * T2[:, None, :, None, :]  # (KH,N,R,N,S)
    return B.reshape(KH, N * Wi * Cin, N * Wo * Cout)


def _bias_row(b, N, Wo):
    return jnp.tile(b, N * Wo)[None, :]


def preprocess_params(params, n_freq, n_time, batch):
    F, W, N = n_freq, n_time, batch
    wden = params['enc0_w'].shape[0]                    # widening (= 4)
    prep = {}

    # encoder 0: ReplicationPad2d((1,1,1,2)) + Conv2d(6 -> w, (5,3), stride (2,1))
    KH, KW = 5, 3
    Ho0 = (F + 3 - KH) // 2 + 1                         # 8
    prep['S0'] = _sel_conv(Ho0, F, KH, stride=2, pad_top=1, replicate=True)
    M = _wmap_conv(W, W, KW, pad_left=1, replicate=True)
    prep['B0'] = _build_B(jnp.transpose(params['enc0_w'], (1, 0, 2, 3)), M, N)
    prep['c0'] = _bias_row(params['enc0_b'], N, W)

    # encoder 1: LeakyReLU -> Conv2d(w -> 2w, (5,3), stride (2,1), pad (2,1))
    KH, KW = 5, 3
    Ho1 = (Ho0 + 4 - KH) // 2 + 1                       # 4
    prep['S1'] = _sel_conv(Ho1, Ho0, KH, stride=2, pad_top=2, replicate=False)
    M = _wmap_conv(W, W, KW, pad_left=1, replicate=False)
    prep['B1'] = _build_B(jnp.transpose(params['enc1_w'], (1, 0, 2, 3)), M, N)
    prep['c1'] = _bias_row(params['enc1_b'], N, W)

    # decoder 0: LeakyReLU -> ConvTranspose2d(2w -> w, (4,3), stride (2,1), pad (1,1))
    KH, KW = 4, 3
    Ho2 = (Ho1 - 1) * 2 - 2 + KH                        # 8
    prep['S2'] = _sel_deconv(Ho2, Ho1, KH, stride=2, pad=1)
    M = _wmap_deconv(W, W, KW, pad=1)
    prep['B2'] = _build_B(params['dec0_w'], M, N)
    prep['c2'] = _bias_row(params['dec0_b'], N, W)

    # decoder 1: LeakyReLU -> ConvTranspose2d(2w -> 2, (5,3), stride (2,1), pad (1,1))
    KH, KW = 5, 3
    Ho3 = (Ho2 - 1) * 2 - 2 + KH                        # 17
    assert Ho3 == F, (Ho3, F)   # linear_finalizer scale is per output frequency
    prep['S3'] = _sel_deconv(Ho3, Ho2, KH, stride=2, pad=1)
    M = _wmap_deconv(W, W, KW, pad=1)
    w3 = params['dec1_w']                               # (2w, 2, 5, 3)
    prep['B3a'] = _build_B(w3[:wden], M, N)             # multiplies decoder-0 output
    prep['B3b'] = _build_B(w3[wden:], M, N)             # multiplies encoder-0 output (skip)
    prep['c3'] = _bias_row(params['dec1_b'], N, W)
    prep['lf'] = params['linear_finalizer'][:, None].astype(jnp.float32)
    return prep


# ----------------------------------------------------------------------------
# Parameter init (deterministic; mirrors _gen_conv / _gen_deconv init)
# ----------------------------------------------------------------------------
def init_params(key, n_freq, widening=4, lamb=0.2):
    ks = jax.random.split(key, 4)
    w_ch = widening
    gain0 = math.sqrt(2.0)                                           # first conv
    gain = math.sqrt(2.0 / (1.0 + lamb ** 2)) / math.sqrt(2.0)       # others
    p = {}
    # encoder 0: Conv2d(6, w, (5,3), stride (2,1), pad 0) after ReplicationPad2d
    k = 6 * 5 * 3
    p['enc0_w'] = (gain0 / math.sqrt(k)) * jax.random.normal(ks[0], (w_ch, 6, 5, 3), jnp.float32)
    p['enc0_b'] = jnp.full((w_ch,), 0.01, jnp.float32)
    # encoder 1: Conv2d(w, 2w, (5,3), stride (2,1), pad (2,1))
    k = w_ch * 5 * 3
    p['enc1_w'] = (gain / math.sqrt(k)) * jax.random.normal(ks[1], (2 * w_ch, w_ch, 5, 3), jnp.float32)
    p['enc1_b'] = jnp.full((2 * w_ch,), 0.01, jnp.float32)
    # decoder 0: ConvTranspose2d(2w, w, (4,3), stride (2,1), pad (1,1))
    k = w_ch * 4 * 3
    p['dec0_w'] = (gain / math.sqrt(k)) * jax.random.normal(ks[2], (2 * w_ch, w_ch, 4, 3), jnp.float32)
    p['dec0_b'] = jnp.full((w_ch,), 0.01, jnp.float32)
    # decoder 1: ConvTranspose2d(2w, 2, (5,3), stride (2,1), pad (1,1))
    k = 2 * 5 * 3
    p['dec1_w'] = (gain / math.sqrt(k)) * jax.random.normal(ks[3], (2 * w_ch, 2, 5, 3), jnp.float32)
    p['dec1_b'] = jnp.full((2,), 0.01, jnp.float32)
    p['linear_finalizer'] = jnp.full((n_freq,), 0.001, jnp.float32)
    return p


# ----------------------------------------------------------------------------
# DeGLI_ED forward: pack inputs -> one fused pallas_call -> unpack output.
# ----------------------------------------------------------------------------
@functools.partial(jax.jit, static_argnames=("lamb",))
def degli_ed_forward(prep, x, mag_replaced, consistent, *, lamb=0.2):
    N, _, F, W = x.shape
    h = jnp.concatenate([x, mag_replaced, consistent], axis=1)    # (N, 6, F, W)
    a0 = jnp.transpose(h, (2, 0, 3, 1)).reshape(F, N * W * 6)     # (F, N*W*6)
    out2 = _fused_forward_call(prep, a0, slope=lamb)              # (F, N*W*2)
    out = out2.reshape(F, N, W, 2)
    return jnp.transpose(out, (1, 3, 0, 2))                       # (N, 2, F, W)


# ----------------------------------------------------------------------------
# Pure-JAX reference (independent check against XLA convolutions)
# ----------------------------------------------------------------------------
def _lrelu(v, slope):
    return jnp.where(v >= 0, v, v * slope)


def reference_forward(params, x, mag_replaced, consistent, lamb=0.2):
    dn = ('NCHW', 'OIHW', 'NCHW')
    prec = lax.Precision.HIGHEST
    h = jnp.concatenate([x, mag_replaced, consistent], axis=1)

    hp = jnp.pad(h, ((0, 0), (0, 0), (1, 2), (1, 1)), mode='edge')
    e0 = lax.conv_general_dilated(hp, params['enc0_w'], (2, 1), 'VALID',
                                  dimension_numbers=dn, precision=prec)
    e0 = e0 + params['enc0_b'][None, :, None, None]

    e1 = lax.conv_general_dilated(_lrelu(e0, lamb), params['enc1_w'], (2, 1),
                                  ((2, 2), (1, 1)), dimension_numbers=dn,
                                  precision=prec)
    e1 = e1 + params['enc1_b'][None, :, None, None]

    w = jnp.transpose(jnp.flip(params['dec0_w'], (2, 3)), (1, 0, 2, 3))
    d0 = lax.conv_general_dilated(_lrelu(e1, lamb), w, (1, 1),
                                  ((2, 2), (1, 1)), lhs_dilation=(2, 1),
                                  dimension_numbers=dn, precision=prec)
    d0 = d0 + params['dec0_b'][None, :, None, None]
    d0 = jnp.concatenate([d0, e0], axis=1)

    w = jnp.transpose(jnp.flip(params['dec1_w'], (2, 3)), (1, 0, 2, 3))
    d1 = lax.conv_general_dilated(_lrelu(d0, lamb), w, (1, 1),
                                  ((3, 3), (1, 1)), lhs_dilation=(2, 1),
                                  dimension_numbers=dn, precision=prec)
    d1 = d1 + params['dec1_b'][None, :, None, None]
    return d1 * params['linear_finalizer'][None, None, :, None]


if __name__ == "__main__":
    key = jax.random.PRNGKey(0)
    n_freq, T, N = 17, 8, 2          # n_freq odd, as in STFT (n_fft/2 + 1)
    kp, k1, k2, k3 = jax.random.split(key, 4)
    params = init_params(kp, n_freq, widening=4, lamb=0.2)
    prep = preprocess_params(params, n_freq, T, N)

    x = jax.random.normal(k1, (N, 2, n_freq, T), jnp.float32)
    mag_replaced = jax.random.normal(k2, (N, 2, n_freq, T), jnp.float32)
    consistent = jax.random.normal(k3, (N, 2, n_freq, T), jnp.float32)

    out = degli_ed_forward(prep, x, mag_replaced, consistent, lamb=0.2)
    out = jax.block_until_ready(out)

    assert out.shape == (N, 2, n_freq, T), out.shape
    assert bool(jnp.all(jnp.isfinite(out)))

    ref = jax.block_until_ready(
        reference_forward(params, x, mag_replaced, consistent, lamb=0.2))
    err = float(jnp.max(jnp.abs(out - ref)))
    scale = float(jnp.max(jnp.abs(ref)))
    assert err <= 2e-2 * scale + 2e-3, ("mismatch vs reference", err, scale)

    print("KERNEL_OK")
</pallas_src>

<mosaic_0001>
module attributes {stable_mosaic.version = 11 : i64} {
  func.func @_fused_kernel(%arg0: i32, %arg1: memref<17x96xf32, #tpu.memory_space<vmem>>, %arg2: memref<5x8x17xf32, #tpu.memory_space<vmem>>, %arg3: memref<5x96x64xf32, #tpu.memory_space<vmem>>, %arg4: memref<1x64xf32, #tpu.memory_space<vmem>>, %arg5: memref<5x4x8xf32, #tpu.memory_space<vmem>>, %arg6: memref<5x64x128xf32, #tpu.memory_space<vmem>>, %arg7: memref<1x128xf32, #tpu.memory_space<vmem>>, %arg8: memref<4x8x4xf32, #tpu.memory_space<vmem>>, %arg9: memref<4x128x64xf32, #tpu.memory_space<vmem>>, %arg10: memref<1x64xf32, #tpu.memory_space<vmem>>, %arg11: memref<5x17x8xf32, #tpu.memory_space<vmem>>, %arg12: memref<5x64x32xf32, #tpu.memory_space<vmem>>, %arg13: memref<5x64x32xf32, #tpu.memory_space<vmem>>, %arg14: memref<1x32xf32, #tpu.memory_space<vmem>>, %arg15: memref<17x1xf32, #tpu.memory_space<vmem>>, %arg16: memref<17x32xf32, #tpu.memory_space<vmem>>) attributes {dimension_semantics = [#tpu.dimension_semantics<arbitrary>], iteration_bounds = array<i64: 1>, scalar_prefetch = 0 : i64, scratch_operands = 0 : i64, tpu.core_type = #tpu.core_type<tc>, window_params = [{pipeline_mode = #tpu.pipeline_mode<synchronous>, transform_indices = @transform_0, window_bounds = array<i64: 17, 96>}, {pipeline_mode = #tpu.pipeline_mode<synchronous>, transform_indices = @transform_1, window_bounds = array<i64: 5, 8, 17>}, {pipeline_mode = #tpu.pipeline_mode<synchronous>, transform_indices = @transform_2, window_bounds = array<i64: 5, 96, 64>}, {pipeline_mode = #tpu.pipeline_mode<synchronous>, transform_indices = @transform_3, window_bounds = array<i64: 1, 64>}, {pipeline_mode = #tpu.pipeline_mode<synchronous>, transform_indices = @transform_4, window_bounds = array<i64: 5, 4, 8>}, {pipeline_mode = #tpu.pipeline_mode<synchronous>, transform_indices = @transform_5, window_bounds = array<i64: 5, 64, 128>}, {pipeline_mode = #tpu.pipeline_mode<synchronous>, transform_indices = @transform_6, window_bounds = array<i64: 1, 128>}, {pipeline_mode = #tpu.pipeline_mode<synchronous>, transform_indices = @transform_7, window_bounds = array<i64: 4, 8, 4>}, {pipeline_mode = #tpu.pipeline_mode<synchronous>, transform_indices = @transform_8, window_bounds = array<i64: 4, 128, 64>}, {pipeline_mode = #tpu.pipeline_mode<synchronous>, transform_indices = @transform_9, window_bounds = array<i64: 1, 64>}, {pipeline_mode = #tpu.pipeline_mode<synchronous>, transform_indices = @transform_10, window_bounds = array<i64: 5, 17, 8>}, {pipeline_mode = #tpu.pipeline_mode<synchronous>, transform_indices = @transform_11, window_bounds = array<i64: 5, 64, 32>}, {pipeline_mode = #tpu.pipeline_mode<synchronous>, transform_indices = @transform_12, window_bounds = array<i64: 5, 64, 32>}, {pipeline_mode = #tpu.pipeline_mode<synchronous>, transform_indices = @transform_13, window_bounds = array<i64: 1, 32>}, {pipeline_mode = #tpu.pipeline_mode<synchronous>, transform_indices = @transform_14, window_bounds = array<i64: 17, 1>}, {pipeline_mode = #tpu.pipeline_mode<synchronous>, transform_indices = @transform_15, window_bounds = array<i64: 17, 32>}]} {
    %c0 = arith.constant 0 : index
    %c0_0 = arith.constant 0 : index
    %0 = vector.load %arg1[%c0, %c0_0] : memref<17x96xf32, #tpu.memory_space<vmem>>, vector<17x96xf32>
    %c0_1 = arith.constant 0 : index
    %c0_2 = arith.constant 0 : index
    %c0_3 = arith.constant 0 : index
    %1 = vector.load %arg2[%c0_1, %c0_2, %c0_3] : memref<5x8x17xf32, #tpu.memory_space<vmem>>, vector<1x8x17xf32>
    %2 = vector.shape_cast %1 : vector<1x8x17xf32> to vector<8x17xf32>
    %cst = arith.constant dense<0.000000e+00> : vector<8x96xf32>
    %3 = tpu.matmul %2, %0, %cst {dimension_numbers = #tpu.dot_dimension_numbers<[1], [0], [0], [1], [0, 0, 1, 1], [], []>} : vector<8x17xf32>, vector<17x96xf32>, vector<8x96xf32> -> vector<8x96xf32>
    %c0_4 = arith.constant 0 : index
    %c0_5 = arith.constant 0 : index
    %c0_6 = arith.constant 0 : index
    %4 = vector.load %arg3[%c0_4, %c0_5, %c0_6] : memref<5x96x64xf32, #tpu.memory_space<vmem>>, vector<1x96x64xf32>
    %5 = vector.shape_cast %4 : vector<1x96x64xf32> to vector<96x64xf32>
    %cst_7 = arith.constant dense<0.000000e+00> : vector<8x64xf32>
    %6 = tpu.matmul %3, %5, %cst_7 {dimension_numbers = #tpu.dot_dimension_numbers<[1], [0], [0], [1], [0, 0, 1, 1], [], []>} : vector<8x96xf32>, vector<96x64xf32>, vector<8x64xf32> -> vector<8x64xf32>
    %c1 = arith.constant 1 : index
    %c0_8 = arith.constant 0 : index
    %c0_9 = arith.constant 0 : index
    %7 = vector.load %arg2[%c1, %c0_8, %c0_9] : memref<5x8x17xf32, #tpu.memory_space<vmem>>, vector<1x8x17xf32>
    %8 = vector.shape_cast %7 : vector<1x8x17xf32> to vector<8x17xf32>
    %cst_10 = arith.constant dense<0.000000e+00> : vector<8x96xf32>
    %9 = tpu.matmul %8, %0, %cst_10 {dimension_numbers = #tpu.dot_dimension_numbers<[1], [0], [0], [1], [0, 0, 1, 1], [], []>} : vector<8x17xf32>, vector<17x96xf32>, vector<8x96xf32> -> vector<8x96xf32>
    %c1_11 = arith.constant 1 : index
    %c0_12 = arith.constant 0 : index
    %c0_13 = arith.constant 0 : index
    %10 = vector.load %arg3[%c1_11, %c0_12, %c0_13] : memref<5x96x64xf32, #tpu.memory_space<vmem>>, vector<1x96x64xf32>
    %11 = vector.shape_cast %10 : vector<1x96x64xf32> to vector<96x64xf32>
    %cst_14 = arith.constant dense<0.000000e+00> : vector<8x64xf32>
    %12 = tpu.matmul %9, %11, %cst_14 {dimension_numbers = #tpu.dot_dimension_numbers<[1], [0], [0], [1], [0, 0, 1, 1], [], []>} : vector<8x96xf32>, vector<96x64xf32>, vector<8x64xf32> -> vector<8x64xf32>
    %13 = arith.addf %6, %12 : vector<8x64xf32>
    %c2 = arith.constant 2 : index
    %c0_15 = arith.constant 0 : index
    %c0_16 = arith.constant 0 : index
    %14 = vector.load %arg2[%c2, %c0_15, %c0_16] : memref<5x8x17xf32, #tpu.memory_space<vmem>>, vector<1x8x17xf32>
    %15 = vector.shape_cast %14 : vector<1x8x17xf32> to vector<8x17xf32>
    %cst_17 = arith.constant dense<0.000000e+00> : vector<8x96xf32>
    %16 = tpu.matmul %15, %0, %cst_17 {dimension_numbers = #tpu.dot_dimension_numbers<[1], [0], [0], [1], [0, 0, 1, 1], [], []>} : vector<8x17xf32>, vector<17x96xf32>, vector<8x96xf32> -> vector<8x96xf32>
    %c2_18 = arith.constant 2 : index
    %c0_19 = arith.constant 0 : index
    %c0_20 = arith.constant 0 : index
    %17 = vector.load %arg3[%c2_18, %c0_19, %c0_20] : memref<5x96x64xf32, #tpu.memory_space<vmem>>, vector<1x96x64xf32>
    %18 = vector.shape_cast %17 : vector<1x96x64xf32> to vector<96x64xf32>
    %cst_21 = arith.constant dense<0.000000e+00> : vector<8x64xf32>
    %19 = tpu.matmul %16, %18, %cst_21 {dimension_numbers = #tpu.dot_dimension_numbers<[1], [0], [0], [1], [0, 0, 1, 1], [], []>} : vector<8x96xf32>, vector<96x64xf32>, vector<8x64xf32> -> vector<8x64xf32>
    %20 = arith.addf %13, %19 : vector<8x64xf32>
    %c3 = arith.constant 3 : index
    %c0_22 = arith.constant 0 : index
    %c0_23 = arith.constant 0 : index
    %21 = vector.load %arg2[%c3, %c0_22, %c0_23] : memref<5x8x17xf32, #tpu.memory_space<vmem>>, vector<1x8x17xf32>
    %22 = vector.shape_cast %21 : vector<1x8x17xf32> to vector<8x17xf32>
    %cst_24 = arith.constant dense<0.000000e+00> : vector<8x96xf32>
    %23 = tpu.matmul %22, %0, %cst_24 {dimension_numbers = #tpu.dot_dimension_numbers<[1], [0], [0], [1], [0, 0, 1, 1], [], []>} : vector<8x17xf32>, vector<17x96xf32>, vector<8x96xf32> -> vector<8x96xf32>
    %c3_25 = arith.constant 3 : index
    %c0_26 = arith.constant 0 : index
    %c0_27 = arith.constant 0 : index
    %24 = vector.load %arg3[%c3_25, %c0_26, %c0_27] : memref<5x96x64xf32, #tpu.memory_space<vmem>>, vector<1x96x64xf32>
    %25 = vector.shape_cast %24 : vector<1x96x64xf32> to vector<96x64xf32>
    %cst_28 = arith.constant dense<0.000000e+00> : vector<8x64xf32>
    %26 = tpu.matmul %23, %25, %cst_28 {dimension_numbers = #tpu.dot_dimension_numbers<[1], [0], [0], [1], [0, 0, 1, 1], [], []>} : vector<8x96xf32>, vector<96x64xf32>, vector<8x64xf32> -> vector<8x64xf32>
    %27 = arith.addf %20, %26 : vector<8x64xf32>
    %c4 = arith.constant 4 : index
    %c0_29 = arith.constant 0 : index
    %c0_30 = arith.constant 0 : index
    %28 = vector.load %arg2[%c4, %c0_29, %c0_30] : memref<5x8x17xf32, #tpu.memory_space<vmem>>, vector<1x8x17xf32>
    %29 = vector.shape_cast %28 : vector<1x8x17xf32> to vector<8x17xf32>
    %cst_31 = arith.constant dense<0.000000e+00> : vector<8x96xf32>
    %30 = tpu.matmul %29, %0, %cst_31 {dimension_numbers = #tpu.dot_dimension_numbers<[1], [0], [0], [1], [0, 0, 1, 1], [], []>} : vector<8x17xf32>, vector<17x96xf32>, vector<8x96xf32> -> vector<8x96xf32>
    %c4_32 = arith.constant 4 : index
    %c0_33 = arith.constant 0 : index
    %c0_34 = arith.constant 0 : index
    %31 = vector.load %arg3[%c4_32, %c0_33, %c0_34] : memref<5x96x64xf32, #tpu.memory_space<vmem>>, vector<1x96x64xf32>
    %32 = vector.shape_cast %31 : vector<1x96x64xf32> to vector<96x64xf32>
    %cst_35 = arith.constant dense<0.000000e+00> : vector<8x64xf32>
    %33 = tpu.matmul %30, %32, %cst_35 {dimension_numbers = #tpu.dot_dimension_numbers<[1], [0], [0], [1], [0, 0, 1, 1], [], []>} : vector<8x96xf32>, vector<96x64xf32>, vector<8x64xf32> -> vector<8x64xf32>
    %34 = arith.addf %27, %33 : vector<8x64xf32>
    %c0_36 = arith.constant 0 : index
    %c0_37 = arith.constant 0 : index
    %35 = vector.load %arg4[%c0_36, %c0_37] : memref<1x64xf32, #tpu.memory_space<vmem>>, vector<1x64xf32>
    %36 = vector.broadcast %35 : vector<1x64xf32> to vector<8x64xf32>
    %37 = arith.addf %34, %36 : vector<8x64xf32>
    %cst_38 = arith.constant 0.000000e+00 : f32
    %38 = vector.broadcast %cst_38 : f32 to vector<8x64xf32>
    %39 = arith.cmpf oge, %37, %38 : vector<8x64xf32>
    %cst_39 = arith.constant 2.000000e-01 : f32
    %40 = vector.broadcast %cst_39 : f32 to vector<8x64xf32>
    %41 = arith.mulf %37, %40 : vector<8x64xf32>
    %42 = arith.select %39, %37, %41 : vector<8x64xi1>, vector<8x64xf32>
    %c0_40 = arith.constant 0 : index
    %c0_41 = arith.constant 0 : index
    %c0_42 = arith.constant 0 : index
    %43 = vector.load %arg5[%c0_40, %c0_41, %c0_42] : memref<5x4x8xf32, #tpu.memory_space<vmem>>, vector<1x4x8xf32>
    %44 = vector.shape_cast %43 : vector<1x4x8xf32> to vector<4x8xf32>
    %cst_43 = arith.constant dense<0.000000e+00> : vector<4x64xf32>
    %45 = tpu.matmul %44, %42, %cst_43 {dimension_numbers = #tpu.dot_dimension_numbers<[1], [0], [0], [1], [0, 0, 1, 1], [], []>} : vector<4x8xf32>, vector<8x64xf32>, vector<4x64xf32> -> vector<4x64xf32>
    %c0_44 = arith.constant 0 : index
    %c0_45 = arith.constant 0 : index
    %c0_46 = arith.constant 0 : index
    %46 = vector.load %arg6[%c0_44, %c0_45, %c0_46] : memref<5x64x128xf32, #tpu.memory_space<vmem>>, vector<1x64x128xf32>
    %47 = vector.shape_cast %46 : vector<1x64x128xf32> to vector<64x128xf32>
    %cst_47 = arith.constant dense<0.000000e+00> : vector<4x128xf32>
    %48 = tpu.matmul %45, %47, %cst_47 {dimension_numbers = #tpu.dot_dimension_numbers<[1], [0], [0], [1], [0, 0, 1, 1], [], []>} : vector<4x64xf32>, vector<64x128xf32>, vector<4x128xf32> -> vector<4x128xf32>
    %c1_48 = arith.constant 1 : index
    %c0_49 = arith.constant 0 : index
    %c0_50 = arith.constant 0 : index
    %49 = vector.load %arg5[%c1_48, %c0_49, %c0_50] : memref<5x4x8xf32, #tpu.memory_space<vmem>>, vector<1x4x8xf32>
    %50 = vector.shape_cast %49 : vector<1x4x8xf32> to vector<4x8xf32>
    %cst_51 = arith.constant dense<0.000000e+00> : vector<4x64xf32>
    %51 = tpu.matmul %50, %42, %cst_51 {dimension_numbers = #tpu.dot_dimension_numbers<[1], [0], [0], [1], [0, 0, 1, 1], [], []>} : vector<4x8xf32>, vector<8x64xf32>, vector<4x64xf32> -> vector<4x64xf32>
    %c1_52 = arith.constant 1 : index
    %c0_53 = arith.constant 0 : index
    %c0_54 = arith.constant 0 : index
    %52 = vector.load %arg6[%c1_52, %c0_53, %c0_54] : memref<5x64x128xf32, #tpu.memory_space<vmem>>, vector<1x64x128xf32>
    %53 = vector.shape_cast %52 : vector<1x64x128xf32> to vector<64x128xf32>
    %cst_55 = arith.constant dense<0.000000e+00> : vector<4x128xf32>
    %54 = tpu.matmul %51, %53, %cst_55 {dimension_numbers = #tpu.dot_dimension_numbers<[1], [0], [0], [1], [0, 0, 1, 1], [], []>} : vector<4x64xf32>, vector<64x128xf32>, vector<4x128xf32> -> vector<4x128xf32>
    %55 = arith.addf %48, %54 : vector<4x128xf32>
    %c2_56 = arith.constant 2 : index
    %c0_57 = arith.constant 0 : index
    %c0_58 = arith.constant 0 : index
    %56 = vector.load %arg5[%c2_56, %c0_57, %c0_58] : memref<5x4x8xf32, #tpu.memory_space<vmem>>, vector<1x4x8xf32>
    %57 = vector.shape_cast %56 : vector<1x4x8xf32> to vector<4x8xf32>
    %cst_59 = arith.constant dense<0.000000e+00> : vector<4x64xf32>
    %58 = tpu.matmul %57, %42, %cst_59 {dimension_numbers = #tpu.dot_dimension_numbers<[1], [0], [0], [1], [0, 0, 1, 1], [], []>} : vector<4x8xf32>, vector<8x64xf32>, vector<4x64xf32> -> vector<4x64xf32>
    %c2_60 = arith.constant 2 : index
    %c0_61 = arith.constant 0 : index
    %c0_62 = arith.constant 0 : index
    %59 = vector.load %arg6[%c2_60, %c0_61, %c0_62] : memref<5x64x128xf32, #tpu.memory_space<vmem>>, vector<1x64x128xf32>
    %60 = vector.shape_cast %59 : vector<1x64x128xf32> to vector<64x128xf32>
    %cst_63 = arith.constant dense<0.000000e+00> : vector<4x128xf32>
    %61 = tpu.matmul %58, %60, %cst_63 {dimension_numbers = #tpu.dot_dimension_numbers<[1], [0], [0], [1], [0, 0, 1, 1], [], []>} : vector<4x64xf32>, vector<64x128xf32>, vector<4x128xf32> -> vector<4x128xf32>
    %62 = arith.addf %55, %61 : vector<4x128xf32>
    %c3_64 = arith.constant 3 : index
    %c0_65 = arith.constant 0 : index
    %c0_66 = arith.constant 0 : index
    %63 = vector.load %arg5[%c3_64, %c0_65, %c0_66] : memref<5x4x8xf32, #tpu.memory_space<vmem>>, vector<1x4x8xf32>
    %64 = vector.shape_cast %63 : vector<1x4x8xf32> to vector<4x8xf32>
    %cst_67 = arith.constant dense<0.000000e+00> : vector<4x64xf32>
    %65 = tpu.matmul %64, %42, %cst_67 {dimension_numbers = #tpu.dot_dimension_numbers<[1], [0], [0], [1], [0, 0, 1, 1], [], []>} : vector<4x8xf32>, vector<8x64xf32>, vector<4x64xf32> -> vector<4x64xf32>
    %c3_68 = arith.constant 3 : index
    %c0_69 = arith.constant 0 : index
    %c0_70 = arith.constant 0 : index
    %66 = vector.load %arg6[%c3_68, %c0_69, %c0_70] : memref<5x64x128xf32, #tpu.memory_space<vmem>>, vector<1x64x128xf32>
    %67 = vector.shape_cast %66 : vector<1x64x128xf32> to vector<64x128xf32>
    %cst_71 = arith.constant dense<0.000000e+00> : vector<4x128xf32>
    %68 = tpu.matmul %65, %67, %cst_71 {dimension_numbers = #tpu.dot_dimension_numbers<[1], [0], [0], [1], [0, 0, 1, 1], [], []>} : vector<4x64xf32>, vector<64x128xf32>, vector<4x128xf32> -> vector<4x128xf32>
    %69 = arith.addf %62, %68 : vector<4x128xf32>
    %c4_72 = arith.constant 4 : index
    %c0_73 = arith.constant 0 : index
    %c0_74 = arith.constant 0 : index
    %70 = vector.load %arg5[%c4_72, %c0_73, %c0_74] : memref<5x4x8xf32, #tpu.memory_space<vmem>>, vector<1x4x8xf32>
    %71 = vector.shape_cast %70 : vector<1x4x8xf32> to vector<4x8xf32>
    %cst_75 = arith.constant dense<0.000000e+00> : vector<4x64xf32>
    %72 = tpu.matmul %71, %42, %cst_75 {dimension_numbers = #tpu.dot_dimension_numbers<[1], [0], [0], [1], [0, 0, 1, 1], [], []>} : vector<4x8xf32>, vector<8x64xf32>, vector<4x64xf32> -> vector<4x64xf32>
    %c4_76 = arith.constant 4 : index
    %c0_77 = arith.constant 0 : index
    %c0_78 = arith.constant 0 : index
    %73 = vector.load %arg6[%c4_76, %c0_77, %c0_78] : memref<5x64x128xf32, #tpu.memory_space<vmem>>, vector<1x64x128xf32>
    %74 = vector.shape_cast %73 : vector<1x64x128xf32> to vector<64x128xf32>
    %cst_79 = arith.constant dense<0.000000e+00> : vector<4x128xf32>
    %75 = tpu.matmul %72, %74, %cst_79 {dimension_numbers = #tpu.dot_dimension_numbers<[1], [0], [0], [1], [0, 0, 1, 1], [], []>} : vector<4x64xf32>, vector<64x128xf32>, vector<4x128xf32> -> vector<4x128xf32>
    %76 = arith.addf %69, %75 : vector<4x128xf32>
    %c0_80 = arith.constant 0 : index
    %c0_81 = arith.constant 0 : index
    %77 = vector.load %arg7[%c0_80, %c0_81] : memref<1x128xf32, #tpu.memory_space<vmem>>, vector<1x128xf32>
    %78 = vector.broadcast %77 : vector<1x128xf32> to vector<4x128xf32>
    %79 = arith.addf %76, %78 : vector<4x128xf32>
    %cst_82 = arith.constant 0.000000e+00 : f32
    %80 = vector.broadcast %cst_82 : f32 to vector<4x128xf32>
    %81 = arith.cmpf oge, %79, %80 : vector<4x128xf32>
    %cst_83 = arith.constant 2.000000e-01 : f32
    %82 = vector.broadcast %cst_83 : f32 to vector<4x128xf32>
    %83 = arith.mulf %79, %82 : vector<4x128xf32>
    %84 = arith.select %81, %79, %83 : vector<4x128xi1>, vector<4x128xf32>
    %c0_84 = arith.constant 0 : index
    %c0_85 = arith.constant 0 : index
    %c0_86 = arith.constant 0 : index
    %85 = vector.load %arg8[%c0_84, %c0_85, %c0_86] : memref<4x8x4xf32, #tpu.memory_space<vmem>>, vector<1x8x4xf32>
    %86 = vector.shape_cast %85 : vector<1x8x4xf32> to vector<8x4xf32>
    %cst_87 = arith.constant dense<0.000000e+00> : vector<8x128xf32>
    %87 = tpu.matmul %86, %84, %cst_87 {dimension_numbers = #tpu.dot_dimension_numbers<[1], [0], [0], [1], [0, 0, 1, 1], [], []>} : vector<8x4xf32>, vector<4x128xf32>, vector<8x128xf32> -> vector<8x128xf32>
    %c0_88 = arith.constant 0 : index
    %c0_89 = arith.constant 0 : index
    %c0_90 = arith.constant 0 : index
    %88 = vector.load %arg9[%c0_88, %c0_89, %c0_90] : memref<4x128x64xf32, #tpu.memory_space<vmem>>, vector<1x128x64xf32>
    %89 = vector.shape_cast %88 : vector<1x128x64xf32> to vector<128x64xf32>
    %cst_91 = arith.constant dense<0.000000e+00> : vector<8x64xf32>
    %90 = tpu.matmul %87, %89, %cst_91 {dimension_numbers = #tpu.dot_dimension_numbers<[1], [0], [0], [1], [0, 0, 1, 1], [], []>} : vector<8x128xf32>, vector<128x64xf32>, vector<8x64xf32> -> vector<8x64xf32>
    %c1_92 = arith.constant 1 : index
    %c0_93 = arith.constant 0 : index
    %c0_94 = arith.constant 0 : index
    %91 = vector.load %arg8[%c1_92, %c0_93, %c0_94] : memref<4x8x4xf32, #tpu.memory_space<vmem>>, vector<1x8x4xf32>
    %92 = vector.shape_cast %91 : vector<1x8x4xf32> to vector<8x4xf32>
    %cst_95 = arith.constant dense<0.000000e+00> : vector<8x128xf32>
    %93 = tpu.matmul %92, %84, %cst_95 {dimension_numbers = #tpu.dot_dimension_numbers<[1], [0], [0], [1], [0, 0, 1, 1], [], []>} : vector<8x4xf32>, vector<4x128xf32>, vector<8x128xf32> -> vector<8x128xf32>
    %c1_96 = arith.constant 1 : index
    %c0_97 = arith.constant 0 : index
    %c0_98 = arith.constant 0 : index
    %94 = vector.load %arg9[%c1_96, %c0_97, %c0_98] : memref<4x128x64xf32, #tpu.memory_space<vmem>>, vector<1x128x64xf32>
    %95 = vector.shape_cast %94 : vector<1x128x64xf32> to vector<128x64xf32>
    %cst_99 = arith.constant dense<0.000000e+00> : vector<8x64xf32>
    %96 = tpu.matmul %93, %95, %cst_99 {dimension_numbers = #tpu.dot_dimension_numbers<[1], [0], [0], [1], [0, 0, 1, 1], [], []>} : vector<8x128xf32>, vector<128x64xf32>, vector<8x64xf32> -> vector<8x64xf32>
    %97 = arith.addf %90, %96 : vector<8x64xf32>
    %c2_100 = arith.constant 2 : index
    %c0_101 = arith.constant 0 : index
    %c0_102 = arith.constant 0 : index
    %98 = vector.load %arg8[%c2_100, %c0_101, %c0_102] : memref<4x8x4xf32, #tpu.memory_space<vmem>>, vector<1x8x4xf32>
    %99 = vector.shape_cast %98 : vector<1x8x4xf32> to vector<8x4xf32>
    %cst_103 = arith.constant dense<0.000000e+00> : vector<8x128xf32>
    %100 = tpu.matmul %99, %84, %cst_103 {dimension_numbers = #tpu.dot_dimension_numbers<[1], [0], [0], [1], [0, 0, 1, 1], [], []>} : vector<8x4xf32>, vector<4x128xf32>, vector<8x128xf32> -> vector<8x128xf32>
    %c2_104 = arith.constant 2 : index
    %c0_105 = arith.constant 0 : index
    %c0_106 = arith.constant 0 : index
    %101 = vector.load %arg9[%c2_104, %c0_105, %c0_106] : memref<4x128x64xf32, #tpu.memory_space<vmem>>, vector<1x128x64xf32>
    %102 = vector.shape_cast %101 : vector<1x128x64xf32> to vector<128x64xf32>
    %cst_107 = arith.constant dense<0.000000e+00> : vector<8x64xf32>
    %103 = tpu.matmul %100, %102, %cst_107 {dimension_numbers = #tpu.dot_dimension_numbers<[1], [0], [0], [1], [0, 0, 1, 1], [], []>} : vector<8x128xf32>, vector<128x64xf32>, vector<8x64xf32> -> vector<8x64xf32>
    %104 = arith.addf %97, %103 : vector<8x64xf32>
    %c3_108 = arith.constant 3 : index
    %c0_109 = arith.constant 0 : index
    %c0_110 = arith.constant 0 : index
    %105 = vector.load %arg8[%c3_108, %c0_109, %c0_110] : memref<4x8x4xf32, #tpu.memory_space<vmem>>, vector<1x8x4xf32>
    %106 = vector.shape_cast %105 : vector<1x8x4xf32> to vector<8x4xf32>
    %cst_111 = arith.constant dense<0.000000e+00> : vector<8x128xf32>
    %107 = tpu.matmul %106, %84, %cst_111 {dimension_numbers = #tpu.dot_dimension_numbers<[1], [0], [0], [1], [0, 0, 1, 1], [], []>} : vector<8x4xf32>, vector<4x128xf32>, vector<8x128xf32> -> vector<8x128xf32>
    %c3_112 = arith.constant 3 : index
    %c0_113 = arith.constant 0 : index
    %c0_114 = arith.constant 0 : index
    %108 = vector.load %arg9[%c3_112, %c0_113, %c0_114] : memref<4x128x64xf32, #tpu.memory_space<vmem>>, vector<1x128x64xf32>
    %109 = vector.shape_cast %108 : vector<1x128x64xf32> to vector<128x64xf32>
    %cst_115 = arith.constant dense<0.000000e+00> : vector<8x64xf32>
    %110 = tpu.matmul %107, %109, %cst_115 {dimension_numbers = #tpu.dot_dimension_numbers<[1], [0], [0], [1], [0, 0, 1, 1], [], []>} : vector<8x128xf32>, vector<128x64xf32>, vector<8x64xf32> -> vector<8x64xf32>
    %111 = arith.addf %104, %110 : vector<8x64xf32>
    %c0_116 = arith.constant 0 : index
    %c0_117 = arith.constant 0 : index
    %112 = vector.load %arg10[%c0_116, %c0_117] : memref<1x64xf32, #tpu.memory_space<vmem>>, vector<1x64xf32>
    %113 = vector.broadcast %112 : vector<1x64xf32> to vector<8x64xf32>
    %114 = arith.addf %111, %113 : vector<8x64xf32>
    %cst_118 = arith.constant 0.000000e+00 : f32
    %115 = vector.broadcast %cst_118 : f32 to vector<8x64xf32>
    %116 = arith.cmpf oge, %114, %115 : vector<8x64xf32>
    %cst_119 = arith.constant 2.000000e-01 : f32
    %117 = vector.broadcast %cst_119 : f32 to vector<8x64xf32>
    %118 = arith.mulf %114, %117 : vector<8x64xf32>
    %119 = arith.select %116, %114, %118 : vector<8x64xi1>, vector<8x64xf32>
    %c0_120 = arith.constant 0 : index
    %c0_121 = arith.constant 0 : index
    %c0_122 = arith.constant 0 : index
    %120 = vector.load %arg11[%c0_120, %c0_121, %c0_122] : memref<5x17x8xf32, #tpu.memory_space<vmem>>, vector<1x17x8xf32>
    %121 = vector.shape_cast %120 : vector<1x17x8xf32> to vector<17x8xf32>
    %cst_123 = arith.constant dense<0.000000e+00> : vector<17x64xf32>
    %122 = tpu.matmul %121, %119, %cst_123 {dimension_numbers = #tpu.dot_dimension_numbers<[1], [0], [0], [1], [0, 0, 1, 1], [], []>} : vector<17x8xf32>, vector<8x64xf32>, vector<17x64xf32> -> vector<17x64xf32>
    %c0_124 = arith.constant 0 : index
    %c0_125 = arith.constant 0 : index
    %c0_126 = arith.constant 0 : index
    %123 = vector.load %arg12[%c0_124, %c0_125, %c0_126] : memref<5x64x32xf32, #tpu.memory_space<vmem>>, vector<1x64x32xf32>
    %124 = vector.shape_cast %123 : vector<1x64x32xf32> to vector<64x32xf32>
    %cst_127 = arith.constant dense<0.000000e+00> : vector<17x32xf32>
    %125 = tpu.matmul %122, %124, %cst_127 {dimension_numbers = #tpu.dot_dimension_numbers<[1], [0], [0], [1], [0, 0, 1, 1], [], []>} : vector<17x64xf32>, vector<64x32xf32>, vector<17x32xf32> -> vector<17x32xf32>
    %c0_128 = arith.constant 0 : index
    %c0_129 = arith.constant 0 : index
    %c0_130 = arith.constant 0 : index
    %126 = vector.load %arg11[%c0_128, %c0_129, %c0_130] : memref<5x17x8xf32, #tpu.memory_space<vmem>>, vector<1x17x8xf32>
    %127 = vector.shape_cast %126 : vector<1x17x8xf32> to vector<17x8xf32>
    %cst_131 = arith.constant dense<0.000000e+00> : vector<17x64xf32>
    %128 = tpu.matmul %127, %42, %cst_131 {dimension_numbers = #tpu.dot_dimension_numbers<[1], [0], [0], [1], [0, 0, 1, 1], [], []>} : vector<17x8xf32>, vector<8x64xf32>, vector<17x64xf32> -> vector<17x64xf32>
    %c0_132 = arith.constant 0 : index
    %c0_133 = arith.constant 0 : index
    %c0_134 = arith.constant 0 : index
    %129 = vector.load %arg13[%c0_132, %c0_133, %c0_134] : memref<5x64x32xf32, #tpu.memory_space<vmem>>, vector<1x64x32xf32>
    %130 = vector.shape_cast %129 : vector<1x64x32xf32> to vector<64x32xf32>
    %cst_135 = arith.constant dense<0.000000e+00> : vector<17x32xf32>
    %131 = tpu.matmul %128, %130, %cst_135 {dimension_numbers = #tpu.dot_dimension_numbers<[1], [0], [0], [1], [0, 0, 1, 1], [], []>} : vector<17x64xf32>, vector<64x32xf32>, vector<17x32xf32> -> vector<17x32xf32>
    %132 = arith.addf %125, %131 : vector<17x32xf32>
    %c1_136 = arith.constant 1 : index
    %c0_137 = arith.constant 0 : index
    %c0_138 = arith.constant 0 : index
    %133 = vector.load %arg11[%c1_136, %c0_137, %c0_138] : memref<5x17x8xf32, #tpu.memory_space<vmem>>, vector<1x17x8xf32>
    %134 = vector.shape_cast %133 : vector<1x17x8xf32> to vector<17x8xf32>
    %cst_139 = arith.constant dense<0.000000e+00> : vector<17x64xf32>
    %135 = tpu.matmul %134, %119, %cst_139 {dimension_numbers = #tpu.dot_dimension_numbers<[1], [0], [0], [1], [0, 0, 1, 1], [], []>} : vector<17x8xf32>, vector<8x64xf32>, vector<17x64xf32> -> vector<17x64xf32>
    %c1_140 = arith.constant 1 : index
    %c0_141 = arith.constant 0 : index
    %c0_142 = arith.constant 0 : index
    %136 = vector.load %arg12[%c1_140, %c0_141, %c0_142] : memref<5x64x32xf32, #tpu.memory_space<vmem>>, vector<1x64x32xf32>
    %137 = vector.shape_cast %136 : vector<1x64x32xf32> to vector<64x32xf32>
    %cst_143 = arith.constant dense<0.000000e+00> : vector<17x32xf32>
    %138 = tpu.matmul %135, %137, %cst_143 {dimension_numbers = #tpu.dot_dimension_numbers<[1], [0], [0], [1], [0, 0, 1, 1], [], []>} : vector<17x64xf32>, vector<64x32xf32>, vector<17x32xf32> -> vector<17x32xf32>
    %139 = arith.addf %132, %138 : vector<17x32xf32>
    %c1_144 = arith.constant 1 : index
    %c0_145 = arith.constant 0 : index
    %c0_146 = arith.constant 0 : index
    %140 = vector.load %arg11[%c1_144, %c0_145, %c0_146] : memref<5x17x8xf32, #tpu.memory_space<vmem>>, vector<1x17x8xf32>
    %141 = vector.shape_cast %140 : vector<1x17x8xf32> to vector<17x8xf32>
    %cst_147 = arith.constant dense<0.000000e+00> : vector<17x64xf32>
    %142 = tpu.matmul %141, %42, %cst_147 {dimension_numbers = #tpu.dot_dimension_numbers<[1], [0], [0], [1], [0, 0, 1, 1], [], []>} : vector<17x8xf32>, vector<8x64xf32>, vector<17x64xf32> -> vector<17x64xf32>
    %c1_148 = arith.constant 1 : index
    %c0_149 = arith.constant 0 : index
    %c0_150 = arith.constant 0 : index
    %143 = vector.load %arg13[%c1_148, %c0_149, %c0_150] : memref<5x64x32xf32, #tpu.memory_space<vmem>>, vector<1x64x32xf32>
    %144 = vector.shape_cast %143 : vector<1x64x32xf32> to vector<64x32xf32>
    %cst_151 = arith.constant dense<0.000000e+00> : vector<17x32xf32>
    %145 = tpu.matmul %142, %144, %cst_151 {dimension_numbers = #tpu.dot_dimension_numbers<[1], [0], [0], [1], [0, 0, 1, 1], [], []>} : vector<17x64xf32>, vector<64x32xf32>, vector<17x32xf32> -> vector<17x32xf32>
    %146 = arith.addf %139, %145 : vector<17x32xf32>
    %c2_152 = arith.constant 2 : index
    %c0_153 = arith.constant 0 : index
    %c0_154 = arith.constant 0 : index
    %147 = vector.load %arg11[%c2_152, %c0_153, %c0_154] : memref<5x17x8xf32, #tpu.memory_space<vmem>>, vector<1x17x8xf32>
    %148 = vector.shape_cast %147 : vector<1x17x8xf32> to vector<17x8xf32>
    %cst_155 = arith.constant dense<0.000000e+00> : vector<17x64xf32>
    %149 = tpu.matmul %148, %119, %cst_155 {dimension_numbers = #tpu.dot_dimension_numbers<[1], [0], [0], [1], [0, 0, 1, 1], [], []>} : vector<17x8xf32>, vector<8x64xf32>, vector<17x64xf32> -> vector<17x64xf32>
    %c2_156 = arith.constant 2 : index
    %c0_157 = arith.constant 0 : index
    %c0_158 = arith.constant 0 : index
    %150 = vector.load %arg12[%c2_156, %c0_157, %c0_158] : memref<5x64x32xf32, #tpu.memory_space<vmem>>, vector<1x64x32xf32>
    %151 = vector.shape_cast %150 : vector<1x64x32xf32> to vector<64x32xf32>
    %cst_159 = arith.constant dense<0.000000e+00> : vector<17x32xf32>
    %152 = tpu.matmul %149, %151, %cst_159 {dimension_numbers = #tpu.dot_dimension_numbers<[1], [0], [0], [1], [0, 0, 1, 1], [], []>} : vector<17x64xf32>, vector<64x32xf32>, vector<17x32xf32> -> vector<17x32xf32>
    %153 = arith.addf %146, %152 : vector<17x32xf32>
    %c2_160 = arith.constant 2 : index
    %c0_161 = arith.constant 0 : index
    %c0_162 = arith.constant 0 : index
    %154 = vector.load %arg11[%c2_160, %c0_161, %c0_162] : memref<5x17x8xf32, #tpu.memory_space<vmem>>, vector<1x17x8xf32>
    %155 = vector.shape_cast %154 : vector<1x17x8xf32> to vector<17x8xf32>
    %cst_163 = arith.constant dense<0.000000e+00> : vector<17x64xf32>
    %156 = tpu.matmul %155, %42, %cst_163 {dimension_numbers = #tpu.dot_dimension_numbers<[1], [0], [0], [1], [0, 0, 1, 1], [], []>} : vector<17x8xf32>, vector<8x64xf32>, vector<17x64xf32> -> vector<17x64xf32>
    %c2_164 = arith.constant 2 : index
    %c0_165 = arith.constant 0 : index
    %c0_166 = arith.constant 0 : index
    %157 = vector.load %arg13[%c2_164, %c0_165, %c0_166] : memref<5x64x32xf32, #tpu.memory_space<vmem>>, vector<1x64x32xf32>
    %158 = vector.shape_cast %157 : vector<1x64x32xf32> to vector<64x32xf32>
    %cst_167 = arith.constant dense<0.000000e+00> : vector<17x32xf32>
    %159 = tpu.matmul %156, %158, %cst_167 {dimension_numbers = #tpu.dot_dimension_numbers<[1], [0], [0], [1], [0, 0, 1, 1], [], []>} : vector<17x64xf32>, vector<64x32xf32>, vector<17x32xf32> -> vector<17x32xf32>
    %160 = arith.addf %153, %159 : vector<17x32xf32>
    %c3_168 = arith.constant 3 : index
    %c0_169 = arith.constant 0 : index
    %c0_170 = arith.constant 0 : index
    %161 = vector.load %arg11[%c3_168, %c0_169, %c0_170] : memref<5x17x8xf32, #tpu.memory_space<vmem>>, vector<1x17x8xf32>
    %162 = vector.shape_cast %161 : vector<1x17x8xf32> to vector<17x8xf32>
    %cst_171 = arith.constant dense<0.000000e+00> : vector<17x64xf32>
    %163 = tpu.matmul %162, %119, %cst_171 {dimension_numbers = #tpu.dot_dimension_numbers<[1], [0], [0], [1], [0, 0, 1, 1], [], []>} : vector<17x8xf32>, vector<8x64xf32>, vector<17x64xf32> -> vector<17x64xf32>
    %c3_172 = arith.constant 3 : index
    %c0_173 = arith.constant 0 : index
    %c0_174 = arith.constant 0 : index
    %164 = vector.load %arg12[%c3_172, %c0_173, %c0_174] : memref<5x64x32xf32, #tpu.memory_space<vmem>>, vector<1x64x32xf32>
    %165 = vector.shape_cast %164 : vector<1x64x32xf32> to vector<64x32xf32>
    %cst_175 = arith.constant dense<0.000000e+00> : vector<17x32xf32>
    %166 = tpu.matmul %163, %165, %cst_175 {dimension_numbers = #tpu.dot_dimension_numbers<[1], [0], [0], [1], [0, 0, 1, 1], [], []>} : vector<17x64xf32>, vector<64x32xf32>, vector<17x32xf32> -> vector<17x32xf32>
    %167 = arith.addf %160, %166 : vector<17x32xf32>
    %c3_176 = arith.constant 3 : index
    %c0_177 = arith.constant 0 : index
    %c0_178 = arith.constant 0 : index
    %168 = vector.load %arg11[%c3_176, %c0_177, %c0_178] : memref<5x17x8xf32, #tpu.memory_space<vmem>>, vector<1x17x8xf32>
    %169 = vector.shape_cast %168 : vector<1x17x8xf32> to vector<17x8xf32>
    %cst_179 = arith.constant dense<0.000000e+00> : vector<17x64xf32>
    %170 = tpu.matmul %169, %42, %cst_179 {dimension_numbers = #tpu.dot_dimension_numbers<[1], [0], [0], [1], [0, 0, 1, 1], [], []>} : vector<17x8xf32>, vector<8x64xf32>, vector<17x64xf32> -> vector<17x64xf32>
    %c3_180 = arith.constant 3 : index
    %c0_181 = arith.constant 0 : index
    %c0_182 = arith.constant 0 : index
    %171 = vector.load %arg13[%c3_180, %c0_181, %c0_182] : memref<5x64x32xf32, #tpu.memory_space<vmem>>, vector<1x64x32xf32>
    %172 = vector.shape_cast %171 : vector<1x64x32xf32> to vector<64x32xf32>
    %cst_183 = arith.constant dense<0.000000e+00> : vector<17x32xf32>
    %173 = tpu.matmul %170, %172, %cst_183 {dimension_numbers = #tpu.dot_dimension_numbers<[1], [0], [0], [1], [0, 0, 1, 1], [], []>} : vector<17x64xf32>, vector<64x32xf32>, vector<17x32xf32> -> vector<17x32xf32>
    %174 = arith.addf %167, %173 : vector<17x32xf32>
    %c4_184 = arith.constant 4 : index
    %c0_185 = arith.constant 0 : index
    %c0_186 = arith.constant 0 : index
    %175 = vector.load %arg11[%c4_184, %c0_185, %c0_186] : memref<5x17x8xf32, #tpu.memory_space<vmem>>, vector<1x17x8xf32>
    %176 = vector.shape_cast %175 : vector<1x17x8xf32> to vector<17x8xf32>
    %cst_187 = arith.constant dense<0.000000e+00> : vector<17x64xf32>
    %177 = tpu.matmul %176, %119, %cst_187 {dimension_numbers = #tpu.dot_dimension_numbers<[1], [0], [0], [1], [0, 0, 1, 1], [], []>} : vector<17x8xf32>, vector<8x64xf32>, vector<17x64xf32> -> vector<17x64xf32>
    %c4_188 = arith.constant 4 : index
    %c0_189 = arith.constant 0 : index
    %c0_190 = arith.constant 0 : index
    %178 = vector.load %arg12[%c4_188, %c0_189, %c0_190] : memref<5x64x32xf32, #tpu.memory_space<vmem>>, vector<1x64x32xf32>
    %179 = vector.shape_cast %178 : vector<1x64x32xf32> to vector<64x32xf32>
    %cst_191 = arith.constant dense<0.000000e+00> : vector<17x32xf32>
    %180 = tpu.matmul %177, %179, %cst_191 {dimension_numbers = #tpu.dot_dimension_numbers<[1], [0], [0], [1], [0, 0, 1, 1], [], []>} : vector<17x64xf32>, vector<64x32xf32>, vector<17x32xf32> -> vector<17x32xf32>
    %181 = arith.addf %174, %180 : vector<17x32xf32>
    %c4_192 = arith.constant 4 : index
    %c0_193 = arith.constant 0 : index
    %c0_194 = arith.constant 0 : index
    %182 = vector.load %arg11[%c4_192, %c0_193, %c0_194] : memref<5x17x8xf32, #tpu.memory_space<vmem>>, vector<1x17x8xf32>
    %183 = vector.shape_cast %182 : vector<1x17x8xf32> to vector<17x8xf32>
    %cst_195 = arith.constant dense<0.000000e+00> : vector<17x64xf32>
    %184 = tpu.matmul %183, %42, %cst_195 {dimension_numbers = #tpu.dot_dimension_numbers<[1], [0], [0], [1], [0, 0, 1, 1], [], []>} : vector<17x8xf32>, vector<8x64xf32>, vector<17x64xf32> -> vector<17x64xf32>
    %c4_196 = arith.constant 4 : index
    %c0_197 = arith.constant 0 : index
    %c0_198 = arith.constant 0 : index
    %185 = vector.load %arg13[%c4_196, %c0_197, %c0_198] : memref<5x64x32xf32, #tpu.memory_space<vmem>>, vector<1x64x32xf32>
    %186 = vector.shape_cast %185 : vector<1x64x32xf32> to vector<64x32xf32>
    %cst_199 = arith.constant dense<0.000000e+00> : vector<17x32xf32>
    %187 = tpu.matmul %184, %186, %cst_199 {dimension_numbers = #tpu.dot_dimension_numbers<[1], [0], [0], [1], [0, 0, 1, 1], [], []>} : vector<17x64xf32>, vector<64x32xf32>, vector<17x32xf32> -> vector<17x32xf32>
    %188 = arith.addf %181, %187 : vector<17x32xf32>
    %c0_200 = arith.constant 0 : index
    %c0_201 = arith.constant 0 : index
    %189 = vector.load %arg14[%c0_200, %c0_201] : memref<1x32xf32, #tpu.memory_space<vmem>>, vector<1x32xf32>
    %190 = vector.broadcast %189 : vector<1x32xf32> to vector<17x32xf32>
    %191 = arith.addf %188, %190 : vector<17x32xf32>
    %c0_202 = arith.constant 0 : index
    %c0_203 = arith.constant 0 : index
    %192 = vector.load %arg15[%c0_202, %c0_203] : memref<17x1xf32, #tpu.memory_space<vmem>>, vector<17x1xf32>
    %193 = vector.broadcast %192 : vector<17x1xf32> to vector<17x32xf32>
    %194 = arith.mulf %191, %193 : vector<17x32xf32>
    %c0_204 = arith.constant 0 : index
    %c0_205 = arith.constant 0 : index
    %195 = vector.load %arg16[%c0_204, %c0_205] : memref<17x32xf32, #tpu.memory_space<vmem>>, vector<17x32xf32>
    tpu.vector_store %arg16[%c0_204, %c0_205], %194 {strides = array<i32>} : memref<17x32xf32, #tpu.memory_space<vmem>>, vector<17x32xf32>,
    return
  }
  func.func @transform_0(%arg0: i32) -> (i32, i32) {
    %c0_i32 = arith.constant 0 : i32
    %c0_i32_0 = arith.constant 0 : i32
    %c0_i32_1 = arith.constant 0 : i32
    return %c0_i32, %c0_i32_0 : i32, i32
  }
  func.func @transform_1(%arg0: i32) -> (i32, i32, i32) {
    %c0_i32 = arith.constant 0 : i32
    %c0_i32_0 = arith.constant 0 : i32
    %c0_i32_1 = arith.constant 0 : i32
    %c0_i32_2 = arith.constant 0 : i32
    return %c0_i32, %c0_i32_0, %c0_i32_1 : i32, i32, i32
  }
  func.func @transform_2(%arg0: i32) -> (i32, i32, i32) {
    %c0_i32 = arith.constant 0 : i32
    %c0_i32_0 = arith.constant 0 : i32
    %c0_i32_1 = arith.constant 0 : i32
    %c0_i32_2 = arith.constant 0 : i32
    return %c0_i32, %c0_i32_0, %c0_i32_1 : i32, i32, i32
  }
  func.func @transform_3(%arg0: i32) -> (i32, i32) {
    %c0_i32 = arith.constant 0 : i32
    %c0_i32_0 = arith.constant 0 : i32
    %c0_i32_1 = arith.constant 0 : i32
    return %c0_i32, %c0_i32_0 : i32, i32
  }
  func.func @transform_4(%arg0: i32) -> (i32, i32, i32) {
    %c0_i32 = arith.constant 0 : i32
    %c0_i32_0 = arith.constant 0 : i32
    %c0_i32_1 = arith.constant 0 : i32
    %c0_i32_2 = arith.constant 0 : i32
    return %c0_i32, %c0_i32_0, %c0_i32_1 : i32, i32, i32
  }
  func.func @transform_5(%arg0: i32) -> (i32, i32, i32) {
    %c0_i32 = arith.constant 0 : i32
    %c0_i32_0 = arith.constant 0 : i32
    %c0_i32_1 = arith.constant 0 : i32
    %c0_i32_2 = arith.constant 0 : i32
    return %c0_i32, %c0_i32_0, %c0_i32_1 : i32, i32, i32
  }
  func.func @transform_6(%arg0: i32) -> (i32, i32) {
    %c0_i32 = arith.constant 0 : i32
    %c0_i32_0 = arith.constant 0 : i32
    %c0_i32_1 = arith.constant 0 : i32
    return %c0_i32, %c0_i32_0 : i32, i32
  }
  func.func @transform_7(%arg0: i32) -> (i32, i32, i32) {
    %c0_i32 = arith.constant 0 : i32
    %c0_i32_0 = arith.constant 0 : i32
    %c0_i32_1 = arith.constant 0 : i32
    %c0_i32_2 = arith.constant 0 : i32
    return %c0_i32, %c0_i32_0, %c0_i32_1 : i32, i32, i32
  }
  func.func @transform_8(%arg0: i32) -> (i32, i32, i32) {
    %c0_i32 = arith.constant 0 : i32
    %c0_i32_0 = arith.constant 0 : i32
    %c0_i32_1 = arith.constant 0 : i32
    %c0_i32_2 = arith.constant 0 : i32
    return %c0_i32, %c0_i32_0, %c0_i32_1 : i32, i32, i32
  }
  func.func @transform_9(%arg0: i32) -> (i32, i32) {
    %c0_i32 = arith.constant 0 : i32
    %c0_i32_0 = arith.constant 0 : i32
    %c0_i32_1 = arith.constant 0 : i32
    return %c0_i32, %c0_i32_0 : i32, i32
  }
  func.func @transform_10(%arg0: i32) -> (i32, i32, i32) {
    %c0_i32 = arith.constant 0 : i32
    %c0_i32_0 = arith.constant 0 : i32
    %c0_i32_1 = arith.constant 0 : i32
    %c0_i32_2 = arith.constant 0 : i32
    return %c0_i32, %c0_i32_0, %c0_i32_1 : i32, i32, i32
  }
  func.func @transform_11(%arg0: i32) -> (i32, i32, i32) {
    %c0_i32 = arith.constant 0 : i32
    %c0_i32_0 = arith.constant 0 : i32
    %c0_i32_1 = arith.constant 0 : i32
    %c0_i32_2 = arith.constant 0 : i32
    return %c0_i32, %c0_i32_0, %c0_i32_1 : i32, i32, i32
  }
  func.func @transform_12(%arg0: i32) -> (i32, i32, i32) {
    %c0_i32 = arith.constant 0 : i32
    %c0_i32_0 = arith.constant 0 : i32
    %c0_i32_1 = arith.constant 0 : i32
    %c0_i32_2 = arith.constant 0 : i32
    return %c0_i32, %c0_i32_0, %c0_i32_1 : i32, i32, i32
  }
  func.func @transform_13(%arg0: i32) -> (i32, i32) {
    %c0_i32 = arith.constant 0 : i32
    %c0_i32_0 = arith.constant 0 : i32
    %c0_i32_1 = arith.constant 0 : i32
    return %c0_i32, %c0_i32_0 : i32, i32
  }
  func.func @transform_14(%arg0: i32) -> (i32, i32) {
    %c0_i32 = arith.constant 0 : i32
    %c0_i32_0 = arith.constant 0 : i32
    %c0_i32_1 = arith.constant 0 : i32
    return %c0_i32, %c0_i32_0 : i32, i32
  }
  func.func @transform_15(%arg0: i32) -> (i32, i32) {
    %c0_i32 = arith.constant 0 : i32
    %c0_i32_0 = arith.constant 0 : i32
    %c0_i32_1 = arith.constant 0 : i32
    return %c0_i32, %c0_i32_0 : i32, i32
  }
}

</mosaic_0001>

<llo_original>
// kernel: degli_ed_forward.1
$region0: #{degli_ed_forward.1}
  #allocation0 [shape = 'u32[]', space=smem, size = 0x4, offset = 0x4, fixed_abs, tag = 'smem constant byte address 0x4 - core index']
  #allocation1 [shape = 'u32[144,128]{1,0:T(1,128)}', space=vmem, size = 0x12000, scoped, tag = 'internal scratch']
  %s0 = inlined_call_operand.vmem [shape: f32[17,96], index: 0, kind: input, shape index: {}]
  %s1 = inlined_call_operand.vmem [shape: f32[5,8,17], index: 1, kind: input, shape index: {}]
  %s2 = inlined_call_operand.vmem [shape: f32[5,96,64], index: 2, kind: input, shape index: {}]
  %s3 = inlined_call_operand.vmem [shape: f32[1,64], index: 3, kind: input, shape index: {}]
  %s4 = inlined_call_operand.vmem [shape: f32[5,4,8], index: 4, kind: input, shape index: {}]
  %s5 = inlined_call_operand.vmem [shape: f32[5,64,128], index: 5, kind: input, shape index: {}]
  %s6 = inlined_call_operand.vmem [shape: f32[1,128], index: 6, kind: input, shape index: {}]
  %s7 = inlined_call_operand.vmem [shape: f32[4,8,4], index: 7, kind: input, shape index: {}]
  %s8 = inlined_call_operand.vmem [shape: f32[4,128,64], index: 8, kind: input, shape index: {}]
  %s9 = inlined_call_operand.vmem [shape: f32[1,64], index: 9, kind: input, shape index: {}]
  %s10 = inlined_call_operand.vmem [shape: f32[5,17,8], index: 10, kind: input, shape index: {}]
  %s11 = inlined_call_operand.vmem [shape: f32[5,64,32], index: 11, kind: input, shape index: {}]
  %s12 = inlined_call_operand.vmem [shape: f32[5,64,32], index: 12, kind: input, shape index: {}]
  %s13 = inlined_call_operand.vmem [shape: f32[1,32], index: 13, kind: input, shape index: {}]
  %s14 = inlined_call_operand.vmem [shape: f32[17,1], index: 14, kind: input, shape index: {}]
  %s15 = inlined_call_operand.vmem [shape: f32[17,32], index: 15, kind: output, shape index: {}]
  %s16 = sld [smem:[#allocation0]]
  $region70: #{degli_ed_forward.1} parent=0
    _
  %s18 = ssub.s32 1, %s16
  %s19 = scalar_select 0, %s18, %s16
  // Predicated region
  $region2: #{degli_ed_forward.1} parent=0 // pred_check
    _
  $region3: #{degli_ed_forward.1} parent=0 // pred_check_branch
    %21 = sbr.rel (0) target = $region5
  $region4: #{degli_ed_forward.1} parent=0 // pred_region
    _
  $region5: #{degli_ed_forward.1} parent=0 // pred_fallthru
    _
  // Predicated region
  $region6: #{degli_ed_forward.1} parent=0 // pred_check
    _
  $region7: #{degli_ed_forward.1} parent=0 // pred_check_branch
    %23 = sbr.rel (0) target = $region9
  $region8: #{degli_ed_forward.1} parent=0 // pred_region
    _
  $region9: #{degli_ed_forward.1} parent=0 // pred_fallthru
    _
  // Predicated region
  $region10: #{degli_ed_forward.1} parent=0 // pred_check
    _
  $region11: #{degli_ed_forward.1} parent=0 // pred_check_branch
    %25 = sbr.rel (0) target = $region13
  $region12: #{degli_ed_forward.1} parent=0 // pred_region
    _
  $region13: #{degli_ed_forward.1} parent=0 // pred_fallthru
    _
  // Predicated region
  $region14: #{degli_ed_forward.1} parent=0 // pred_check
    _
  $region15: #{degli_ed_forward.1} parent=0 // pred_check_branch
    %27 = sbr.rel (0) target = $region17
  $region16: #{degli_ed_forward.1} parent=0 // pred_region
    _
  $region17: #{degli_ed_forward.1} parent=0 // pred_fallthru
    _
  // Predicated region
  $region18: #{degli_ed_forward.1} parent=0 // pred_check
    _
  $region19: #{degli_ed_forward.1} parent=0 // pred_check_branch
    %29 = sbr.rel (0) target = $region21
  $region20: #{degli_ed_forward.1} parent=0 // pred_region
    _
  $region21: #{degli_ed_forward.1} parent=0 // pred_fallthru
    _
  // Predicated region
  $region22: #{degli_ed_forward.1} parent=0 // pred_check
    _
  $region23: #{degli_ed_forward.1} parent=0 // pred_check_branch
    %31 = sbr.rel (0) target = $region25
  $region24: #{degli_ed_forward.1} parent=0 // pred_region
    _
  $region25: #{degli_ed_forward.1} parent=0 // pred_fallthru
    _
  // Predicated region
  $region26: #{degli_ed_forward.1} parent=0 // pred_check
    _
  $region27: #{degli_ed_forward.1} parent=0 // pred_check_branch
    %33 = sbr.rel (0) target = $region29
  $region28: #{degli_ed_forward.1} parent=0 // pred_region
    _
  $region29: #{degli_ed_forward.1} parent=0 // pred_fallthru
    _
  // Predicated region
  $region30: #{degli_ed_forward.1} parent=0 // pred_check
    _
  $region31: #{degli_ed_forward.1} parent=0 // pred_check_branch
    %35 = sbr.rel (0) target = $region33
  $region32: #{degli_ed_forward.1} parent=0 // pred_region
    _
  $region33: #{degli_ed_forward.1} parent=0 // pred_fallthru
    _
  // Predicated region
  $region34: #{degli_ed_forward.1} parent=0 // pred_check
    _
  $region35: #{degli_ed_forward.1} parent=0 // pred_check_branch
    %37 = sbr.rel (0) target = $region37
  $region36: #{degli_ed_forward.1} parent=0 // pred_region
    _
  $region37: #{degli_ed_forward.1} parent=0 // pred_fallthru
    _
  // Predicated region
  $region38: #{degli_ed_forward.1} parent=0 // pred_check
    _
  $region39: #{degli_ed_forward.1} parent=0 // pred_check_branch
    %39 = sbr.rel (0) target = $region41
  $region40: #{degli_ed_forward.1} parent=0 // pred_region
    _
  $region41: #{degli_ed_forward.1} parent=0 // pred_fallthru
    _
  // Predicated region
  $region42: #{degli_ed_forward.1} parent=0 // pred_check
    _
  $region43: #{degli_ed_forward.1} parent=0 // pred_check_branch
    %41 = sbr.rel (0) target = $region45
  $region44: #{degli_ed_forward.1} parent=0 // pred_region
    _
  $region45: #{degli_ed_forward.1} parent=0 // pred_fallthru
    _
  // Predicated region
  $region46: #{degli_ed_forward.1} parent=0 // pred_check
    _
  $region47: #{degli_ed_forward.1} parent=0 // pred_check_branch
    %43 = sbr.rel (0) target = $region49
  $region48: #{degli_ed_forward.1} parent=0 // pred_region
    _
  $region49: #{degli_ed_forward.1} parent=0 // pred_fallthru
    _
  // Predicated region
  $region50: #{degli_ed_forward.1} parent=0 // pred_check
    _
  $region51: #{degli_ed_forward.1} parent=0 // pred_check_branch
    %45 = sbr.rel (0) target = $region53
  $region52: #{degli_ed_forward.1} parent=0 // pred_region
    _
  $region53: #{degli_ed_forward.1} parent=0 // pred_fallthru
    _
  // Predicated region
  $region54: #{degli_ed_forward.1} parent=0 // pred_check
    _
  $region55: #{degli_ed_forward.1} parent=0 // pred_check_branch
    %47 = sbr.rel (0) target = $region57
  $region56: #{degli_ed_forward.1} parent=0 // pred_region
    _
  $region57: #{degli_ed_forward.1} parent=0 // pred_fallthru
    _
  // Predicated region
  $region58: #{degli_ed_forward.1} parent=0 // pred_check
    _
  $region59: #{degli_ed_forward.1} parent=0 // pred_check_branch
    %49 = sbr.rel (0) target = $region61
  $region60: #{degli_ed_forward.1} parent=0 // pred_region
    _
  $region61: #{degli_ed_forward.1} parent=0 // pred_fallthru
    _
  %v50 = vld [vmem:[%s0] sm:$0xff]
  %v51 = vld [vmem:[%s0 + $0x8] sm:$0xff]
  %v52 = vld [vmem:[%s0 + $0x10] sm:$0x1]
  %v53 = vld [vmem:[%s1] sm:$0xff]
  %vm54 = vcmask 138240
  %v56 = vsel %vm54, %v53, 0
  %vm58 = vcmask 1040384
  %v60 = vsel %vm58, %v52, 0
  %62 = vmatprep.subr.mxu0 0.0
  %63 = vmatpush1.msra.mxu0 %v50
  %64 = vmatprep.subr.mxu0 0.0
  %65 = vmatpush1.msra.mxu0 %v51
  %66 = vmatprep.subr.mxu0 0.0
  %67 = vmatpush1.msra.mxu0 %v60
  %68 = vmatprep.subr.mxu0 0.0
  %69 = vmatpush1.msra.mxu0 0.0
  %70 = vmatprep.subr.mxu0 0.0
  %71 = vmatpush1.msra.mxu0 0.0
  %72 = vmatprep.subr.mxu0 0.0
  %73 = vmatpush1.msra.mxu0 0.0
  %74 = vmatprep.subr.mxu0 0.0
  %75 = vmatpush1.msra.mxu0 0.0
  %76 = vmatprep.subr.mxu0 0.0
  %77 = vmatpush1.msra.mxu0 0.0
  %78 = vmatprep.subr.mxu0 0.0
  %79 = vmatpush1.msra.mxu0 0.0
  %80 = vmatprep.subr.mxu0 0.0
  %81 = vmatpush1.msra.mxu0 0.0
  %82 = vmatprep.subr.mxu0 0.0
  %83 = vmatpush1.msra.mxu0 0.0
  %84 = vmatprep.subr.mxu0 0.0
  %85 = vmatpush1.msra.mxu0 0.0
  %86 = vmatprep.subr.mxu0 0.0
  %87 = vmatpush1.msra.mxu0 0.0
  %88 = vmatprep.subr.mxu0 0.0
  %89 = vmatpush1.msra.mxu0 0.0
  %90 = vmatprep.subr.mxu0 0.0
  %91 = vmatpush1.msra.mxu0 0.0
  %92 = vmatprep.subr.mxu0 0.0
  %93 = vmatpush1.msra.mxu0 0.0
  %94 = vmatprep.subr.mxu0 0.0
  %95 = vmatpush1.msra.mxu0 0.0
  %96 = vmatprep.subr.mxu0 0.0
  %97 = vmatpush1.msra.mxu0 0.0
  %98 = vmatprep.subr.mxu0 0.0
  %99 = vmatpush1.msra.mxu0 0.0
  %100 = vmatprep.subr.mxu0 0.0
  %101 = vmatpush1.msra.mxu0 0.0
  %102 = vmatprep.subr.mxu0 0.0
  %103 = vmatpush1.msra.mxu0 0.0
  %104 = vmatprep.subr.mxu0 0.0
  %105 = vmatpush1.msra.mxu0 0.0
  %106 = vmatprep.subr.mxu0 0.0
  %107 = vmatpush1.msra.mxu0 0.0
  %108 = vmatprep.subr.mxu0 0.0
  %109 = vmatpush1.msra.mxu0 0.0
  %110 = vmatprep.subr.mxu0 0.0
  %111 = vmatpush1.msra.mxu0 0.0
  %112 = vmatprep.subr.mxu0 0.0
  %113 = vmatpush1.msra.mxu0 0.0
  %114 = vmatprep.subr.mxu0 0.0
  %115 = vmatpush1.msra.mxu0 0.0
  %116 = vmatprep.subr.mxu0 0.0
  %117 = vmatpush1.msra.mxu0 0.0
  %118 = vmatprep.subr.mxu0 0.0
  %119 = vmatpush1.msra.mxu0 0.0
  %120 = vmatprep.subr.mxu0 0.0
  %121 = vmatpush1.msra.mxu0 0.0
  %122 = vmatprep.subr.mxu0 0.0
  %123 = vmatpush1.msra.mxu0 0.0
  %124 = vmatprep.subr.mxu0 0.0
  %125 = vmatpush1.msra.mxu0 0.0
  %126 = vmatprep.mubr.f32.mxu0 0.0
  %127 = vmatmul.mubr.f32.gmra.mrb[0].mxu0 %v56
  %v128 = vpop.f32.mrb[0].mxu0
  %v129 = vadd.f32 0.0, %v128
  %v130 = vpop.f32.mrb[0].mxu0
  %131 = vdwg.mxu0
  %v132 = vld [vmem:[%s2] sm:$0xff]
  %v133 = vld [vmem:[%s2 + $0x8] sm:$0xff]
  %v134 = vld [vmem:[%s2 + $0x10] sm:$0xff]
  %v135 = vld [vmem:[%s2 + $0x18] sm:$0xff]
  %v136 = vld [vmem:[%s2 + $0x20] sm:$0xff]
  %v137 = vld [vmem:[%s2 + $0x28] sm:$0xff]
  %v138 = vld [vmem:[%s2 + $0x30] sm:$0xff]
  %v139 = vld [vmem:[%s2 + $0x38] sm:$0xff]
  %v140 = vld [vmem:[%s2 + $0x40] sm:$0xff]
  %v141 = vld [vmem:[%s2 + $0x48] sm:$0xff]
  %v142 = vld [vmem:[%s2 + $0x50] sm:$0xff]
  %v143 = vld [vmem:[%s2 + $0x58] sm:$0xff]
  %s144 = scalar_lea.vmem %s1, 8
  %v145 = vld [vmem:[%s144] sm:$0xff]
  %v147 = vsel %vm54, %v145, 0
  %149 = vmatprep.subr.mxu0 0.0
  %150 = vmatpush1.msra.mxu0 %v50
  %151 = vmatprep.subr.mxu0 0.0
  %152 = vmatpush1.msra.mxu0 %v51
  %153 = vmatprep.subr.mxu0 0.0
  %154 = vmatpush1.msra.mxu0 %v60
  %155 = vmatprep.subr.mxu0 0.0
  %156 = vmatpush1.msra.mxu0 0.0
  %157 = vmatprep.subr.mxu0 0.0
  %158 = vmatpush1.msra.mxu0 0.0
  %159 = vmatprep.subr.mxu0 0.0
  %160 = vmatpush1.msra.mxu0 0.0
  %161 = vmatprep.subr.mxu0 0.0
  %162 = vmatpush1.msra.mxu0 0.0
  %163 = vmatprep.subr.mxu0 0.0
  %164 = vmatpush1.msra.mxu0 0.0
  %165 = vmatprep.subr.mxu0 0.0
  %166 = vmatpush1.msra.mxu0 0.0
  %167 = vmatprep.subr.mxu0 0.0
  %168 = vmatpush1.msra.mxu0 0.0
  %169 = vmatprep.subr.mxu0 0.0
  %170 = vmatpush1.msra.mxu0 0.0
  %171 = vmatprep.subr.mxu0 0.0
  %172 = vmatpush1.msra.mxu0 0.0
  %173 = vmatprep.subr.mxu0 0.0
  %174 = vmatpush1.msra.mxu0 0.0
  %175 = vmatprep.subr.mxu0 0.0
  %176 = vmatpush1.msra.mxu0 0.0
  %177 = vmatprep.subr.mxu0 0.0
  %178 = vmatpush1.msra.mxu0 0.0
  %179 = vmatprep.subr.mxu0 0.0
  %180 = vmatpush1.msra.mxu0 0.0
  %181 = vmatprep.subr.mxu0 0.0
  %182 = vmatpush1.msra.mxu0 0.0
  %183 = vmatprep.subr.mxu0 0.0
  %184 = vmatpush1.msra.mxu0 0.0
  %185 = vmatprep.subr.mxu0 0.0
  %186 = vmatpush1.msra.mxu0 0.0
  %187 = vmatprep.subr.mxu0 0.0
  %188 = vmatpush1.msra.mxu0 0.0
  %189 = vmatprep.subr.mxu0 0.0
  %190 = vmatpush1.msra.mxu0 0.0
  %191 = vmatprep.subr.mxu0 0.0
  %192 = vmatpush1.msra.mxu0 0.0
  %193 = vmatprep.subr.mxu0 0.0
  %194 = vmatpush1.msra.mxu0 0.0
  %195 = vmatprep.subr.mxu0 0.0
  %196 = vmatpush1.msra.mxu0 0.0
  %197 = vmatprep.subr.mxu0 0.0
  %198 = vmatpush1.msra.mxu0 0.0
  %199 = vmatprep.subr.mxu0 0.0
  %200 = vmatpush1.msra.mxu0 0.0
  %201 = vmatprep.subr.mxu0 0.0
  %202 = vmatpush1.msra.mxu0 0.0
  %203 = vmatprep.subr.mxu0 0.0
  %204 = vmatpush1.msra.mxu0 0.0
  %205 = vmatprep.subr.mxu0 0.0
  %206 = vmatpush1.msra.mxu0 0.0
  %207 = vmatprep.subr.mxu0 0.0
  %208 = vmatpush1.msra.mxu0 0.0
  %209 = vmatprep.subr.mxu0 0.0
  %210 = vmatpush1.msra.mxu0 0.0
  %211 = vmatprep.subr.mxu0 0.0
  %212 = vmatpush1.msra.mxu0 0.0
  %213 = vmatprep.mubr.f32.mxu0 0.0
  %214 = vmatmul.mubr.f32.gmra.mrb[0].mxu0 %v147
  %v215 = vpop.f32.mrb[0].mxu0
  %v216 = vadd.f32 0.0, %v215
  %v217 = vpop.f32.mrb[0].mxu0
  %218 = vdwg.mxu0
  %s219 = scalar_lea.vmem %s2, 96
  %v220 = vld [vmem:[%s219] sm:$0xff]
  %v221 = vld [vmem:[%s219 + $0x8] sm:$0xff]
  %v222 = vld [vmem:[%s219 + $0x10] sm:$0xff]
  %v223 = vld [vmem:[%s219 + $0x18] sm:$0xff]
  %v224 = vld [vmem:[%s219 + $0x20] sm:$0xff]
  %v225 = vld [vmem:[%s219 + $0x28] sm:$0xff]
  %v226 = vld [vmem:[%s219 + $0x30] sm:$0xff]
  %v227 = vld [vmem:[%s219 + $0x38] sm:$0xff]
  %v228 = vld [vmem:[%s219 + $0x40] sm:$0xff]
  %v229 = vld [vmem:[%s219 + $0x48] sm:$0xff]
  %v230 = vld [vmem:[%s219 + $0x50] sm:$0xff]
  %v231 = vld [vmem:[%s219 + $0x58] sm:$0xff]
  %vm232 = vcmask 785408
  %v234 = vsel %vm232, %v216, 0
  %236 = vmatprep.subr.mxu0 0.0
  %237 = vmatpush1.msra.mxu0 %v220
  %238 = vmatprep.subr.mxu0 0.0
  %239 = vmatpush1.msra.mxu0 %v221
  %240 = vmatprep.subr.mxu0 0.0
  %241 = vmatpush1.msra.mxu0 %v222
  %242 = vmatprep.subr.mxu0 0.0
  %243 = vmatpush1.msra.mxu0 %v223
  %244 = vmatprep.subr.mxu0 0.0
  %245 = vmatpush1.msra.mxu0 %v224
  %246 = vmatprep.subr.mxu0 0.0
  %247 = vmatpush1.msra.mxu0 %v225
  %248 = vmatprep.subr.mxu0 0.0
  %249 = vmatpush1.msra.mxu0 %v226
  %250 = vmatprep.subr.mxu0 0.0
  %251 = vmatpush1.msra.mxu0 %v227
  %252 = vmatprep.subr.mxu0 0.0
  %253 = vmatpush1.msra.mxu0 %v228
  %254 = vmatprep.subr.mxu0 0.0
  %255 = vmatpush1.msra.mxu0 %v229
  %256 = vmatprep.subr.mxu0 0.0
  %257 = vmatpush1.msra.mxu0 %v230
  %258 = vmatprep.subr.mxu0 0.0
  %259 = vmatpush1.msra.mxu0 %v231
  %260 = vmatprep.subr.mxu0 0.0
  %261 = vmatpush1.msra.mxu0 0.0
  %262 = vmatprep.subr.mxu0 0.0
  %263 = vmatpush1.msra.mxu0 0.0
  %264 = vmatprep.subr.mxu0 0.0
  %265 = vmatpush1.msra.mxu0 0.0
  %266 = vmatprep.subr.mxu0 0.0
  %267 = vmatpush1.msra.mxu0 0.0
  %268 = vmatprep.subr.mxu0 0.0
  %269 = vmatpush1.msra.mxu0 0.0
  %270 = vmatprep.subr.mxu0 0.0
  %271 = vmatpush1.msra.mxu0 0.0
  %272 = vmatprep.subr.mxu0 0.0
  %273 = vmatpush1.msra.mxu0 0.0
  %274 = vmatprep.subr.mxu0 0.0
  %275 = vmatpush1.msra.mxu0 0.0
  %276 = vmatprep.subr.mxu0 0.0
  %277 = vmatpush1.msra.mxu0 0.0
  %278 = vmatprep.subr.mxu0 0.0
  %279 = vmatpush1.msra.mxu0 0.0
  %280 = vmatprep.subr.mxu0 0.0
  %281 = vmatpush1.msra.mxu0 0.0
  %282 = vmatprep.subr.mxu0 0.0
  %283 = vmatpush1.msra.mxu0 0.0
  %284 = vmatprep.subr.mxu0 0.0
  %285 = vmatpush1.msra.mxu0 0.0
  %286 = vmatprep.subr.mxu0 0.0
  %287 = vmatpush1.msra.mxu0 0.0
  %288 = vmatprep.subr.mxu0 0.0
  %289 = vmatpush1.msra.mxu0 0.0
  %290 = vmatprep.subr.mxu0 0.0
  %291 = vmatpush1.msra.mxu0 0.0
  %292 = vmatprep.subr.mxu0 0.0
  %293 = vmatpush1.msra.mxu0 0.0
  %294 = vmatprep.subr.mxu0 0.0
  %295 = vmatpush1.msra.mxu0 0.0
  %296 = vmatprep.subr.mxu0 0.0
  %297 = vmatpush1.msra.mxu0 0.0
  %298 = vmatprep.subr.mxu0 0.0
  %299 = vmatpush1.msra.mxu0 0.0
  %300 = vmatprep.mubr.f32.mxu0 0.0
  %301 = vmatmul.mubr.f32.gmra.mrb[0].mxu0 %v234
  %v302 = vpop.f32.mrb[0].mxu0
  %v303 = vadd.f32 0.0, %v302
  %v304 = vpop.f32.mrb[0].mxu0
  %305 = vdwg.mxu0
  %v307 = vsel %vm232, %v129, 0
  %309 = vmatprep.subr.mxu0 0.0
  %310 = vmatpush1.msra.mxu0 %v132
  %311 = vmatprep.subr.mxu0 0.0
  %312 = vmatpush1.msra.mxu0 %v133
  %313 = vmatprep.subr.mxu0 0.0
  %314 = vmatpush1.msra.mxu0 %v134
  %315 = vmatprep.subr.mxu0 0.0
  %316 = vmatpush1.msra.mxu0 %v135
  %317 = vmatprep.subr.mxu0 0.0
  %318 = vmatpush1.msra.mxu0 %v136
  %319 = vmatprep.subr.mxu0 0.0
  %320 = vmatpush1.msra.mxu0 %v137
  %321 = vmatprep.subr.mxu0 0.0
  %322 = vmatpush1.msra.mxu0 %v138
  %323 = vmatprep.subr.mxu0 0.0
  %324 = vmatpush1.msra.mxu0 %v139
  %325 = vmatprep.subr.mxu0 0.0
  %326 = vmatpush1.msra.mxu0 %v140
  %327 = vmatprep.subr.mxu0 0.0
  %328 = vmatpush1.msra.mxu0 %v141
  %329 = vmatprep.subr.mxu0 0.0
  %330 = vmatpush1.msra.mxu0 %v142
  %331 = vmatprep.subr.mxu0 0.0
  %332 = vmatpush1.msra.mxu0 %v143
  %333 = vmatprep.subr.mxu0 0.0
  %334 = vmatpush1.msra.mxu0 0.0
  %335 = vmatprep.subr.mxu0 0.0
  %336 = vmatpush1.msra.mxu0 0.0
  %337 = vmatprep.subr.mxu0 0.0
  %338 = vmatpush1.msra.mxu0 0.0
  %339 = vmatprep.subr.mxu0 0.0
  %340 = vmatpush1.msra.mxu0 0.0
  %341 = vmatprep.subr.mxu0 0.0
  %342 = vmatpush1.msra.mxu0 0.0
  %343 = vmatprep.subr.mxu0 0.0
  %344 = vmatpush1.msra.mxu0 0.0
  %345 = vmatprep.subr.mxu0 0.0
  %346 = vmatpush1.msra.mxu0 0.0
  %347 = vmatprep.subr.mxu0 0.0
  %348 = vmatpush1.msra.mxu0 0.0
  %349 = vmatprep.subr.mxu0 0.0
  %350 = vmatpush1.msra.mxu0 0.0
  %351 = vmatprep.subr.mxu0 0.0
  %352 = vmatpush1.msra.mxu0 0.0
  %353 = vmatprep.subr.mxu0 0.0
  %354 = vmatpush1.msra.mxu0 0.0
  %355 = vmatprep.subr.mxu0 0.0
  %356 = vmatpush1.msra.mxu0 0.0
  %357 = vmatprep.subr.mxu0 0.0
  %358 = vmatpush1.msra.mxu0 0.0
  %359 = vmatprep.subr.mxu0 0.0
  %360 = vmatpush1.msra.mxu0 0.0
  %361 = vmatprep.subr.mxu0 0.0
  %362 = vmatpush1.msra.mxu0 0.0
  %363 = vmatprep.subr.mxu0 0.0
  %364 = vmatpush1.msra.mxu0 0.0
  %365 = vmatprep.subr.mxu0 0.0
  %366 = vmatpush1.msra.mxu0 0.0
  %367 = vmatprep.subr.mxu0 0.0
  %368 = vmatpush1.msra.mxu0 0.0
  %369 = vmatprep.subr.mxu0 0.0
  %370 = vmatpush1.msra.mxu0 0.0
  %371 = vmatprep.subr.mxu0 0.0
  %372 = vmatpush1.msra.mxu0 0.0
  %373 = vmatprep.mubr.f32.mxu0 0.0
  %374 = vmatmul.mubr.f32.gmra.mrb[0].mxu0 %v307
  %v375 = vpop.f32.mrb[0].mxu0
  %v376 = vadd.f32 %v303, %v375
  %v377 = vpop.f32.mrb[0].mxu0
  %378 = vdwg.mxu0
  %s379 = scalar_lea.vmem %s1, 16
  %v380 = vld [vmem:[%s379] sm:$0xff]
  %v382 = vsel %vm54, %v380, 0
  %384 = vmatprep.subr.mxu0 0.0
  %385 = vmatpush1.msra.mxu0 %v50
  %386 = vmatprep.subr.mxu0 0.0
  %387 = vmatpush1.msra.mxu0 %v51
  %388 = vmatprep.subr.mxu0 0.0
  %389 = vmatpush1.msra.mxu0 %v60
  %390 = vmatprep.subr.mxu0 0.0
  %391 = vmatpush1.msra.mxu0 0.0
  %392 = vmatprep.subr.mxu0 0.0
  %393 = vmatpush1.msra.mxu0 0.0
  %394 = vmatprep.subr.mxu0 0.0
  %395 = vmatpush1.msra.mxu0 0.0
  %396 = vmatprep.subr.mxu0 0.0
  %397 = vmatpush1.msra.mxu0 0.0
  %398 = vmatprep.subr.mxu0 0.0
  %399 = vmatpush1.msra.mxu0 0.0
  %400 = vmatprep.subr.mxu0 0.0
  %401 = vmatpush1.msra.mxu0 0.0
  %402 = vmatprep.subr.mxu0 0.0
  %403 = vmatpush1.msra.mxu0 0.0
  %404 = vmatprep.subr.mxu0 0.0
  %405 = vmatpush1.msra.mxu0 0.0
  %406 = vmatprep.subr.mxu0 0.0
  %407 = vmatpush1.msra.mxu0 0.0
  %408 = vmatprep.subr.mxu0 0.0
  %409 = vmatpush1.msra.mxu0 0.0
  %410 = vmatprep.subr.mxu0 0.0
  %411 = vmatpush1.msra.mxu0 0.0
  %412 = vmatprep.subr.mxu0 0.0
  %413 = vmatpush1.msra.mxu0 0.0
  %414 = vmatprep.subr.mxu0 0.0
  %415 = vmatpush1.msra.mxu0 0.0
  %416 = vmatprep.subr.mxu0 0.0
  %417 = vmatpush1.msra.mxu0 0.0
  %418 = vmatprep.subr.mxu0 0.0
  %419 = vmatpush1.msra.mxu0 0.0
  %420 = vmatprep.subr.mxu0 0.0
  %421 = vmatpush1.msra.mxu0 0.0
  %422 = vmatprep.subr.mxu0 0.0
  %423 = vmatpush1.msra.mxu0 0.0
  %424 = vmatprep.subr.mxu0 0.0
  %425 = vmatpush1.msra.mxu0 0.0
  %426 = vmatprep.subr.mxu0 0.0
  %427 = vmatpush1.msra.mxu0 0.0
  %428 = vmatprep.subr.mxu0 0.0
  %429 = vmatpush1.msra.mxu0 0.0
  %430 = vmatprep.subr.mxu0 0.0
  %431 = vmatpush1.msra.mxu0 0.0
  %432 = vmatprep.subr.mxu0 0.0
  %433 = vmatpush1.msra.mxu0 0.0
  %434 = vmatprep.subr.mxu0 0.0
  %435 = vmatpush1.msra.mxu0 0.0
  %436 = vmatprep.subr.mxu0 0.0
  %437 = vmatpush1.msra.mxu0 0.0
  %438 = vmatprep.subr.mxu0 0.0
  %439 = vmatpush1.msra.mxu0 0.0
  %440 = vmatprep.subr.mxu0 0.0
  %441 = vmatpush1.msra.mxu0 0.0
  %442 = vmatprep.subr.mxu0 0.0
  %443 = vmatpush1.msra.mxu0 0.0
  %444 = vmatprep.subr.mxu0 0.0
  %445 = vmatpush1.msra.mxu0 0.0
  %446 = vmatprep.subr.mxu0 0.0
  %447 = vmatpush1.msra.mxu0 0.0
  %448 = vmatprep.mubr.f32.mxu0 0.0
  %449 = vmatmul.mubr.f32.gmra.mrb[0].mxu0 %v382
  %v450 = vpop.f32.mrb[0].mxu0
  %v451 = vadd.f32 0.0, %v450
  %v452 = vpop.f32.mrb[0].mxu0
  %453 = vdwg.mxu0
  %s454 = scalar_lea.vmem %s2, 192
  %v455 = vld [vmem:[%s454] sm:$0xff]
  %v456 = vld [vmem:[%s454 + $0x8] sm:$0xff]
  %v457 = vld [vmem:[%s454 + $0x10] sm:$0xff]
  %v458 = vld [vmem:[%s454 + $0x18] sm:$0xff]
  %v459 = vld [vmem:[%s454 + $0x20] sm:$0xff]
  %v460 = vld [vmem:[%s454 + $0x28] sm:$0xff]
  %v461 = vld [vmem:[%s454 + $0x30] sm:$0xff]
  %v462 = vld [vmem:[%s454 + $0x38] sm:$0xff]
  %v463 = vld [vmem:[%s454 + $0x40] sm:$0xff]
  %v464 = vld [vmem:[%s454 + $0x48] sm:$0xff]
  %v465 = vld [vmem:[%s454 + $0x50] sm:$0xff]
  %v466 = vld [vmem:[%s454 + $0x58] sm:$0xff]
  %v468 = vsel %vm232, %v451, 0
  %470 = vmatprep.subr.mxu0 0.0
  %471 = vmatpush1.msra.mxu0 %v455
  %472 = vmatprep.subr.mxu0 0.0
  %473 = vmatpush1.msra.mxu0 %v456
  %474 = vmatprep.subr.mxu0 0.0
  %475 = vmatpush1.msra.mxu0 %v457
  %476 = vmatprep.subr.mxu0 0.0
  %477 = vmatpush1.msra.mxu0 %v458
  %478 = vmatprep.subr.mxu0 0.0
  %479 = vmatpush1.msra.mxu0 %v459
  %480 = vmatprep.subr.mxu0 0.0
  %481 = vmatpush1.msra.mxu0 %v460
  %482 = vmatprep.subr.mxu0 0.0
  %483 = vmatpush1.msra.mxu0 %v461
  %484 = vmatprep.subr.mxu0 0.0
  %485 = vmatpush1.msra.mxu0 %v462
  %486 = vmatprep.subr.mxu0 0.0
  %487 = vmatpush1.msra.mxu0 %v463
  %488 = vmatprep.subr.mxu0 0.0
  %489 = vmatpush1.msra.mxu0 %v464
  %490 = vmatprep.subr.mxu0 0.0
  %491 = vmatpush1.msra.mxu0 %v465
  %492 = vmatprep.subr.mxu0 0.0
  %493 = vmatpush1.msra.mxu0 %v466
  %494 = vmatprep.subr.mxu0 0.0
  %495 = vmatpush1.msra.mxu0 0.0
  %496 = vmatprep.subr.mxu0 0.0
  %497 = vmatpush1.msra.mxu0 0.0
  %498 = vmatprep.subr.mxu0 0.0
  %499 = vmatpush1.msra.mxu0 0.0
  %500 = vmatprep.subr.mxu0 0.0
  %501 = vmatpush1.msra.mxu0 0.0
  %502 = vmatprep.subr.mxu0 0.0
  %503 = vmatpush1.msra.mxu0 0.0
  %504 = vmatprep.subr.mxu0 0.0
  %505 = vmatpush1.msra.mxu0 0.0
  %506 = vmatprep.subr.mxu0 0.0
  %507 = vmatpush1.msra.mxu0 0.0
  %508 = vmatprep.subr.mxu0 0.0
  %509 = vmatpush1.msra.mxu0 0.0
  %510 = vmatprep.subr.mxu0 0.0
  %511 = vmatpush1.msra.mxu0 0.0
  %512 = vmatprep.subr.mxu0 0.0
  %513 = vmatpush1.msra.mxu0 0.0
  %514 = vmatprep.subr.mxu0 0.0
  %515 = vmatpush1.msra.mxu0 0.0
  %516 = vmatprep.subr.mxu0 0.0
  %517 = vmatpush1.msra.mxu0 0.0
  %518 = vmatprep.subr.mxu0 0.0
  %519 = vmatpush1.msra.mxu0 0.0
  %520 = vmatprep.subr.mxu0 0.0
  %521 = vmatpush1.msra.mxu0 0.0
  %522 = vmatprep.subr.mxu0 0.0
  %523 = vmatpush1.msra.mxu0 0.0
  %524 = vmatprep.subr.mxu0 0.0
  %525 = vmatpush1.msra.mxu0 0.0
  %526 = vmatprep.subr.mxu0 0.0
  %527 = vmatpush1.msra.mxu0 0.0
  %528 = vmatprep.subr.mxu0 0.0
  %529 = vmatpush1.msra.mxu0 0.0
  %530 = vmatprep.subr.mxu0 0.0
  %531 = vmatpush1.msra.mxu0 0.0
  %532 = vmatprep.subr.mxu0 0.0
  %533 = vmatpush1.msra.mxu0 0.0
  %534 = vmatprep.mubr.f32.mxu0 0.0
  %535 = vmatmul.mubr.f32.gmra.mrb[0].mxu0 %v468
  %v536 = vpop.f32.mrb[0].mxu0
  %v537 = vadd.f32 0.0, %v536
  %v538 = vpop.f32.mrb[0].mxu0
  %539 = vdwg.mxu0
  %v540 = vadd.f32 %v376, %v537
  %s541 = scalar_lea.vmem %s1, 24
  %v542 = vld [vmem:[%s541] sm:$0xff]
  %v544 = vsel %vm54, %v542, 0
  %546 = vmatprep.subr.mxu0 0.0
  %547 = vmatpush1.msra.mxu0 %v50
  %548 = vmatprep.subr.mxu0 0.0
  %549 = vmatpush1.msra.mxu0 %v51
  %550 = vmatprep.subr.mxu0 0.0
  %551 = vmatpush1.msra.mxu0 %v60
  %552 = vmatprep.subr.mxu0 0.0
  %553 = vmatpush1.msra.mxu0 0.0
  %554 = vmatprep.subr.mxu0 0.0
  %555 = vmatpush1.msra.mxu0 0.0
  %556 = vmatprep.subr.mxu0 0.0
  %557 = vmatpush1.msra.mxu0 0.0
  %558 = vmatprep.subr.mxu0 0.0
  %559 = vmatpush1.msra.mxu0 0.0
  %560 = vmatprep.subr.mxu0 0.0
  %561 = vmatpush1.msra.mxu0 0.0
  %562 = vmatprep.subr.mxu0 0.0
  %563 = vmatpush1.msra.mxu0 0.0
  %564 = vmatprep.subr.mxu0 0.0
  %565 = vmatpush1.msra.mxu0 0.0
  %566 = vmatprep.subr.mxu0 0.0
  %567 = vmatpush1.msra.mxu0 0.0
  %568 = vmatprep.subr.mxu0 0.0
  %569 = vmatpush1.msra.mxu0 0.0
  %570 = vmatprep.subr.mxu0 0.0
  %571 = vmatpush1.msra.mxu0 0.0
  %572 = vmatprep.subr.mxu0 0.0
  %573 = vmatpush1.msra.mxu0 0.0
  %574 = vmatprep.subr.mxu0 0.0
  %575 = vmatpush1.msra.mxu0 0.0
  %576 = vmatprep.subr.mxu0 0.0
  %577 = vmatpush1.msra.mxu0 0.0
  %578 = vmatprep.subr.mxu0 0.0
  %579 = vmatpush1.msra.mxu0 0.0
  %580 = vmatprep.subr.mxu0 0.0
  %581 = vmatpush1.msra.mxu0 0.0
  %582 = vmatprep.subr.mxu0 0.0
  %583 = vmatpush1.msra.mxu0 0.0
  %584 = vmatprep.subr.mxu0 0.0
  %585 = vmatpush1.msra.mxu0 0.0
  %586 = vmatprep.subr.mxu0 0.0
  %587 = vmatpush1.msra.mxu0 0.0
  %588 = vmatprep.subr.mxu0 0.0
  %589 = vmatpush1.msra.mxu0 0.0
  %590 = vmatprep.subr.mxu0 0.0
  %591 = vmatpush1.msra.mxu0 0.0
  %592 = vmatprep.subr.mxu0 0.0
  %593 = vmatpush1.msra.mxu0 0.0
  %594 = vmatprep.subr.mxu0 0.0
  %595 = vmatpush1.msra.mxu0 0.0
  %596 = vmatprep.subr.mxu0 0.0
  %597 = vmatpush1.msra.mxu0 0.0
  %598 = vmatprep.subr.mxu0 0.0
  %599 = vmatpush1.msra.mxu0 0.0
  %600 = vmatprep.subr.mxu0 0.0
  %601 = vmatpush1.msra.mxu0 0.0
  %602 = vmatprep.subr.mxu0 0.0
  %603 = vmatpush1.msra.mxu0 0.0
  %604 = vmatprep.subr.mxu0 0.0
  %605 = vmatpush1.msra.mxu0 0.0
  %606 = vmatprep.subr.mxu0 0.0
  %607 = vmatpush1.msra.mxu0 0.0
  %608 = vmatprep.subr.mxu0 0.0
  %609 = vmatpush1.msra.mxu0 0.0
  %610 = vmatprep.mubr.f32.mxu0 0.0
  %611 = vmatmul.mubr.f32.gmra.mrb[0].mxu0 %v544
  %v612 = vpop.f32.mrb[0].mxu0
  %v613 = vadd.f32 0.0, %v612
  %v614 = vpop.f32.mrb[0].mxu0
  %615 = vdwg.mxu0
  %s616 = scalar_lea.vmem %s2, 288
  %v617 = vld [vmem:[%s616] sm:$0xff]
  %v618 = vld [vmem:[%s616 + $0x8] sm:$0xff]
  %v619 = vld [vmem:[%s616 + $0x10] sm:$0xff]
  %v620 = vld [vmem:[%s616 + $0x18] sm:$0xff]
  %v621 = vld [vmem:[%s616 + $0x20] sm:$0xff]
  %v622 = vld [vmem:[%s616 + $0x28] sm:$0xff]
  %v623 = vld [vmem:[%s616 + $0x30] sm:$0xff]
  %v624 = vld [vmem:[%s616 + $0x38] sm:$0xff]
  %v625 = vld [vmem:[%s616 + $0x40] sm:$0xff]
  %v626 = vld [vmem:[%s616 + $0x48] sm:$0xff]
  %v627 = vld [vmem:[%s616 + $0x50] sm:$0xff]
  %v628 = vld [vmem:[%s616 + $0x58] sm:$0xff]
  %v630 = vsel %vm232, %v613, 0
  %632 = vmatprep.subr.mxu0 0.0
  %633 = vmatpush1.msra.mxu0 %v617
  %634 = vmatprep.subr.mxu0 0.0
  %635 = vmatpush1.msra.mxu0 %v618
  %636 = vmatprep.subr.mxu0 0.0
  %637 = vmatpush1.msra.mxu0 %v619
  %638 = vmatprep.subr.mxu0 0.0
  %639 = vmatpush1.msra.mxu0 %v620
  %640 = vmatprep.subr.mxu0 0.0
  %641 = vmatpush1.msra.mxu0 %v621
  %642 = vmatprep.subr.mxu0 0.0
  %643 = vmatpush1.msra.mxu0 %v622
  %644 = vmatprep.subr.mxu0 0.0
  %645 = vmatpush1.msra.mxu0 %v623
  %646 = vmatprep.subr.mxu0 0.0
  %647 = vmatpush1.msra.mxu0 %v624
  %648 = vmatprep.subr.mxu0 0.0
  %649 = vmatpush1.msra.mxu0 %v625
  %650 = vmatprep.subr.mxu0 0.0
  %651 = vmatpush1.msra.mxu0 %v626
  %652 = vmatprep.subr.mxu0 0.0
  %653 = vmatpush1.msra.mxu0 %v627
  %654 = vmatprep.subr.mxu0 0.0
  %655 = vmatpush1.msra.mxu0 %v628
  %656 = vmatprep.subr.mxu0 0.0
  %657 = vmatpush1.msra.mxu0 0.0
  %658 = vmatprep.subr.mxu0 0.0
  %659 = vmatpush1.msra.mxu0 0.0
  %660 = vmatprep.subr.mxu0 0.0
  %661 = vmatpush1.msra.mxu0 0.0
  %662 = vmatprep.subr.mxu0 0.0
  %663 = vmatpush1.msra.mxu0 0.0
  %664 = vmatprep.subr.mxu0 0.0
  %665 = vmatpush1.msra.mxu0 0.0
  %666 = vmatprep.subr.mxu0 0.0
  %667 = vmatpush1.msra.mxu0 0.0
  %668 = vmatprep.subr.mxu0 0.0
  %669 = vmatpush1.msra.mxu0 0.0
  %670 = vmatprep.subr.mxu0 0.0
  %671 = vmatpush1.msra.mxu0 0.0
  %672 = vmatprep.subr.mxu0 0.0
  %673 = vmatpush1.msra.mxu0 0.0
  %674 = vmatprep.subr.mxu0 0.0
  %675 = vmatpush1.msra.mxu0 0.0
  %676 = vmatprep.subr.mxu0 0.0
  %677 = vmatpush1.msra.mxu0 0.0
  %678 = vmatprep.subr.mxu0 0.0
  %679 = vmatpush1.msra.mxu0 0.0
  %680 = vmatprep.subr.mxu0 0.0
  %681 = vmatpush1.msra.mxu0 0.0
  %682 = vmatprep.subr.mxu0 0.0
  %683 = vmatpush1.msra.mxu0 0.0
  %684 = vmatprep.subr.mxu0 0.0
  %685 = vmatpush1.msra.mxu0 0.0
  %686 = vmatprep.subr.mxu0 0.0
  %687 = vmatpush1.msra.mxu0 0.0
  %688 = vmatprep.subr.mxu0 0.0
  %689 = vmatpush1.msra.mxu0 0.0
  %690 = vmatprep.subr.mxu0 0.0
  %691 = vmatpush1.msra.mxu0 0.0
  %692 = vmatprep.subr.mxu0 0.0
  %693 = vmatpush1.msra.mxu0 0.0
  %694 = vmatprep.subr.mxu0 0.0
  %695 = vmatpush1.msra.mxu0 0.0
  %696 = vmatprep.mubr.f32.mxu0 0.0
  %697 = vmatmul.mubr.f32.gmra.mrb[0].mxu0 %v630
  %v698 = vpop.f32.mrb[0].mxu0
  %v699 = vadd.f32 0.0, %v698
  %v700 = vpop.f32.mrb[0].mxu0
  %701 = vdwg.mxu0
  %v702 = vadd.f32 %v540, %v699
  %s703 = scalar_lea.vmem %s1, 32
  %v704 = vld [vmem:[%s703] sm:$0xff]
  %v706 = vsel %vm54, %v704, 0
  %708 = vmatprep.subr.mxu0 0.0
  %709 = vmatpush1.msra.mxu0 %v50
  %710 = vmatprep.subr.mxu0 0.0
  %711 = vmatpush1.msra.mxu0 %v51
  %712 = vmatprep.subr.mxu0 0.0
  %713 = vmatpush1.msra.mxu0 %v60
  %714 = vmatprep.subr.mxu0 0.0
  %715 = vmatpush1.msra.mxu0 0.0
  %716 = vmatprep.subr.mxu0 0.0
  %717 = vmatpush1.msra.mxu0 0.0
  %718 = vmatprep.subr.mxu0 0.0
  %719 = vmatpush1.msra.mxu0 0.0
  %720 = vmatprep.subr.mxu0 0.0
  %721 = vmatpush1.msra.mxu0 0.0
  %722 = vmatprep.subr.mxu0 0.0
  %723 = vmatpush1.msra.mxu0 0.0
  %724 = vmatprep.subr.mxu0 0.0
  %725 = vmatpush1.msra.mxu0 0.0
  %726 = vmatprep.subr.mxu0 0.0
  %727 = vmatpush1.msra.mxu0 0.0
  %728 = vmatprep.subr.mxu0 0.0
  %729 = vmatpush1.msra.mxu0 0.0
  %730 = vmatprep.subr.mxu0 0.0
  %731 = vmatpush1.msra.mxu0 0.0
  %732 = vmatprep.subr.mxu0 0.0
  %733 = vmatpush1.msra.mxu0 0.0
  %734 = vmatprep.subr.mxu0 0.0
  %735 = vmatpush1.msra.mxu0 0.0
  %736 = vmatprep.subr.mxu0 0.0
  %737 = vmatpush1.msra.mxu0 0.0
  %738 = vmatprep.subr.mxu0 0.0
  %739 = vmatpush1.msra.mxu0 0.0
  %740 = vmatprep.subr.mxu0 0.0
  %741 = vmatpush1.msra.mxu0 0.0
  %742 = vmatprep.subr.mxu0 0.0
  %743 = vmatpush1.msra.mxu0 0.0
  %744 = vmatprep.subr.mxu0 0.0
  %745 = vmatpush1.msra.mxu0 0.0
  %746 = vmatprep.subr.mxu0 0.0
  %747 = vmatpush1.msra.mxu0 0.0
  %748 = vmatprep.subr.mxu0 0.0
  %749 = vmatpush1.msra.mxu0 0.0
  %750 = vmatprep.subr.mxu0 0.0
  %751 = vmatpush1.msra.mxu0 0.0
  %752 = vmatprep.subr.mxu0 0.0
  %753 = vmatpush1.msra.mxu0 0.0
  %754 = vmatprep.subr.mxu0 0.0
  %755 = vmatpush1.msra.mxu0 0.0
  %756 = vmatprep.subr.mxu0 0.0
  %757 = vmatpush1.msra.mxu0 0.0
  %758 = vmatprep.subr.mxu0 0.0
  %759 = vmatpush1.msra.mxu0 0.0
  %760 = vmatprep.subr.mxu0 0.0
  %761 = vmatpush1.msra.mxu0 0.0
  %762 = vmatprep.subr.mxu0 0.0
  %763 = vmatpush1.msra.mxu0 0.0
  %764 = vmatprep.subr.mxu0 0.0
  %765 = vmatpush1.msra.mxu0 0.0
  %766 = vmatprep.subr.mxu0 0.0
  %767 = vmatpush1.msra.mxu0 0.0
  %768 = vmatprep.subr.mxu0 0.0
  %769 = vmatpush1.msra.mxu0 0.0
  %770 = vmatprep.subr.mxu0 0.0
  %771 = vmatpush1.msra.mxu0 0.0
  %772 = vmatprep.mubr.f32.mxu0 0.0
  %773 = vmatmul.mubr.f32.gmra.mrb[0].mxu0 %v706
  %v774 = vpop.f32.mrb[0].mxu0
  %v775 = vadd.f32 0.0, %v774
  %v776 = vpop.f32.mrb[0].mxu0
  %777 = vdwg.mxu0
  %s778 = scalar_lea.vmem %s2, 384
  %v779 = vld [vmem:[%s778] sm:$0xff]
  %v780 = vld [vmem:[%s778 + $0x8] sm:$0xff]
  %v781 = vld [vmem:[%s778 + $0x10] sm:$0xff]
  %v782 = vld [vmem:[%s778 + $0x18] sm:$0xff]
  %v783 = vld [vmem:[%s778 + $0x20] sm:$0xff]
  %v784 = vld [vmem:[%s778 + $0x28] sm:$0xff]
  %v785 = vld [vmem:[%s778 + $0x30] sm:$0xff]
  %v786 = vld [vmem:[%s778 + $0x38] sm:$0xff]
  %v787 = vld [vmem:[%s778 + $0x40] sm:$0xff]
  %v788 = vld [vmem:[%s778 + $0x48] sm:$0xff]
  %v789 = vld [vmem:[%s778 + $0x50] sm:$0xff]
  %v790 = vld [vmem:[%s778 + $0x58] sm:$0xff]
  %v792 = vsel %vm232, %v775, 0
  %794 = vmatprep.subr.mxu0 0.0
  %795 = vmatpush1.msra.mxu0 %v779
  %796 = vmatprep.subr.mxu0 0.0
  %797 = vmatpush1.msra.mxu0 %v780
  %798 = vmatprep.subr.mxu0 0.0
  %799 = vmatpush1.msra.mxu0 %v781
  %800 = vmatprep.subr.mxu0 0.0
  %801 = vmatpush1.msra.mxu0 %v782
  %802 = vmatprep.subr.mxu0 0.0
  %803 = vmatpush1.msra.mxu0 %v783
  %804 = vmatprep.subr.mxu0 0.0
  %805 = vmatpush1.msra.mxu0 %v784
  %806 = vmatprep.subr.mxu0 0.0
  %807 = vmatpush1.msra.mxu0 %v785
  %808 = vmatprep.subr.mxu0 0.0
  %809 = vmatpush1.msra.mxu0 %v786
  %810 = vmatprep.subr.mxu0 0.0
  %811 = vmatpush1.msra.mxu0 %v787
  %812 = vmatprep.subr.mxu0 0.0
  %813 = vmatpush1.msra.mxu0 %v788
  %814 = vmatprep.subr.mxu0 0.0
  %815 = vmatpush1.msra.mxu0 %v789
  %816 = vmatprep.subr.mxu0 0.0
  %817 = vmatpush1.msra.mxu0 %v790
  %818 = vmatprep.subr.mxu0 0.0
  %819 = vmatpush1.msra.mxu0 0.0
  %820 = vmatprep.subr.mxu0 0.0
  %821 = vmatpush1.msra.mxu0 0.0
  %822 = vmatprep.subr.mxu0 0.0
  %823 = vmatpush1.msra.mxu0 0.0
  %824 = vmatprep.subr.mxu0 0.0
  %825 = vmatpush1.msra.mxu0 0.0
  %826 = vmatprep.subr.mxu0 0.0
  %827 = vmatpush1.msra.mxu0 0.0
  %828 = vmatprep.subr.mxu0 0.0
  %829 = vmatpush1.msra.mxu0 0.0
  %830 = vmatprep.subr.mxu0 0.0
  %831 = vmatpush1.msra.mxu0 0.0
  %832 = vmatprep.subr.mxu0 0.0
  %833 = vmatpush1.msra.mxu0 0.0
  %834 = vmatprep.subr.mxu0 0.0
  %835 = vmatpush1.msra.mxu0 0.0
  %836 = vmatprep.subr.mxu0 0.0
  %837 = vmatpush1.msra.mxu0 0.0
  %838 = vmatprep.subr.mxu0 0.0
  %839 = vmatpush1.msra.mxu0 0.0
  %840 = vmatprep.subr.mxu0 0.0
  %841 = vmatpush1.msra.mxu0 0.0
  %842 = vmatprep.subr.mxu0 0.0
  %843 = vmatpush1.msra.mxu0 0.0
  %844 = vmatprep.subr.mxu0 0.0
  %845 = vmatpush1.msra.mxu0 0.0
  %846 = vmatprep.subr.mxu0 0.0
  %847 = vmatpush1.msra.mxu0 0.0
  %848 = vmatprep.subr.mxu0 0.0
  %849 = vmatpush1.msra.mxu0 0.0
  %850 = vmatprep.subr.mxu0 0.0
  %851 = vmatpush1.msra.mxu0 0.0
  %852 = vmatprep.subr.mxu0 0.0
  %853 = vmatpush1.msra.mxu0 0.0
  %854 = vmatprep.subr.mxu0 0.0
  %855 = vmatpush1.msra.mxu0 0.0
  %856 = vmatprep.subr.mxu0 0.0
  %857 = vmatpush1.msra.mxu0 0.0
  %858 = vmatprep.mubr.f32.mxu0 0.0
  %859 = vmatmul.mubr.f32.gmra.mrb[0].mxu0 %v792
  %v860 = vpop.f32.mrb[0].mxu0
  %v861 = vadd.f32 0.0, %v860
  %v862 = vpop.f32.mrb[0].mxu0
  %863 = vdwg.mxu0
  %v864 = vadd.f32 %v702, %v861
  %v865 = vld [vmem:[%s3] sm:$0x1]
  %v867 = vlaneseq
  %v868 = vshrl.u32 %v867, 7
  %v869 = vsub.s32 0, %v868
  %v870 = vrot.slane %v865, %v869
  %v872 = vadd.f32 %v864, %v870
  %vm873 = vcmp.ge.f32.partialorder %v872, 0.0
  %v874 = vmul.f32 %v872, 0.2
  %v875 = vsel %vm873, %v872, %v874
  %v876 = vld [vmem:[%s4] sm:$0xf]
  %vm877 = vcmask 64512
  %v879 = vsel %vm877, %v876, 0
  %881 = vmatprep.subr.mxu0 0.0
  %882 = vmatpush1.msra.mxu0 %v875
  %883 = vmatprep.subr.mxu0 0.0
  %884 = vmatpush1.msra.mxu0 0.0
  %885 = vmatprep.subr.mxu0 0.0
  %886 = vmatpush1.msra.mxu0 0.0
  %887 = vmatprep.subr.mxu0 0.0
  %888 = vmatpush1.msra.mxu0 0.0
  %889 = vmatprep.subr.mxu0 0.0
  %890 = vmatpush1.msra.mxu0 0.0
  %891 = vmatprep.subr.mxu0 0.0
  %892 = vmatpush1.msra.mxu0 0.0
  %893 = vmatprep.subr.mxu0 0.0
  %894 = vmatpush1.msra.mxu0 0.0
  %895 = vmatprep.subr.mxu0 0.0
  %896 = vmatpush1.msra.mxu0 0.0
  %897 = vmatprep.subr.mxu0 0.0
  %898 = vmatpush1.msra.mxu0 0.0
  %899 = vmatprep.subr.mxu0 0.0
  %900 = vmatpush1.msra.mxu0 0.0
  %901 = vmatprep.subr.mxu0 0.0
  %902 = vmatpush1.msra.mxu0 0.0
  %903 = vmatprep.subr.mxu0 0.0
  %904 = vmatpush1.msra.mxu0 0.0
  %905 = vmatprep.subr.mxu0 0.0
  %906 = vmatpush1.msra.mxu0 0.0
  %907 = vmatprep.subr.mxu0 0.0
  %908 = vmatpush1.msra.mxu0 0.0
  %909 = vmatprep.subr.mxu0 0.0
  %910 = vmatpush1.msra.mxu0 0.0
  %911 = vmatprep.subr.mxu0 0.0
  %912 = vmatpush1.msra.mxu0 0.0
  %913 = vmatprep.subr.mxu0 0.0
  %914 = vmatpush1.msra.mxu0 0.0
  %915 = vmatprep.subr.mxu0 0.0
  %916 = vmatpush1.msra.mxu0 0.0
  %917 = vmatprep.subr.mxu0 0.0
  %918 = vmatpush1.msra.mxu0 0.0
  %919 = vmatprep.subr.mxu0 0.0
  %920 = vmatpush1.msra.mxu0 0.0
  %921 = vmatprep.subr.mxu0 0.0
  %922 = vmatpush1.msra.mxu0 0.0
  %923 = vmatprep.subr.mxu0 0.0
  %924 = vmatpush1.msra.mxu0 0.0
  %925 = vmatprep.subr.mxu0 0.0
  %926 = vmatpush1.msra.mxu0 0.0
  %927 = vmatprep.subr.mxu0 0.0
  %928 = vmatpush1.msra.mxu0 0.0
  %929 = vmatprep.subr.mxu0 0.0
  %930 = vmatpush1.msra.mxu0 0.0
  %931 = vmatprep.subr.mxu0 0.0
  %932 = vmatpush1.msra.mxu0 0.0
  %933 = vmatprep.subr.mxu0 0.0
  %934 = vmatpush1.msra.mxu0 0.0
  %935 = vmatprep.subr.mxu0 0.0
  %936 = vmatpush1.msra.mxu0 0.0
  %937 = vmatprep.subr.mxu0 0.0
  %938 = vmatpush1.msra.mxu0 0.0
  %939 = vmatprep.subr.mxu0 0.0
  %940 = vmatpush1.msra.mxu0 0.0
  %941 = vmatprep.subr.mxu0 0.0
  %942 = vmatpush1.msra.mxu0 0.0
  %943 = vmatprep.subr.mxu0 0.0
  %944 = vmatpush1.msra.mxu0 0.0
  %945 = vmatprep.mubr.f32.mxu0 0.0
  %946 = vmatmul.mubr.f32.gmra.mrb[0].mxu0 %v879
  %v947 = vpop.f32.mrb[0].mxu0
  %v948 = vadd.f32 0.0, %v947
  %v949 = vpop.f32.mrb[0].mxu0
  %950 = vdwg.mxu0
  %v951 = vld [vmem:[%s5] sm:$0xff]
  %v952 = vld [vmem:[%s5 + $0x8] sm:$0xff]
  %v953 = vld [vmem:[%s5 + $0x10] sm:$0xff]
  %v954 = vld [vmem:[%s5 + $0x18] sm:$0xff]
  %v955 = vld [vmem:[%s5 + $0x20] sm:$0xff]
  %v956 = vld [vmem:[%s5 + $0x28] sm:$0xff]
  %v957 = vld [vmem:[%s5 + $0x30] sm:$0xff]
  %v958 = vld [vmem:[%s5 + $0x38] sm:$0xff]
  %s959 = scalar_lea.vmem %s4, 4
  %v960 = vld [vmem:[%s959] sm:$0xf]
  %v962 = vsel %vm877, %v960, 0
  %964 = vmatprep.subr.mxu0 0.0
  %965 = vmatpush1.msra.mxu0 %v875
  %966 = vmatprep.subr.mxu0 0.0
  %967 = vmatpush1.msra.mxu0 0.0
  %968 = vmatprep.subr.mxu0 0.0
  %969 = vmatpush1.msra.mxu0 0.0
  %970 = vmatprep.subr.mxu0 0.0
  %971 = vmatpush1.msra.mxu0 0.0
  %972 = vmatprep.subr.mxu0 0.0
  %973 = vmatpush1.msra.mxu0 0.0
  %974 = vmatprep.subr.mxu0 0.0
  %975 = vmatpush1.msra.mxu0 0.0
  %976 = vmatprep.subr.mxu0 0.0
  %977 = vmatpush1.msra.mxu0 0.0
  %978 = vmatprep.subr.mxu0 0.0
  %979 = vmatpush1.msra.mxu0 0.0
  %980 = vmatprep.subr.mxu0 0.0
  %981 = vmatpush1.msra.mxu0 0.0
  %982 = vmatprep.subr.mxu0 0.0
  %983 = vmatpush1.msra.mxu0 0.0
  %984 = vmatprep.subr.mxu0 0.0
  %985 = vmatpush1.msra.mxu0 0.0
  %986 = vmatprep.subr.mxu0 0.0
  %987 = vmatpush1.msra.mxu0 0.0
  %988 = vmatprep.subr.mxu0 0.0
  %989 = vmatpush1.msra.mxu0 0.0
  %990 = vmatprep.subr.mxu0 0.0
  %991 = vmatpush1.msra.mxu0 0.0
  %992 = vmatprep.subr.mxu0 0.0
  %993 = vmatpush1.msra.mxu0 0.0
  %994 = vmatprep.subr.mxu0 0.0
  %995 = vmatpush1.msra.mxu0 0.0
  %996 = vmatprep.subr.mxu0 0.0
  %997 = vmatpush1.msra.mxu0 0.0
  %998 = vmatprep.subr.mxu0 0.0
  %999 = vmatpush1.msra.mxu0 0.0
  %1000 = vmatprep.subr.mxu0 0.0
  %1001 = vmatpush1.msra.mxu0 0.0
  %1002 = vmatprep.subr.mxu0 0.0
  %1003 = vmatpush1.msra.mxu0 0.0
  %1004 = vmatprep.subr.mxu0 0.0
  %1005 = vmatpush1.msra.mxu0 0.0
  %1006 = vmatprep.subr.mxu0 0.0
  %1007 = vmatpush1.msra.mxu0 0.0
  %1008 = vmatprep.subr.mxu0 0.0
  %1009 = vmatpush1.msra.mxu0 0.0
  %1010 = vmatprep.subr.mxu0 0.0
  %1011 = vmatpush1.msra.mxu0 0.0
  %1012 = vmatprep.subr.mxu0 0.0
  %1013 = vmatpush1.msra.mxu0 0.0
  %1014 = vmatprep.subr.mxu0 0.0
  %1015 = vmatpush1.msra.mxu0 0.0
  %1016 = vmatprep.subr.mxu0 0.0
  %1017 = vmatpush1.msra.mxu0 0.0
  %1018 = vmatprep.subr.mxu0 0.0
  %1019 = vmatpush1.msra.mxu0 0.0
  %1020 = vmatprep.subr.mxu0 0.0
  %1021 = vmatpush1.msra.mxu0 0.0
  %1022 = vmatprep.subr.mxu0 0.0
  %1023 = vmatpush1.msra.mxu0 0.0
  %1024 = vmatprep.subr.mxu0 0.0
  %1025 = vmatpush1.msra.mxu0 0.0
  %1026 = vmatprep.subr.mxu0 0.0
  %1027 = vmatpush1.msra.mxu0 0.0
  %1028 = vmatprep.mubr.f32.mxu0 0.0
  %1029 = vmatmul.mubr.f32.gmra.mrb[0].mxu0 %v962
  %v1030 = vpop.f32.mrb[0].mxu0
  %v1031 = vadd.f32 0.0, %v1030
  %v1032 = vpop.f32.mrb[0].mxu0
  %1033 = vdwg.mxu0
  %s1034 = scalar_lea.vmem %s5, 64
  %v1035 = vld [vmem:[%s1034] sm:$0xff]
  %v1036 = vld [vmem:[%s1034 + $0x8] sm:$0xff]
  %v1037 = vld [vmem:[%s1034 + $0x10] sm:$0xff]
  %v1038 = vld [vmem:[%s1034 + $0x18] sm:$0xff]
  %v1039 = vld [vmem:[%s1034 + $0x20] sm:$0xff]
  %v1040 = vld [vmem:[%s1034 + $0x28] sm:$0xff]
  %v1041 = vld [vmem:[%s1034 + $0x30] sm:$0xff]
  %v1042 = vld [vmem:[%s1034 + $0x38] sm:$0xff]
  %vm1043 = vcmask 523264
  %v1045 = vsel %vm1043, %v1031, 0
  %1047 = vmatprep.subr.mxu0 0.0
  %1048 = vmatpush1.msra.mxu0 %v1035
  %1049 = vmatprep.subr.mxu0 0.0
  %1050 = vmatpush1.msra.mxu0 %v1036
  %1051 = vmatprep.subr.mxu0 0.0
  %1052 = vmatpush1.msra.mxu0 %v1037
  %1053 = vmatprep.subr.mxu0 0.0
  %1054 = vmatpush1.msra.mxu0 %v1038
  %1055 = vmatprep.subr.mxu0 0.0
  %1056 = vmatpush1.msra.mxu0 %v1039
  %1057 = vmatprep.subr.mxu0 0.0
  %1058 = vmatpush1.msra.mxu0 %v1040
  %1059 = vmatprep.subr.mxu0 0.0
  %1060 = vmatpush1.msra.mxu0 %v1041
  %1061 = vmatprep.subr.mxu0 0.0
  %1062 = vmatpush1.msra.mxu0 %v1042
  %1063 = vmatprep.subr.mxu0 0.0
  %1064 = vmatpush1.msra.mxu0 0.0
  %1065 = vmatprep.subr.mxu0 0.0
  %1066 = vmatpush1.msra.mxu0 0.0
  %1067 = vmatprep.subr.mxu0 0.0
  %1068 = vmatpush1.msra.mxu0 0.0
  %1069 = vmatprep.subr.mxu0 0.0
  %1070 = vmatpush1.msra.mxu0 0.0
  %1071 = vmatprep.subr.mxu0 0.0
  %1072 = vmatpush1.msra.mxu0 0.0
  %1073 = vmatprep.subr.mxu0 0.0
  %1074 = vmatpush1.msra.mxu0 0.0
  %1075 = vmatprep.subr.mxu0 0.0
  %1076 = vmatpush1.msra.mxu0 0.0
  %1077 = vmatprep.subr.mxu0 0.0
  %1078 = vmatpush1.msra.mxu0 0.0
  %1079 = vmatprep.subr.mxu0 0.0
  %1080 = vmatpush1.msra.mxu0 0.0
  %1081 = vmatprep.subr.mxu0 0.0
  %1082 = vmatpush1.msra.mxu0 0.0
  %1083 = vmatprep.subr.mxu0 0.0
  %1084 = vmatpush1.msra.mxu0 0.0
  %1085 = vmatprep.subr.mxu0 0.0
  %1086 = vmatpush1.msra.mxu0 0.0
  %1087 = vmatprep.subr.mxu0 0.0
  %1088 = vmatpush1.msra.mxu0 0.0
  %1089 = vmatprep.subr.mxu0 0.0
  %1090 = vmatpush1.msra.mxu0 0.0
  %1091 = vmatprep.subr.mxu0 0.0
  %1092 = vmatpush1.msra.mxu0 0.0
  %1093 = vmatprep.subr.mxu0 0.0
  %1094 = vmatpush1.msra.mxu0 0.0
  %1095 = vmatprep.subr.mxu0 0.0
  %1096 = vmatpush1.msra.mxu0 0.0
  %1097 = vmatprep.subr.mxu0 0.0
  %1098 = vmatpush1.msra.mxu0 0.0
  %1099 = vmatprep.subr.mxu0 0.0
  %1100 = vmatpush1.msra.mxu0 0.0
  %1101 = vmatprep.subr.mxu0 0.0
  %1102 = vmatpush1.msra.mxu0 0.0
  %1103 = vmatprep.subr.mxu0 0.0
  %1104 = vmatpush1.msra.mxu0 0.0
  %1105 = vmatprep.subr.mxu0 0.0
  %1106 = vmatpush1.msra.mxu0 0.0
  %1107 = vmatprep.subr.mxu0 0.0
  %1108 = vmatpush1.msra.mxu0 0.0
  %1109 = vmatprep.subr.mxu0 0.0
  %1110 = vmatpush1.msra.mxu0 0.0
  %1111 = vmatprep.mubr.f32.mxu0 0.0
  %1112 = vmatmul.mubr.f32.gmra.mrb[0].mxu0 %v1045
  %v1113 = vpop.f32.mrb[0].mxu0
  %v1114 = vadd.f32 0.0, %v1113
  %v1115 = vpop.f32.mrb[0].mxu0
  %1116 = vdwg.mxu0
  %v1118 = vsel %vm1043, %v948, 0
  %1120 = vmatprep.subr.mxu0 0.0
  %1121 = vmatpush1.msra.mxu0 %v951
  %1122 = vmatprep.subr.mxu0 0.0
  %1123 = vmatpush1.msra.mxu0 %v952
  %1124 = vmatprep.subr.mxu0 0.0
  %1125 = vmatpush1.msra.mxu0 %v953
  %1126 = vmatprep.subr.mxu0 0.0
  %1127 = vmatpush1.msra.mxu0 %v954
  %1128 = vmatprep.subr.mxu0 0.0
  %1129 = vmatpush1.msra.mxu0 %v955
  %1130 = vmatprep.subr.mxu0 0.0
  %1131 = vmatpush1.msra.mxu0 %v956
  %1132 = vmatprep.subr.mxu0 0.0
  %1133 = vmatpush1.msra.mxu0 %v957
  %1134 = vmatprep.subr.mxu0 0.0
  %1135 = vmatpush1.msra.mxu0 %v958
  %1136 = vmatprep.subr.mxu0 0.0
  %1137 = vmatpush1.msra.mxu0 0.0
  %1138 = vmatprep.subr.mxu0 0.0
  %1139 = vmatpush1.msra.mxu0 0.0
  %1140 = vmatprep.subr.mxu0 0.0
  %1141 = vmatpush1.msra.mxu0 0.0
  %1142 = vmatprep.subr.mxu0 0.0
  %1143 = vmatpush1.msra.mxu0 0.0
  %1144 = vmatprep.subr.mxu0 0.0
  %1145 = vmatpush1.msra.mxu0 0.0
  %1146 = vmatprep.subr.mxu0 0.0
  %1147 = vmatpush1.msra.mxu0 0.0
  %1148 = vmatprep.subr.mxu0 0.0
  %1149 = vmatpush1.msra.mxu0 0.0
  %1150 = vmatprep.subr.mxu0 0.0
  %1151 = vmatpush1.msra.mxu0 0.0
  %1152 = vmatprep.subr.mxu0 0.0
  %1153 = vmatpush1.msra.mxu0 0.0
  %1154 = vmatprep.subr.mxu0 0.0
  %1155 = vmatpush1.msra.mxu0 0.0
  %1156 = vmatprep.subr.mxu0 0.0
  %1157 = vmatpush1.msra.mxu0 0.0
  %1158 = vmatprep.subr.mxu0 0.0
  %1159 = vmatpush1.msra.mxu0 0.0
  %1160 = vmatprep.subr.mxu0 0.0
  %1161 = vmatpush1.msra.mxu0 0.0
  %1162 = vmatprep.subr.mxu0 0.0
  %1163 = vmatpush1.msra.mxu0 0.0
  %1164 = vmatprep.subr.mxu0 0.0
  %1165 = vmatpush1.msra.mxu0 0.0
  %1166 = vmatprep.subr.mxu0 0.0
  %1167 = vmatpush1.msra.mxu0 0.0
  %1168 = vmatprep.subr.mxu0 0.0
  %1169 = vmatpush1.msra.mxu0 0.0
  %1170 = vmatprep.subr.mxu0 0.0
  %1171 = vmatpush1.msra.mxu0 0.0
  %1172 = vmatprep.subr.mxu0 0.0
  %1173 = vmatpush1.msra.mxu0 0.0
  %1174 = vmatprep.subr.mxu0 0.0
  %1175 = vmatpush1.msra.mxu0 0.0
  %1176 = vmatprep.subr.mxu0 0.0
  %1177 = vmatpush1.msra.mxu0 0.0
  %1178 = vmatprep.subr.mxu0 0.0
  %1179 = vmatpush1.msra.mxu0 0.0
  %1180 = vmatprep.subr.mxu0 0.0
  %1181 = vmatpush1.msra.mxu0 0.0
  %1182 = vmatprep.subr.mxu0 0.0
  %1183 = vmatpush1.msra.mxu0 0.0
  %1184 = vmatprep.mubr.f32.mxu0 0.0
  %1185 = vmatmul.mubr.f32.gmra.mrb[0].mxu0 %v1118
  %v1186 = vpop.f32.mrb[0].mxu0
  %v1187 = vadd.f32 %v1114, %v1186
  %v1188 = vpop.f32.mrb[0].mxu0
  %1189 = vdwg.mxu0
  %s1190 = scalar_lea.vmem %s4, 8
  %v1191 = vld [vmem:[%s1190] sm:$0xf]
  %v1193 = vsel %vm877, %v1191, 0
  %1195 = vmatprep.subr.mxu0 0.0
  %1196 = vmatpush1.msra.mxu0 %v875
  %1197 = vmatprep.subr.mxu0 0.0
  %1198 = vmatpush1.msra.mxu0 0.0
  %1199 = vmatprep.subr.mxu0 0.0
  %1200 = vmatpush1.msra.mxu0 0.0
  %1201 = vmatprep.subr.mxu0 0.0
  %1202 = vmatpush1.msra.mxu0 0.0
  %1203 = vmatprep.subr.mxu0 0.0
  %1204 = vmatpush1.msra.mxu0 0.0
  %1205 = vmatprep.subr.mxu0 0.0
  %1206 = vmatpush1.msra.mxu0 0.0
  %1207 = vmatprep.subr.mxu0 0.0
  %1208 = vmatpush1.msra.mxu0 0.0
  %1209 = vmatprep.subr.mxu0 0.0
  %1210 = vmatpush1.msra.mxu0 0.0
  %1211 = vmatprep.subr.mxu0 0.0
  %1212 = vmatpush1.msra.mxu0 0.0
  %1213 = vmatprep.subr.mxu0 0.0
  %1214 = vmatpush1.msra.mxu0 0.0
  %1215 = vmatprep.subr.mxu0 0.0
  %1216 = vmatpush1.msra.mxu0 0.0
  %1217 = vmatprep.subr.mxu0 0.0
  %1218 = vmatpush1.msra.mxu0 0.0
  %1219 = vmatprep.subr.mxu0 0.0
  %1220 = vmatpush1.msra.mxu0 0.0
  %1221 = vmatprep.subr.mxu0 0.0
  %1222 = vmatpush1.msra.mxu0 0.0
  %1223 = vmatprep.subr.mxu0 0.0
  %1224 = vmatpush1.msra.mxu0 0.0
  %1225 = vmatprep.subr.mxu0 0.0
  %1226 = vmatpush1.msra.mxu0 0.0
  %1227 = vmatprep.subr.mxu0 0.0
  %1228 = vmatpush1.msra.mxu0 0.0
  %1229 = vmatprep.subr.mxu0 0.0
  %1230 = vmatpush1.msra.mxu0 0.0
  %1231 = vmatprep.subr.mxu0 0.0
  %1232 = vmatpush1.msra.mxu0 0.0
  %1233 = vmatprep.subr.mxu0 0.0
  %1234 = vmatpush1.msra.mxu0 0.0
  %1235 = vmatprep.subr.mxu0 0.0
  %1236 = vmatpush1.msra.mxu0 0.0
  %1237 = vmatprep.subr.mxu0 0.0
  %1238 = vmatpush1.msra.mxu0 0.0
  %1239 = vmatprep.subr.mxu0 0.0
  %1240 = vmatpush1.msra.mxu0 0.0
  %1241 = vmatprep.subr.mxu0 0.0
  %1242 = vmatpush1.msra.mxu0 0.0
  %1243 = vmatprep.subr.mxu0 0.0
  %1244 = vmatpush1.msra.mxu0 0.0
  %1245 = vmatprep.subr.mxu0 0.0
  %1246 = vmatpush1.msra.mxu0 0.0
  %1247 = vmatprep.subr.mxu0 0.0
  %1248 = vmatpush1.msra.mxu0 0.0
  %1249 = vmatprep.subr.mxu0 0.0
  %1250 = vmatpush1.msra.mxu0 0.0
  %1251 = vmatprep.subr.mxu0 0.0
  %1252 = vmatpush1.msra.mxu0 0.0
  %1253 = vmatprep.subr.mxu0 0.0
  %1254 = vmatpush1.msra.mxu0 0.0
  %1255 = vmatprep.subr.mxu0 0.0
  %1256 = vmatpush1.msra.mxu0 0.0
  %1257 = vmatprep.subr.mxu0 0.0
  %1258 = vmatpush1.msra.mxu0 0.0
  %1259 = vmatprep.mubr.f32.mxu0 0.0
  %1260 = vmatmul.mubr.f32.gmra.mrb[0].mxu0 %v1193
  %v1261 = vpop.f32.mrb[0].mxu0
  %v1262 = vadd.f32 0.0, %v1261
  %v1263 = vpop.f32.mrb[0].mxu0
  %1264 = vdwg.mxu0
  %s1265 = scalar_lea.vmem %s5, 128
  %v1266 = vld [vmem:[%s1265] sm:$0xff]
  %v1267 = vld [vmem:[%s1265 + $0x8] sm:$0xff]
  %v1268 = vld [vmem:[%s1265 + $0x10] sm:$0xff]
  %v1269 = vld [vmem:[%s1265 + $0x18] sm:$0xff]
  %v1270 = vld [vmem:[%s1265 + $0x20] sm:$0xff]
  %v1271 = vld [vmem:[%s1265 + $0x28] sm:$0xff]
  %v1272 = vld [vmem:[%s1265 + $0x30] sm:$0xff]
  %v1273 = vld [vmem:[%s1265 + $0x38] sm:$0xff]
  %v1275 = vsel %vm1043, %v1262, 0
  %1277 = vmatprep.subr.mxu0 0.0
  %1278 = vmatpush1.msra.mxu0 %v1266
  %1279 = vmatprep.subr.mxu0 0.0
  %1280 = vmatpush1.msra.mxu0 %v1267
  %1281 = vmatprep.subr.mxu0 0.0
  %1282 = vmatpush1.msra.mxu0 %v1268
  %1283 = vmatprep.subr.mxu0 0.0
  %1284 = vmatpush1.msra.mxu0 %v1269
  %1285 = vmatprep.subr.mxu0 0.0
  %1286 = vmatpush1.msra.mxu0 %v1270
  %1287 = vmatprep.subr.mxu0 0.0
  %1288 = vmatpush1.msra.mxu0 %v1271
  %1289 = vmatprep.subr.mxu0 0.0
  %1290 = vmatpush1.msra.mxu0 %v1272
  %1291 = vmatprep.subr.mxu0 0.0
  %1292 = vmatpush1.msra.mxu0 %v1273
  %1293 = vmatprep.subr.mxu0 0.0
  %1294 = vmatpush1.msra.mxu0 0.0
  %1295 = vmatprep.subr.mxu0 0.0
  %1296 = vmatpush1.msra.mxu0 0.0
  %1297 = vmatprep.subr.mxu0 0.0
  %1298 = vmatpush1.msra.mxu0 0.0
  %1299 = vmatprep.subr.mxu0 0.0
  %1300 = vmatpush1.msra.mxu0 0.0
  %1301 = vmatprep.subr.mxu0 0.0
  %1302 = vmatpush1.msra.mxu0 0.0
  %1303 = vmatprep.subr.mxu0 0.0
  %1304 = vmatpush1.msra.mxu0 0.0
  %1305 = vmatprep.subr.mxu0 0.0
  %1306 = vmatpush1.msra.mxu0 0.0
  %1307 = vmatprep.subr.mxu0 0.0
  %1308 = vmatpush1.msra.mxu0 0.0
  %1309 = vmatprep.subr.mxu0 0.0
  %1310 = vmatpush1.msra.mxu0 0.0
  %1311 = vmatprep.subr.mxu0 0.0
  %1312 = vmatpush1.msra.mxu0 0.0
  %1313 = vmatprep.subr.mxu0 0.0
  %1314 = vmatpush1.msra.mxu0 0.0
  %1315 = vmatprep.subr.mxu0 0.0
  %1316 = vmatpush1.msra.mxu0 0.0
  %1317 = vmatprep.subr.mxu0 0.0
  %1318 = vmatpush1.msra.mxu0 0.0
  %1319 = vmatprep.subr.mxu0 0.0
  %1320 = vmatpush1.msra.mxu0 0.0
  %1321 = vmatprep.subr.mxu0 0.0
  %1322 = vmatpush1.msra.mxu0 0.0
  %1323 = vmatprep.subr.mxu0 0.0
  %1324 = vmatpush1.msra.mxu0 0.0
  %1325 = vmatprep.subr.mxu0 0.0
  %1326 = vmatpush1.msra.mxu0 0.0
  %1327 = vmatprep.subr.mxu0 0.0
  %1328 = vmatpush1.msra.mxu0 0.0
  %1329 = vmatprep.subr.mxu0 0.0
  %1330 = vmatpush1.msra.mxu0 0.0
  %1331 = vmatprep.subr.mxu0 0.0
  %1332 = vmatpush1.msra.mxu0 0.0
  %1333 = vmatprep.subr.mxu0 0.0
  %1334 = vmatpush1.msra.mxu0 0.0
  %1335 = vmatprep.subr.mxu0 0.0
  %1336 = vmatpush1.msra.mxu0 0.0
  %1337 = vmatprep.subr.mxu0 0.0
  %1338 = vmatpush1.msra.mxu0 0.0
  %1339 = vmatprep.subr.mxu0 0.0
  %1340 = vmatpush1.msra.mxu0 0.0
  %1341 = vmatprep.mubr.f32.mxu0 0.0
  %1342 = vmatmul.mubr.f32.gmra.mrb[0].mxu0 %v1275
  %v1343 = vpop.f32.mrb[0].mxu0
  %v1344 = vadd.f32 0.0, %v1343
  %v1345 = vpop.f32.mrb[0].mxu0
  %1346 = vdwg.mxu0
  %v1347 = vadd.f32 %v1187, %v1344
  %s1348 = scalar_lea.vmem %s4, 12
  %v1349 = vld [vmem:[%s1348] sm:$0xf]
  %v1351 = vsel %vm877, %v1349, 0
  %1353 = vmatprep.subr.mxu0 0.0
  %1354 = vmatpush1.msra.mxu0 %v875
  %1355 = vmatprep.subr.mxu0 0.0
  %1356 = vmatpush1.msra.mxu0 0.0
  %1357 = vmatprep.subr.mxu0 0.0
  %1358 = vmatpush1.msra.mxu0 0.0
  %1359 = vmatprep.subr.mxu0 0.0
  %1360 = vmatpush1.msra.mxu0 0.0
  %1361 = vmatprep.subr.mxu0 0.0
  %1362 = vmatpush1.msra.mxu0 0.0
  %1363 = vmatprep.subr.mxu0 0.0
  %1364 = vmatpush1.msra.mxu0 0.0
  %1365 = vmatprep.subr.mxu0 0.0
  %1366 = vmatpush1.msra.mxu0 0.0
  %1367 = vmatprep.subr.mxu0 0.0
  %1368 = vmatpush1.msra.mxu0 0.0
  %1369 = vmatprep.subr.mxu0 0.0
  %1370 = vmatpush1.msra.mxu0 0.0
  %1371 = vmatprep.subr.mxu0 0.0
  %1372 = vmatpush1.msra.mxu0 0.0
  %1373 = vmatprep.subr.mxu0 0.0
  %1374 = vmatpush1.msra.mxu0 0.0
  %1375 = vmatprep.subr.mxu0 0.0
  %1376 = vmatpush1.msra.mxu0 0.0
  %1377 = vmatprep.subr.mxu0 0.0
  %1378 = vmatpush1.msra.mxu0 0.0
  %1379 = vmatprep.subr.mxu0 0.0
  %1380 = vmatpush1.msra.mxu0 0.0
  %1381 = vmatprep.subr.mxu0 0.0
  %1382 = vmatpush1.msra.mxu0 0.0
  %1383 = vmatprep.subr.mxu0 0.0
  %1384 = vmatpush1.msra.mxu0 0.0
  %1385 = vmatprep.subr.mxu0 0.0
  %1386 = vmatpush1.msra.mxu0 0.0
  %1387 = vmatprep.subr.mxu0 0.0
  %1388 = vmatpush1.msra.mxu0 0.0
  %1389 = vmatprep.subr.mxu0 0.0
  %1390 = vmatpush1.msra.mxu0 0.0
  %1391 = vmatprep.subr.mxu0 0.0
  %1392 = vmatpush1.msra.mxu0 0.0
  %1393 = vmatprep.subr.mxu0 0.0
  %1394 = vmatpush1.msra.mxu0 0.0
  %1395 = vmatprep.subr.mxu0 0.0
  %1396 = vmatpush1.msra.mxu0 0.0
  %1397 = vmatprep.subr.mxu0 0.0
  %1398 = vmatpush1.msra.mxu0 0.0
  %1399 = vmatprep.subr.mxu0 0.0
  %1400 = vmatpush1.msra.mxu0 0.0
  %1401 = vmatprep.subr.mxu0 0.0
  %1402 = vmatpush1.msra.mxu0 0.0
  %1403 = vmatprep.subr.mxu0 0.0
  %1404 = vmatpush1.msra.mxu0 0.0
  %1405 = vmatprep.subr.mxu0 0.0
  %1406 = vmatpush1.msra.mxu0 0.0
  %1407 = vmatprep.subr.mxu0 0.0
  %1408 = vmatpush1.msra.mxu0 0.0
  %1409 = vmatprep.subr.mxu0 0.0
  %1410 = vmatpush1.msra.mxu0 0.0
  %1411 = vmatprep.subr.mxu0 0.0
  %1412 = vmatpush1.msra.mxu0 0.0
  %1413 = vmatprep.subr.mxu0 0.0
  %1414 = vmatpush1.msra.mxu0 0.0
  %1415 = vmatprep.subr.mxu0 0.0
  %1416 = vmatpush1.msra.mxu0 0.0
  %1417 = vmatprep.mubr.f32.mxu0 0.0
  %1418 = vmatmul.mubr.f32.gmra.mrb[0].mxu0 %v1351
  %v1419 = vpop.f32.mrb[0].mxu0
  %v1420 = vadd.f32 0.0, %v1419
  %v1421 = vpop.f32.mrb[0].mxu0
  %1422 = vdwg.mxu0
  %s1423 = scalar_lea.vmem %s5, 192
  %v1424 = vld [vmem:[%s1423] sm:$0xff]
  %v1425 = vld [vmem:[%s1423 + $0x8] sm:$0xff]
  %v1426 = vld [vmem:[%s1423 + $0x10] sm:$0xff]
  %v1427 = vld [vmem:[%s1423 + $0x18] sm:$0xff]
  %v1428 = vld [vmem:[%s1423 + $0x20] sm:$0xff]
  %v1429 = vld [vmem:[%s1423 + $0x28] sm:$0xff]
  %v1430 = vld [vmem:[%s1423 + $0x30] sm:$0xff]
  %v1431 = vld [vmem:[%s1423 + $0x38] sm:$0xff]
  %v1433 = vsel %vm1043, %v1420, 0
  %1435 = vmatprep.subr.mxu0 0.0
  %1436 = vmatpush1.msra.mxu0 %v1424
  %1437 = vmatprep.subr.mxu0 0.0
  %1438 = vmatpush1.msra.mxu0 %v1425
  %1439 = vmatprep.subr.mxu0 0.0
  %1440 = vmatpush1.msra.mxu0 %v1426
  %1441 = vmatprep.subr.mxu0 0.0
  %1442 = vmatpush1.msra.mxu0 %v1427
  %1443 = vmatprep.subr.mxu0 0.0
  %1444 = vmatpush1.msra.mxu0 %v1428
  %1445 = vmatprep.subr.mxu0 0.0
  %1446 = vmatpush1.msra.mxu0 %v1429
  %1447 = vmatprep.subr.mxu0 0.0
  %1448 = vmatpush1.msra.mxu0 %v1430
  %1449 = vmatprep.subr.mxu0 0.0
  %1450 = vmatpush1.msra.mxu0 %v1431
  %1451 = vmatprep.subr.mxu0 0.0
  %1452 = vmatpush1.msra.mxu0 0.0
  %1453 = vmatprep.subr.mxu0 0.0
  %1454 = vmatpush1.msra.mxu0 0.0
  %1455 = vmatprep.subr.mxu0 0.0
  %1456 = vmatpush1.msra.mxu0 0.0
  %1457 = vmatprep.subr.mxu0 0.0
  %1458 = vmatpush1.msra.mxu0 0.0
  %1459 = vmatprep.subr.mxu0 0.0
  %1460 = vmatpush1.msra.mxu0 0.0
  %1461 = vmatprep.subr.mxu0 0.0
  %1462 = vmatpush1.msra.mxu0 0.0
  %1463 = vmatprep.subr.mxu0 0.0
  %1464 = vmatpush1.msra.mxu0 0.0
  %1465 = vmatprep.subr.mxu0 0.0
  %1466 = vmatpush1.msra.mxu0 0.0
  %1467 = vmatprep.subr.mxu0 0.0
  %1468 = vmatpush1.msra.mxu0 0.0
  %1469 = vmatprep.subr.mxu0 0.0
  %1470 = vmatpush1.msra.mxu0 0.0
  %1471 = vmatprep.subr.mxu0 0.0
  %1472 = vmatpush1.msra.mxu0 0.0
  %1473 = vmatprep.subr.mxu0 0.0
  %1474 = vmatpush1.msra.mxu0 0.0
  %1475 = vmatprep.subr.mxu0 0.0
  %1476 = vmatpush1.msra.mxu0 0.0
  %1477 = vmatprep.subr.mxu0 0.0
  %1478 = vmatpush1.msra.mxu0 0.0
  %1479 = vmatprep.subr.mxu0 0.0
  %1480 = vmatpush1.msra.mxu0 0.0
  %1481 = vmatprep.subr.mxu0 0.0
  %1482 = vmatpush1.msra.mxu0 0.0
  %1483 = vmatprep.subr.mxu0 0.0
  %1484 = vmatpush1.msra.mxu0 0.0
  %1485 = vmatprep.subr.mxu0 0.0
  %1486 = vmatpush1.msra.mxu0 0.0
  %1487 = vmatprep.subr.mxu0 0.0
  %1488 = vmatpush1.msra.mxu0 0.0
  %1489 = vmatprep.subr.mxu0 0.0
  %1490 = vmatpush1.msra.mxu0 0.0
  %1491 = vmatprep.subr.mxu0 0.0
  %1492 = vmatpush1.msra.mxu0 0.0
  %1493 = vmatprep.subr.mxu0 0.0
  %1494 = vmatpush1.msra.mxu0 0.0
  %1495 = vmatprep.subr.mxu0 0.0
  %1496 = vmatpush1.msra.mxu0 0.0
  %1497 = vmatprep.subr.mxu0 0.0
  %1498 = vmatpush1.msra.mxu0 0.0
  %1499 = vmatprep.mubr.f32.mxu0 0.0
  %1500 = vmatmul.mubr.f32.gmra.mrb[0].mxu0 %v1433
  %v1501 = vpop.f32.mrb[0].mxu0
  %v1502 = vadd.f32 0.0, %v1501
  %v1503 = vpop.f32.mrb[0].mxu0
  %1504 = vdwg.mxu0
  %v1505 = vadd.f32 %v1347, %v1502
  %s1506 = scalar_lea.vmem %s4, 16
  %v1507 = vld [vmem:[%s1506] sm:$0xf]
  %v1509 = vsel %vm877, %v1507, 0
  %1511 = vmatprep.subr.mxu0 0.0
  %1512 = vmatpush1.msra.mxu0 %v875
  %1513 = vmatprep.subr.mxu0 0.0
  %1514 = vmatpush1.msra.mxu0 0.0
  %1515 = vmatprep.subr.mxu0 0.0
  %1516 = vmatpush1.msra.mxu0 0.0
  %1517 = vmatprep.subr.mxu0 0.0
  %1518 = vmatpush1.msra.mxu0 0.0
  %1519 = vmatprep.subr.mxu0 0.0
  %1520 = vmatpush1.msra.mxu0 0.0
  %1521 = vmatprep.subr.mxu0 0.0
  %1522 = vmatpush1.msra.mxu0 0.0
  %1523 = vmatprep.subr.mxu0 0.0
  %1524 = vmatpush1.msra.mxu0 0.0
  %1525 = vmatprep.subr.mxu0 0.0
  %1526 = vmatpush1.msra.mxu0 0.0
  %1527 = vmatprep.subr.mxu0 0.0
  %1528 = vmatpush1.msra.mxu0 0.0
  %1529 = vmatprep.subr.mxu0 0.0
  %1530 = vmatpush1.msra.mxu0 0.0
  %1531 = vmatprep.subr.mxu0 0.0
  %1532 = vmatpush1.msra.mxu0 0.0
  %1533 = vmatprep.subr.mxu0 0.0
  %1534 = vmatpush1.msra.mxu0 0.0
  %1535 = vmatprep.subr.mxu0 0.0
  %1536 = vmatpush1.msra.mxu0 0.0
  %1537 = vmatprep.subr.mxu0 0.0
  %1538 = vmatpush1.msra.mxu0 0.0
  %1539 = vmatprep.subr.mxu0 0.0
  %1540 = vmatpush1.msra.mxu0 0.0
  %1541 = vmatprep.subr.mxu0 0.0
  %1542 = vmatpush1.msra.mxu0 0.0
  %1543 = vmatprep.subr.mxu0 0.0
  %1544 = vmatpush1.msra.mxu0 0.0
  %1545 = vmatprep.subr.mxu0 0.0
  %1546 = vmatpush1.msra.mxu0 0.0
  %1547 = vmatprep.subr.mxu0 0.0
  %1548 = vmatpush1.msra.mxu0 0.0
  %1549 = vmatprep.subr.mxu0 0.0
  %1550 = vmatpush1.msra.mxu0 0.0
  %1551 = vmatprep.subr.mxu0 0.0
  %1552 = vmatpush1.msra.mxu0 0.0
  %1553 = vmatprep.subr.mxu0 0.0
  %1554 = vmatpush1.msra.mxu0 0.0
  %1555 = vmatprep.subr.mxu0 0.0
  %1556 = vmatpush1.msra.mxu0 0.0
  %1557 = vmatprep.subr.mxu0 0.0
  %1558 = vmatpush1.msra.mxu0 0.0
  %1559 = vmatprep.subr.mxu0 0.0
  %1560 = vmatpush1.msra.mxu0 0.0
  %1561 = vmatprep.subr.mxu0 0.0
  %1562 = vmatpush1.msra.mxu0 0.0
  %1563 = vmatprep.subr.mxu0 0.0
  %1564 = vmatpush1.msra.mxu0 0.0
  %1565 = vmatprep.subr.mxu0 0.0
  %1566 = vmatpush1.msra.mxu0 0.0
  %1567 = vmatprep.subr.mxu0 0.0
  %1568 = vmatpush1.msra.mxu0 0.0
  %1569 = vmatprep.subr.mxu0 0.0
  %1570 = vmatpush1.msra.mxu0 0.0
  %1571 = vmatprep.subr.mxu0 0.0
  %1572 = vmatpush1.msra.mxu0 0.0
  %1573 = vmatprep.subr.mxu0 0.0
  %1574 = vmatpush1.msra.mxu0 0.0
  %1575 = vmatprep.mubr.f32.mxu0 0.0
  %1576 = vmatmul.mubr.f32.gmra.mrb[0].mxu0 %v1509
  %v1577 = vpop.f32.mrb[0].mxu0
  %v1578 = vadd.f32 0.0, %v1577
  %v1579 = vpop.f32.mrb[0].mxu0
  %1580 = vdwg.mxu0
  %s1581 = scalar_lea.vmem %s5, 256
  %v1582 = vld [vmem:[%s1581] sm:$0xff]
  %v1583 = vld [vmem:[%s1581 + $0x8] sm:$0xff]
  %v1584 = vld [vmem:[%s1581 + $0x10] sm:$0xff]
  %v1585 = vld [vmem:[%s1581 + $0x18] sm:$0xff]
  %v1586 = vld [vmem:[%s1581 + $0x20] sm:$0xff]
  %v1587 = vld [vmem:[%s1581 + $0x28] sm:$0xff]
  %v1588 = vld [vmem:[%s1581 + $0x30] sm:$0xff]
  %v1589 = vld [vmem:[%s1581 + $0x38] sm:$0xff]
  %v1591 = vsel %vm1043, %v1578, 0
  %1593 = vmatprep.subr.mxu0 0.0
  %1594 = vmatpush1.msra.mxu0 %v1582
  %1595 = vmatprep.subr.mxu0 0.0
  %1596 = vmatpush1.msra.mxu0 %v1583
  %1597 = vmatprep.subr.mxu0 0.0
  %1598 = vmatpush1.msra.mxu0 %v1584
  %1599 = vmatprep.subr.mxu0 0.0
  %1600 = vmatpush1.msra.mxu0 %v1585
  %1601 = vmatprep.subr.mxu0 0.0
  %1602 = vmatpush1.msra.mxu0 %v1586
  %1603 = vmatprep.subr.mxu0 0.0
  %1604 = vmatpush1.msra.mxu0 %v1587
  %1605 = vmatprep.subr.mxu0 0.0
  %1606 = vmatpush1.msra.mxu0 %v1588
  %1607 = vmatprep.subr.mxu0 0.0
  %1608 = vmatpush1.msra.mxu0 %v1589
  %1609 = vmatprep.subr.mxu0 0.0
  %1610 = vmatpush1.msra.mxu0 0.0
  %1611 = vmatprep.subr.mxu0 0.0
  %1612 = vmatpush1.msra.mxu0 0.0
  %1613 = vmatprep.subr.mxu0 0.0
  %1614 = vmatpush1.msra.mxu0 0.0
  %1615 = vmatprep.subr.mxu0 0.0
  %1616 = vmatpush1.msra.mxu0 0.0
  %1617 = vmatprep.subr.mxu0 0.0
  %1618 = vmatpush1.msra.mxu0 0.0
  %1619 = vmatprep.subr.mxu0 0.0
  %1620 = vmatpush1.msra.mxu0 0.0
  %1621 = vmatprep.subr.mxu0 0.0
  %1622 = vmatpush1.msra.mxu0 0.0
  %1623 = vmatprep.subr.mxu0 0.0
  %1624 = vmatpush1.msra.mxu0 0.0
  %1625 = vmatprep.subr.mxu0 0.0
  %1626 = vmatpush1.msra.mxu0 0.0
  %1627 = vmatprep.subr.mxu0 0.0
  %1628 = vmatpush1.msra.mxu0 0.0
  %1629 = vmatprep.subr.mxu0 0.0
  %1630 = vmatpush1.msra.mxu0 0.0
  %1631 = vmatprep.subr.mxu0 0.0
  %1632 = vmatpush1.msra.mxu0 0.0
  %1633 = vmatprep.subr.mxu0 0.0
  %1634 = vmatpush1.msra.mxu0 0.0
  %1635 = vmatprep.subr.mxu0 0.0
  %1636 = vmatpush1.msra.mxu0 0.0
  %1637 = vmatprep.subr.mxu0 0.0
  %1638 = vmatpush1.msra.mxu0 0.0
  %1639 = vmatprep.subr.mxu0 0.0
  %1640 = vmatpush1.msra.mxu0 0.0
  %1641 = vmatprep.subr.mxu0 0.0
  %1642 = vmatpush1.msra.mxu0 0.0
  %1643 = vmatprep.subr.mxu0 0.0
  %1644 = vmatpush1.msra.mxu0 0.0
  %1645 = vmatprep.subr.mxu0 0.0
  %1646 = vmatpush1.msra.mxu0 0.0
  %1647 = vmatprep.subr.mxu0 0.0
  %1648 = vmatpush1.msra.mxu0 0.0
  %1649 = vmatprep.subr.mxu0 0.0
  %1650 = vmatpush1.msra.mxu0 0.0
  %1651 = vmatprep.subr.mxu0 0.0
  %1652 = vmatpush1.msra.mxu0 0.0
  %1653 = vmatprep.subr.mxu0 0.0
  %1654 = vmatpush1.msra.mxu0 0.0
  %1655 = vmatprep.subr.mxu0 0.0
  %1656 = vmatpush1.msra.mxu0 0.0
  %1657 = vmatprep.mubr.f32.mxu0 0.0
  %1658 = vmatmul.mubr.f32.gmra.mrb[0].mxu0 %v1591
  %v1659 = vpop.f32.mrb[0].mxu0
  %v1660 = vadd.f32 0.0, %v1659
  %v1661 = vpop.f32.mrb[0].mxu0
  %1662 = vdwg.mxu0
  %v1663 = vadd.f32 %v1505, %v1660
  %v1664 = vld [vmem:[%s6] sm:$0x1]
  %v1666 = vlaneseq
  %v1667 = vshrl.u32 %v1666, 7
  %v1668 = vsub.s32 0, %v1667
  %v1669 = vrot.slane %v1664, %v1668
  %v1671 = vadd.f32 %v1663, %v1669
  %vm1672 = vcmp.ge.f32.partialorder %v1671, 0.0
  %v1673 = vmul.f32 %v1671, 0.2
  %v1674 = vsel %vm1672, %v1671, %v1673
  %v1675 = vld [vmem:[%s7] sm:$0xff]
  %vm1676 = vcmask 31744
  %v1678 = vsel %vm1676, %v1675, 0
  %vm1680 = vcmask 1043456
  %v1682 = vsel %vm1680, %v1674, 0
  %1684 = vmatprep.subr.mxu0 0.0
  %1685 = vmatpush1.msra.mxu0 %v1682
  %1686 = vmatprep.subr.mxu0 0.0
  %1687 = vmatpush1.msra.mxu0 0.0
  %1688 = vmatprep.subr.mxu0 0.0
  %1689 = vmatpush1.msra.mxu0 0.0
  %1690 = vmatprep.subr.mxu0 0.0
  %1691 = vmatpush1.msra.mxu0 0.0
  %1692 = vmatprep.subr.mxu0 0.0
  %1693 = vmatpush1.msra.mxu0 0.0
  %1694 = vmatprep.subr.mxu0 0.0
  %1695 = vmatpush1.msra.mxu0 0.0
  %1696 = vmatprep.subr.mxu0 0.0
  %1697 = vmatpush1.msra.mxu0 0.0
  %1698 = vmatprep.subr.mxu0 0.0
  %1699 = vmatpush1.msra.mxu0 0.0
  %1700 = vmatprep.subr.mxu0 0.0
  %1701 = vmatpush1.msra.mxu0 0.0
  %1702 = vmatprep.subr.mxu0 0.0
  %1703 = vmatpush1.msra.mxu0 0.0
  %1704 = vmatprep.subr.mxu0 0.0
  %1705 = vmatpush1.msra.mxu0 0.0
  %1706 = vmatprep.subr.mxu0 0.0
  %1707 = vmatpush1.msra.mxu0 0.0
  %1708 = vmatprep.subr.mxu0 0.0
  %1709 = vmatpush1.msra.mxu0 0.0
  %1710 = vmatprep.subr.mxu0 0.0
  %1711 = vmatpush1.msra.mxu0 0.0
  %1712 = vmatprep.subr.mxu0 0.0
  %1713 = vmatpush1.msra.mxu0 0.0
  %1714 = vmatprep.subr.mxu0 0.0
  %1715 = vmatpush1.msra.mxu0 0.0
  %1716 = vmatprep.subr.mxu0 0.0
  %1717 = vmatpush1.msra.mxu0 0.0
  %1718 = vmatprep.subr.mxu0 0.0
  %1719 = vmatpush1.msra.mxu0 0.0
  %1720 = vmatprep.subr.mxu0 0.0
  %1721 = vmatpush1.msra.mxu0 0.0
  %1722 = vmatprep.subr.mxu0 0.0
  %1723 = vmatpush1.msra.mxu0 0.0
  %1724 = vmatprep.subr.mxu0 0.0
  %1725 = vmatpush1.msra.mxu0 0.0
  %1726 = vmatprep.subr.mxu0 0.0
  %1727 = vmatpush1.msra.mxu0 0.0
  %1728 = vmatprep.subr.mxu0 0.0
  %1729 = vmatpush1.msra.mxu0 0.0
  %1730 = vmatprep.subr.mxu0 0.0
  %1731 = vmatpush1.msra.mxu0 0.0
  %1732 = vmatprep.subr.mxu0 0.0
  %1733 = vmatpush1.msra.mxu0 0.0
  %1734 = vmatprep.subr.mxu0 0.0
  %1735 = vmatpush1.msra.mxu0 0.0
  %1736 = vmatprep.subr.mxu0 0.0
  %1737 = vmatpush1.msra.mxu0 0.0
  %1738 = vmatprep.subr.mxu0 0.0
  %1739 = vmatpush1.msra.mxu0 0.0
  %1740 = vmatprep.subr.mxu0 0.0
  %1741 = vmatpush1.msra.mxu0 0.0
  %1742 = vmatprep.subr.mxu0 0.0
  %1743 = vmatpush1.msra.mxu0 0.0
  %1744 = vmatprep.subr.mxu0 0.0
  %1745 = vmatpush1.msra.mxu0 0.0
  %1746 = vmatprep.subr.mxu0 0.0
  %1747 = vmatpush1.msra.mxu0 0.0
  %1748 = vmatprep.mubr.f32.mxu0 0.0
  %1749 = vmatmul.mubr.f32.gmra.mrb[0].mxu0 %v1678
  %v1750 = vpop.f32.mrb[0].mxu0
  %v1751 = vadd.f32 0.0, %v1750
  %v1752 = vpop.f32.mrb[0].mxu0
  %1753 = vdwg.mxu0
  %v1754 = vld [vmem:[%s8] sm:$0xff]
  %v1755 = vld [vmem:[%s8 + $0x8] sm:$0xff]
  %v1756 = vld [vmem:[%s8 + $0x10] sm:$0xff]
  %v1757 = vld [vmem:[%s8 + $0x18] sm:$0xff]
  %v1758 = vld [vmem:[%s8 + $0x20] sm:$0xff]
  %v1759 = vld [vmem:[%s8 + $0x28] sm:$0xff]
  %v1760 = vld [vmem:[%s8 + $0x30] sm:$0xff]
  %v1761 = vld [vmem:[%s8 + $0x38] sm:$0xff]
  %v1762 = vld [vmem:[%s8 + $0x40] sm:$0xff]
  %v1763 = vld [vmem:[%s8 + $0x48] sm:$0xff]
  %v1764 = vld [vmem:[%s8 + $0x50] sm:$0xff]
  %v1765 = vld [vmem:[%s8 + $0x58] sm:$0xff]
  %v1766 = vld [vmem:[%s8 + $0x60] sm:$0xff]
  %v1767 = vld [vmem:[%s8 + $0x68] sm:$0xff]
  %v1768 = vld [vmem:[%s8 + $0x70] sm:$0xff]
  %v1769 = vld [vmem:[%s8 + $0x78] sm:$0xff]
  %s1770 = scalar_lea.vmem %s7, 8
  %v1771 = vld [vmem:[%s1770] sm:$0xff]
  %v1773 = vsel %vm1676, %v1771, 0
  %1775 = vmatprep.subr.mxu0 0.0
  %1776 = vmatpush1.msra.mxu0 %v1682
  %1777 = vmatprep.subr.mxu0 0.0
  %1778 = vmatpush1.msra.mxu0 0.0
  %1779 = vmatprep.subr.mxu0 0.0
  %1780 = vmatpush1.msra.mxu0 0.0
  %1781 = vmatprep.subr.mxu0 0.0
  %1782 = vmatpush1.msra.mxu0 0.0
  %1783 = vmatprep.subr.mxu0 0.0
  %1784 = vmatpush1.msra.mxu0 0.0
  %1785 = vmatprep.subr.mxu0 0.0
  %1786 = vmatpush1.msra.mxu0 0.0
  %1787 = vmatprep.subr.mxu0 0.0
  %1788 = vmatpush1.msra.mxu0 0.0
  %1789 = vmatprep.subr.mxu0 0.0
  %1790 = vmatpush1.msra.mxu0 0.0
  %1791 = vmatprep.subr.mxu0 0.0
  %1792 = vmatpush1.msra.mxu0 0.0
  %1793 = vmatprep.subr.mxu0 0.0
  %1794 = vmatpush1.msra.mxu0 0.0
  %1795 = vmatprep.subr.mxu0 0.0
  %1796 = vmatpush1.msra.mxu0 0.0
  %1797 = vmatprep.subr.mxu0 0.0
  %1798 = vmatpush1.msra.mxu0 0.0
  %1799 = vmatprep.subr.mxu0 0.0
  %1800 = vmatpush1.msra.mxu0 0.0
  %1801 = vmatprep.subr.mxu0 0.0
  %1802 = vmatpush1.msra.mxu0 0.0
  %1803 = vmatprep.subr.mxu0 0.0
  %1804 = vmatpush1.msra.mxu0 0.0
  %1805 = vmatprep.subr.mxu0 0.0
  %1806 = vmatpush1.msra.mxu0 0.0
  %1807 = vmatprep.subr.mxu0 0.0
  %1808 = vmatpush1.msra.mxu0 0.0
  %1809 = vmatprep.subr.mxu0 0.0
  %1810 = vmatpush1.msra.mxu0 0.0
  %1811 = vmatprep.subr.mxu0 0.0
  %1812 = vmatpush1.msra.mxu0 0.0
  %1813 = vmatprep.subr.mxu0 0.0
  %1814 = vmatpush1.msra.mxu0 0.0
  %1815 = vmatprep.subr.mxu0 0.0
  %1816 = vmatpush1.msra.mxu0 0.0
  %1817 = vmatprep.subr.mxu0 0.0
  %1818 = vmatpush1.msra.mxu0 0.0
  %1819 = vmatprep.subr.mxu0 0.0
  %1820 = vmatpush1.msra.mxu0 0.0
  %1821 = vmatprep.subr.mxu0 0.0
  %1822 = vmatpush1.msra.mxu0 0.0
  %1823 = vmatprep.subr.mxu0 0.0
  %1824 = vmatpush1.msra.mxu0 0.0
  %1825 = vmatprep.subr.mxu0 0.0
  %1826 = vmatpush1.msra.mxu0 0.0
  %1827 = vmatprep.subr.mxu0 0.0
  %1828 = vmatpush1.msra.mxu0 0.0
  %1829 = vmatprep.subr.mxu0 0.0
  %1830 = vmatpush1.msra.mxu0 0.0
  %1831 = vmatprep.subr.mxu0 0.0
  %1832 = vmatpush1.msra.mxu0 0.0
  %1833 = vmatprep.subr.mxu0 0.0
  %1834 = vmatpush1.msra.mxu0 0.0
  %1835 = vmatprep.subr.mxu0 0.0
  %1836 = vmatpush1.msra.mxu0 0.0
  %1837 = vmatprep.subr.mxu0 0.0
  %1838 = vmatpush1.msra.mxu0 0.0
  %1839 = vmatprep.mubr.f32.mxu0 0.0
  %1840 = vmatmul.mubr.f32.gmra.mrb[0].mxu0 %v1773
  %v1841 = vpop.f32.mrb[0].mxu0
  %v1842 = vadd.f32 0.0, %v1841
  %v1843 = vpop.f32.mrb[0].mxu0
  %1844 = vdwg.mxu0
  %s1845 = scalar_lea.vmem %s8, 128
  %v1846 = vld [vmem:[%s1845] sm:$0xff]
  %v1847 = vld [vmem:[%s1845 + $0x8] sm:$0xff]
  %v1848 = vld [vmem:[%s1845 + $0x10] sm:$0xff]
  %v1849 = vld [vmem:[%s1845 + $0x18] sm:$0xff]
  %v1850 = vld [vmem:[%s1845 + $0x20] sm:$0xff]
  %v1851 = vld [vmem:[%s1845 + $0x28] sm:$0xff]
  %v1852 = vld [vmem:[%s1845 + $0x30] sm:$0xff]
  %v1853 = vld [vmem:[%s1845 + $0x38] sm:$0xff]
  %v1854 = vld [vmem:[%s1845 + $0x40] sm:$0xff]
  %v1855 = vld [vmem:[%s1845 + $0x48] sm:$0xff]
  %v1856 = vld [vmem:[%s1845 + $0x50] sm:$0xff]
  %v1857 = vld [vmem:[%s1845 + $0x58] sm:$0xff]
  %v1858 = vld [vmem:[%s1845 + $0x60] sm:$0xff]
  %v1859 = vld [vmem:[%s1845 + $0x68] sm:$0xff]
  %v1860 = vld [vmem:[%s1845 + $0x70] sm:$0xff]
  %v1861 = vld [vmem:[%s1845 + $0x78] sm:$0xff]
  %1862 = vmatprep.subr.mxu0 0.0
  %1863 = vmatpush1.msra.mxu0 %v1846
  %1864 = vmatprep.subr.mxu0 0.0
  %1865 = vmatpush1.msra.mxu0 %v1847
  %1866 = vmatprep.subr.mxu0 0.0
  %1867 = vmatpush1.msra.mxu0 %v1848
  %1868 = vmatprep.subr.mxu0 0.0
  %1869 = vmatpush1.msra.mxu0 %v1849
  %1870 = vmatprep.subr.mxu0 0.0
  %1871 = vmatpush1.msra.mxu0 %v1850
  %1872 = vmatprep.subr.mxu0 0.0
  %1873 = vmatpush1.msra.mxu0 %v1851
  %1874 = vmatprep.subr.mxu0 0.0
  %1875 = vmatpush1.msra.mxu0 %v1852
  %1876 = vmatprep.subr.mxu0 0.0
  %1877 = vmatpush1.msra.mxu0 %v1853
  %1878 = vmatprep.subr.mxu0 0.0
  %1879 = vmatpush1.msra.mxu0 %v1854
  %1880 = vmatprep.subr.mxu0 0.0
  %1881 = vmatpush1.msra.mxu0 %v1855
  %1882 = vmatprep.subr.mxu0 0.0
  %1883 = vmatpush1.msra.mxu0 %v1856
  %1884 = vmatprep.subr.mxu0 0.0
  %1885 = vmatpush1.msra.mxu0 %v1857
  %1886 = vmatprep.subr.mxu0 0.0
  %1887 = vmatpush1.msra.mxu0 %v1858
  %1888 = vmatprep.subr.mxu0 0.0
  %1889 = vmatpush1.msra.mxu0 %v1859
  %1890 = vmatprep.subr.mxu0 0.0
  %1891 = vmatpush1.msra.mxu0 %v1860
  %1892 = vmatprep.subr.mxu0 0.0
  %1893 = vmatpush1.msra.mxu0 %v1861
  %1894 = vmatprep.subr.mxu0 0.0
  %1895 = vmatpush1.msra.mxu0 0.0
  %1896 = vmatprep.subr.mxu0 0.0
  %1897 = vmatpush1.msra.mxu0 0.0
  %1898 = vmatprep.subr.mxu0 0.0
  %1899 = vmatpush1.msra.mxu0 0.0
  %1900 = vmatprep.subr.mxu0 0.0
  %1901 = vmatpush1.msra.mxu0 0.0
  %1902 = vmatprep.subr.mxu0 0.0
  %1903 = vmatpush1.msra.mxu0 0.0
  %1904 = vmatprep.subr.mxu0 0.0
  %1905 = vmatpush1.msra.mxu0 0.0
  %1906 = vmatprep.subr.mxu0 0.0
  %1907 = vmatpush1.msra.mxu0 0.0
  %1908 = vmatprep.subr.mxu0 0.0
  %1909 = vmatpush1.msra.mxu0 0.0
  %1910 = vmatprep.subr.mxu0 0.0
  %1911 = vmatpush1.msra.mxu0 0.0
  %1912 = vmatprep.subr.mxu0 0.0
  %1913 = vmatpush1.msra.mxu0 0.0
  %1914 = vmatprep.subr.mxu0 0.0
  %1915 = vmatpush1.msra.mxu0 0.0
  %1916 = vmatprep.subr.mxu0 0.0
  %1917 = vmatpush1.msra.mxu0 0.0
  %1918 = vmatprep.subr.mxu0 0.0
  %1919 = vmatpush1.msra.mxu0 0.0
  %1920 = vmatprep.subr.mxu0 0.0
  %1921 = vmatpush1.msra.mxu0 0.0
  %1922 = vmatprep.subr.mxu0 0.0
  %1923 = vmatpush1.msra.mxu0 0.0
  %1924 = vmatprep.subr.mxu0 0.0
  %1925 = vmatpush1.msra.mxu0 0.0
  %1926 = vmatprep.mubr.f32.mxu0 0.0
  %1927 = vmatmul.mubr.f32.gmra.mrb[0].mxu0 %v1842
  %v1928 = vpop.f32.mrb[0].mxu0
  %v1929 = vadd.f32 0.0, %v1928
  %v1930 = vpop.f32.mrb[0].mxu0
  %1931 = vdwg.mxu0
  %1932 = vmatprep.subr.mxu0 0.0
  %1933 = vmatpush1.msra.mxu0 %v1754
  %1934 = vmatprep.subr.mxu0 0.0
  %1935 = vmatpush1.msra.mxu0 %v1755
  %1936 = vmatprep.subr.mxu0 0.0
  %1937 = vmatpush1.msra.mxu0 %v1756
  %1938 = vmatprep.subr.mxu0 0.0
  %1939 = vmatpush1.msra.mxu0 %v1757
  %1940 = vmatprep.subr.mxu0 0.0
  %1941 = vmatpush1.msra.mxu0 %v1758
  %1942 = vmatprep.subr.mxu0 0.0
  %1943 = vmatpush1.msra.mxu0 %v1759
  %1944 = vmatprep.subr.mxu0 0.0
  %1945 = vmatpush1.msra.mxu0 %v1760
  %1946 = vmatprep.subr.mxu0 0.0
  %1947 = vmatpush1.msra.mxu0 %v1761
  %1948 = vmatprep.subr.mxu0 0.0
  %1949 = vmatpush1.msra.mxu0 %v1762
  %1950 = vmatprep.subr.mxu0 0.0
  %1951 = vmatpush1.msra.mxu0 %v1763
  %1952 = vmatprep.subr.mxu0 0.0
  %1953 = vmatpush1.msra.mxu0 %v1764
  %1954 = vmatprep.subr.mxu0 0.0
  %1955 = vmatpush1.msra.mxu0 %v1765
  %1956 = vmatprep.subr.mxu0 0.0
  %1957 = vmatpush1.msra.mxu0 %v1766
  %1958 = vmatprep.subr.mxu0 0.0
  %1959 = vmatpush1.msra.mxu0 %v1767
  %1960 = vmatprep.subr.mxu0 0.0
  %1961 = vmatpush1.msra.mxu0 %v1768
  %1962 = vmatprep.subr.mxu0 0.0
  %1963 = vmatpush1.msra.mxu0 %v1769
  %1964 = vmatprep.subr.mxu0 0.0
  %1965 = vmatpush1.msra.mxu0 0.0
  %1966 = vmatprep.subr.mxu0 0.0
  %1967 = vmatpush1.msra.mxu0 0.0
  %1968 = vmatprep.subr.mxu0 0.0
  %1969 = vmatpush1.msra.mxu0 0.0
  %1970 = vmatprep.subr.mxu0 0.0
  %1971 = vmatpush1.msra.mxu0 0.0
  %1972 = vmatprep.subr.mxu0 0.0
  %1973 = vmatpush1.msra.mxu0 0.0
  %1974 = vmatprep.subr.mxu0 0.0
  %1975 = vmatpush1.msra.mxu0 0.0
  %1976 = vmatprep.subr.mxu0 0.0
  %1977 = vmatpush1.msra.mxu0 0.0
  %1978 = vmatprep.subr.mxu0 0.0
  %1979 = vmatpush1.msra.mxu0 0.0
  %1980 = vmatprep.subr.mxu0 0.0
  %1981 = vmatpush1.msra.mxu0 0.0
  %1982 = vmatprep.subr.mxu0 0.0
  %1983 = vmatpush1.msra.mxu0 0.0
  %1984 = vmatprep.subr.mxu0 0.0
  %1985 = vmatpush1.msra.mxu0 0.0
  %1986 = vmatprep.subr.mxu0 0.0
  %1987 = vmatpush1.msra.mxu0 0.0
  %1988 = vmatprep.subr.mxu0 0.0
  %1989 = vmatpush1.msra.mxu0 0.0
  %1990 = vmatprep.subr.mxu0 0.0
  %1991 = vmatpush1.msra.mxu0 0.0
  %1992 = vmatprep.subr.mxu0 0.0
  %1993 = vmatpush1.msra.mxu0 0.0
  %1994 = vmatprep.subr.mxu0 0.0
  %1995 = vmatpush1.msra.mxu0 0.0
  %1996 = vmatprep.mubr.f32.mxu0 0.0
  %1997 = vmatmul.mubr.f32.gmra.mrb[0].mxu0 %v1751
  %v1998 = vpop.f32.mrb[0].mxu0
  %v1999 = vadd.f32 %v1929, %v1998
  %v2000 = vpop.f32.mrb[0].mxu0
  %2001 = vdwg.mxu0
  %s2002 = scalar_lea.vmem %s7, 16
  %v2003 = vld [vmem:[%s2002] sm:$0xff]
  %v2005 = vsel %vm1676, %v2003, 0
  %2007 = vmatprep.subr.mxu0 0.0
  %2008 = vmatpush1.msra.mxu0 %v1682
  %2009 = vmatprep.subr.mxu0 0.0
  %2010 = vmatpush1.msra.mxu0 0.0
  %2011 = vmatprep.subr.mxu0 0.0
  %2012 = vmatpush1.msra.mxu0 0.0
  %2013 = vmatprep.subr.mxu0 0.0
  %2014 = vmatpush1.msra.mxu0 0.0
  %2015 = vmatprep.subr.mxu0 0.0
  %2016 = vmatpush1.msra.mxu0 0.0
  %2017 = vmatprep.subr.mxu0 0.0
  %2018 = vmatpush1.msra.mxu0 0.0
  %2019 = vmatprep.subr.mxu0 0.0
  %2020 = vmatpush1.msra.mxu0 0.0
  %2021 = vmatprep.subr.mxu0 0.0
  %2022 = vmatpush1.msra.mxu0 0.0
  %2023 = vmatprep.subr.mxu0 0.0
  %2024 = vmatpush1.msra.mxu0 0.0
  %2025 = vmatprep.subr.mxu0 0.0
  %2026 = vmatpush1.msra.mxu0 0.0
  %2027 = vmatprep.subr.mxu0 0.0
  %2028 = vmatpush1.msra.mxu0 0.0
  %2029 = vmatprep.subr.mxu0 0.0
  %2030 = vmatpush1.msra.mxu0 0.0
  %2031 = vmatprep.subr.mxu0 0.0
  %2032 = vmatpush1.msra.mxu0 0.0
  %2033 = vmatprep.subr.mxu0 0.0
  %2034 = vmatpush1.msra.mxu0 0.0
  %2035 = vmatprep.subr.mxu0 0.0
  %2036 = vmatpush1.msra.mxu0 0.0
  %2037 = vmatprep.subr.mxu0 0.0
  %2038 = vmatpush1.msra.mxu0 0.0
  %2039 = vmatprep.subr.mxu0 0.0
  %2040 = vmatpush1.msra.mxu0 0.0
  %2041 = vmatprep.subr.mxu0 0.0
  %2042 = vmatpush1.msra.mxu0 0.0
  %2043 = vmatprep.subr.mxu0 0.0
  %2044 = vmatpush1.msra.mxu0 0.0
  %2045 = vmatprep.subr.mxu0 0.0
  %2046 = vmatpush1.msra.mxu0 0.0
  %2047 = vmatprep.subr.mxu0 0.0
  %2048 = vmatpush1.msra.mxu0 0.0
  %2049 = vmatprep.subr.mxu0 0.0
  %2050 = vmatpush1.msra.mxu0 0.0
  %2051 = vmatprep.subr.mxu0 0.0
  %2052 = vmatpush1.msra.mxu0 0.0
  %2053 = vmatprep.subr.mxu0 0.0
  %2054 = vmatpush1.msra.mxu0 0.0
  %2055 = vmatprep.subr.mxu0 0.0
  %2056 = vmatpush1.msra.mxu0 0.0
  %2057 = vmatprep.subr.mxu0 0.0
  %2058 = vmatpush1.msra.mxu0 0.0
  %2059 = vmatprep.subr.mxu0 0.0
  %2060 = vmatpush1.msra.mxu0 0.0
  %2061 = vmatprep.subr.mxu0 0.0
  %2062 = vmatpush1.msra.mxu0 0.0
  %2063 = vmatprep.subr.mxu0 0.0
  %2064 = vmatpush1.msra.mxu0 0.0
  %2065 = vmatprep.subr.mxu0 0.0
  %2066 = vmatpush1.msra.mxu0 0.0
  %2067 = vmatprep.subr.mxu0 0.0
  %2068 = vmatpush1.msra.mxu0 0.0
  %2069 = vmatprep.subr.mxu0 0.0
  %2070 = vmatpush1.msra.mxu0 0.0
  %2071 = vmatprep.mubr.f32.mxu0 0.0
  %2072 = vmatmul.mubr.f32.gmra.mrb[0].mxu0 %v2005
  %v2073 = vpop.f32.mrb[0].mxu0
  %v2074 = vadd.f32 0.0, %v2073
  %v2075 = vpop.f32.mrb[0].mxu0
  %2076 = vdwg.mxu0
  %s2077 = scalar_lea.vmem %s8, 256
  %v2078 = vld [vmem:[%s2077] sm:$0xff]
  %v2079 = vld [vmem:[%s2077 + $0x8] sm:$0xff]
  %v2080 = vld [vmem:[%s2077 + $0x10] sm:$0xff]
  %v2081 = vld [vmem:[%s2077 + $0x18] sm:$0xff]
  %v2082 = vld [vmem:[%s2077 + $0x20] sm:$0xff]
  %v2083 = vld [vmem:[%s2077 + $0x28] sm:$0xff]
  %v2084 = vld [vmem:[%s2077 + $0x30] sm:$0xff]
  %v2085 = vld [vmem:[%s2077 + $0x38] sm:$0xff]
  %v2086 = vld [vmem:[%s2077 + $0x40] sm:$0xff]
  %v2087 = vld [vmem:[%s2077 + $0x48] sm:$0xff]
  %v2088 = vld [vmem:[%s2077 + $0x50] sm:$0xff]
  %v2089 = vld [vmem:[%s2077 + $0x58] sm:$0xff]
  %v2090 = vld [vmem:[%s2077 + $0x60] sm:$0xff]
  %v2091 = vld [vmem:[%s2077 + $0x68] sm:$0xff]
  %v2092 = vld [vmem:[%s2077 + $0x70] sm:$0xff]
  %v2093 = vld [vmem:[%s2077 + $0x78] sm:$0xff]
  %2094 = vmatprep.subr.mxu0 0.0
  %2095 = vmatpush1.msra.mxu0 %v2078
  %2096 = vmatprep.subr.mxu0 0.0
  %2097 = vmatpush1.msra.mxu0 %v2079
  %2098 = vmatprep.subr.mxu0 0.0
  %2099 = vmatpush1.msra.mxu0 %v2080
  %2100 = vmatprep.subr.mxu0 0.0
  %2101 = vmatpush1.msra.mxu0 %v2081
  %2102 = vmatprep.subr.mxu0 0.0
  %2103 = vmatpush1.msra.mxu0 %v2082
  %2104 = vmatprep.subr.mxu0 0.0
  %2105 = vmatpush1.msra.mxu0 %v2083
  %2106 = vmatprep.subr.mxu0 0.0
  %2107 = vmatpush1.msra.mxu0 %v2084
  %2108 = vmatprep.subr.mxu0 0.0
  %2109 = vmatpush1.msra.mxu0 %v2085
  %2110 = vmatprep.subr.mxu0 0.0
  %2111 = vmatpush1.msra.mxu0 %v2086
  %2112 = vmatprep.subr.mxu0 0.0
  %2113 = vmatpush1.msra.mxu0 %v2087
  %2114 = vmatprep.subr.mxu0 0.0
  %2115 = vmatpush1.msra.mxu0 %v2088
  %2116 = vmatprep.subr.mxu0 0.0
  %2117 = vmatpush1.msra.mxu0 %v2089
  %2118 = vmatprep.subr.mxu0 0.0
  %2119 = vmatpush1.msra.mxu0 %v2090
  %2120 = vmatprep.subr.mxu0 0.0
  %2121 = vmatpush1.msra.mxu0 %v2091
  %2122 = vmatprep.subr.mxu0 0.0
  %2123 = vmatpush1.msra.mxu0 %v2092
  %2124 = vmatprep.subr.mxu0 0.0
  %2125 = vmatpush1.msra.mxu0 %v2093
  %2126 = vmatprep.subr.mxu0 0.0
  %2127 = vmatpush1.msra.mxu0 0.0
  %2128 = vmatprep.subr.mxu0 0.0
  %2129 = vmatpush1.msra.mxu0 0.0
  %2130 = vmatprep.subr.mxu0 0.0
  %2131 = vmatpush1.msra.mxu0 0.0
  %2132 = vmatprep.subr.mxu0 0.0
  %2133 = vmatpush1.msra.mxu0 0.0
  %2134 = vmatprep.subr.mxu0 0.0
  %2135 = vmatpush1.msra.mxu0 0.0
  %2136 = vmatprep.subr.mxu0 0.0
  %2137 = vmatpush1.msra.mxu0 0.0
  %2138 = vmatprep.subr.mxu0 0.0
  %2139 = vmatpush1.msra.mxu0 0.0
  %2140 = vmatprep.subr.mxu0 0.0
  %2141 = vmatpush1.msra.mxu0 0.0
  %2142 = vmatprep.subr.mxu0 0.0
  %2143 = vmatpush1.msra.mxu0 0.0
  %2144 = vmatprep.subr.mxu0 0.0
  %2145 = vmatpush1.msra.mxu0 0.0
  %2146 = vmatprep.subr.mxu0 0.0
  %2147 = vmatpush1.msra.mxu0 0.0
  %2148 = vmatprep.subr.mxu0 0.0
  %2149 = vmatpush1.msra.mxu0 0.0
  %2150 = vmatprep.subr.mxu0 0.0
  %2151 = vmatpush1.msra.mxu0 0.0
  %2152 = vmatprep.subr.mxu0 0.0
  %2153 = vmatpush1.msra.mxu0 0.0
  %2154 = vmatprep.subr.mxu0 0.0
  %2155 = vmatpush1.msra.mxu0 0.0
  %2156 = vmatprep.subr.mxu0 0.0
  %2157 = vmatpush1.msra.mxu0 0.0
  %2158 = vmatprep.mubr.f32.mxu0 0.0
  %2159 = vmatmul.mubr.f32.gmra.mrb[0].mxu0 %v2074
  %v2160 = vpop.f32.mrb[0].mxu0
  %v2161 = vadd.f32 0.0, %v2160
  %v2162 = vpop.f32.mrb[0].mxu0
  %2163 = vdwg.mxu0
  %v2164 = vadd.f32 %v1999, %v2161
  %s2165 = scalar_lea.vmem %s7, 24
  %v2166 = vld [vmem:[%s2165] sm:$0xff]
  %v2168 = vsel %vm1676, %v2166, 0
  %2170 = vmatprep.subr.mxu0 0.0
  %2171 = vmatpush1.msra.mxu0 %v1682
  %2172 = vmatprep.subr.mxu0 0.0
  %2173 = vmatpush1.msra.mxu0 0.0
  %2174 = vmatprep.subr.mxu0 0.0
  %2175 = vmatpush1.msra.mxu0 0.0
  %2176 = vmatprep.subr.mxu0 0.0
  %2177 = vmatpush1.msra.mxu0 0.0
  %2178 = vmatprep.subr.mxu0 0.0
  %2179 = vmatpush1.msra.mxu0 0.0
  %2180 = vmatprep.subr.mxu0 0.0
  %2181 = vmatpush1.msra.mxu0 0.0
  %2182 = vmatprep.subr.mxu0 0.0
  %2183 = vmatpush1.msra.mxu0 0.0
  %2184 = vmatprep.subr.mxu0 0.0
  %2185 = vmatpush1.msra.mxu0 0.0
  %2186 = vmatprep.subr.mxu0 0.0
  %2187 = vmatpush1.msra.mxu0 0.0
  %2188 = vmatprep.subr.mxu0 0.0
  %2189 = vmatpush1.msra.mxu0 0.0
  %2190 = vmatprep.subr.mxu0 0.0
  %2191 = vmatpush1.msra.mxu0 0.0
  %2192 = vmatprep.subr.mxu0 0.0
  %2193 = vmatpush1.msra.mxu0 0.0
  %2194 = vmatprep.subr.mxu0 0.0
  %2195 = vmatpush1.msra.mxu0 0.0
  %2196 = vmatprep.subr.mxu0 0.0
  %2197 = vmatpush1.msra.mxu0 0.0
  %2198 = vmatprep.subr.mxu0 0.0
  %2199 = vmatpush1.msra.mxu0 0.0
  %2200 = vmatprep.subr.mxu0 0.0
  %2201 = vmatpush1.msra.mxu0 0.0
  %2202 = vmatprep.subr.mxu0 0.0
  %2203 = vmatpush1.msra.mxu0 0.0
  %2204 = vmatprep.subr.mxu0 0.0
  %2205 = vmatpush1.msra.mxu0 0.0
  %2206 = vmatprep.subr.mxu0 0.0
  %2207 = vmatpush1.msra.mxu0 0.0
  %2208 = vmatprep.subr.mxu0 0.0
  %2209 = vmatpush1.msra.mxu0 0.0
  %2210 = vmatprep.subr.mxu0 0.0
  %2211 = vmatpush1.msra.mxu0 0.0
  %2212 = vmatprep.subr.mxu0 0.0
  %2213 = vmatpush1.msra.mxu0 0.0
  %2214 = vmatprep.subr.mxu0 0.0
  %2215 = vmatpush1.msra.mxu0 0.0
  %2216 = vmatprep.subr.mxu0 0.0
  %2217 = vmatpush1.msra.mxu0 0.0
  %2218 = vmatprep.subr.mxu0 0.0
  %2219 = vmatpush1.msra.mxu0 0.0
  %2220 = vmatprep.subr.mxu0 0.0
  %2221 = vmatpush1.msra.mxu0 0.0
  %2222 = vmatprep.subr.mxu0 0.0
  %2223 = vmatpush1.msra.mxu0 0.0
  %2224 = vmatprep.subr.mxu0 0.0
  %2225 = vmatpush1.msra.mxu0 0.0
  %2226 = vmatprep.subr.mxu0 0.0
  %2227 = vmatpush1.msra.mxu0 0.0
  %2228 = vmatprep.subr.mxu0 0.0
  %2229 = vmatpush1.msra.mxu0 0.0
  %2230 = vmatprep.subr.mxu0 0.0
  %2231 = vmatpush1.msra.mxu0 0.0
  %2232 = vmatprep.subr.mxu0 0.0
  %2233 = vmatpush1.msra.mxu0 0.0
  %2234 = vmatprep.mubr.f32.mxu0 0.0
  %2235 = vmatmul.mubr.f32.gmra.mrb[0].mxu0 %v2168
  %v2236 = vpop.f32.mrb[0].mxu0
  %v2237 = vadd.f32 0.0, %v2236
  %v2238 = vpop.f32.mrb[0].mxu0
  %2239 = vdwg.mxu0
  %s2240 = scalar_lea.vmem %s8, 384
  %v2241 = vld [vmem:[%s2240] sm:$0xff]
  %v2242 = vld [vmem:[%s2240 + $0x8] sm:$0xff]
  %v2243 = vld [vmem:[%s2240 + $0x10] sm:$0xff]
  %v2244 = vld [vmem:[%s2240 + $0x18] sm:$0xff]
  %v2245 = vld [vmem:[%s2240 + $0x20] sm:$0xff]
  %v2246 = vld [vmem:[%s2240 + $0x28] sm:$0xff]
  %v2247 = vld [vmem:[%s2240 + $0x30] sm:$0xff]
  %v2248 = vld [vmem:[%s2240 + $0x38] sm:$0xff]
  %v2249 = vld [vmem:[%s2240 + $0x40] sm:$0xff]
  %v2250 = vld [vmem:[%s2240 + $0x48] sm:$0xff]
  %v2251 = vld [vmem:[%s2240 + $0x50] sm:$0xff]
  %v2252 = vld [vmem:[%s2240 + $0x58] sm:$0xff]
  %v2253 = vld [vmem:[%s2240 + $0x60] sm:$0xff]
  %v2254 = vld [vmem:[%s2240 + $0x68] sm:$0xff]
  %v2255 = vld [vmem:[%s2240 + $0x70] sm:$0xff]
  %v2256 = vld [vmem:[%s2240 + $0x78] sm:$0xff]
  %2257 = vmatprep.subr.mxu0 0.0
  %2258 = vmatpush1.msra.mxu0 %v2241
  %2259 = vmatprep.subr.mxu0 0.0
  %2260 = vmatpush1.msra.mxu0 %v2242
  %2261 = vmatprep.subr.mxu0 0.0
  %2262 = vmatpush1.msra.mxu0 %v2243
  %2263 = vmatprep.subr.mxu0 0.0
  %2264 = vmatpush1.msra.mxu0 %v2244
  %2265 = vmatprep.subr.mxu0 0.0
  %2266 = vmatpush1.msra.mxu0 %v2245
  %2267 = vmatprep.subr.mxu0 0.0
  %2268 = vmatpush1.msra.mxu0 %v2246
  %2269 = vmatprep.subr.mxu0 0.0
  %2270 = vmatpush1.msra.mxu0 %v2247
  %2271 = vmatprep.subr.mxu0 0.0
  %2272 = vmatpush1.msra.mxu0 %v2248
  %2273 = vmatprep.subr.mxu0 0.0
  %2274 = vmatpush1.msra.mxu0 %v2249
  %2275 = vmatprep.subr.mxu0 0.0
  %2276 = vmatpush1.msra.mxu0 %v2250
  %2277 = vmatprep.subr.mxu0 0.0
  %2278 = vmatpush1.msra.mxu0 %v2251
  %2279 = vmatprep.subr.mxu0 0.0
  %2280 = vmatpush1.msra.mxu0 %v2252
  %2281 = vmatprep.subr.mxu0 0.0
  %2282 = vmatpush1.msra.mxu0 %v2253
  %2283 = vmatprep.subr.mxu0 0.0
  %2284 = vmatpush1.msra.mxu0 %v2254
  %2285 = vmatprep.subr.mxu0 0.0
  %2286 = vmatpush1.msra.mxu0 %v2255
  %2287 = vmatprep.subr.mxu0 0.0
  %2288 = vmatpush1.msra.mxu0 %v2256
  %2289 = vmatprep.subr.mxu0 0.0
  %2290 = vmatpush1.msra.mxu0 0.0
  %2291 = vmatprep.subr.mxu0 0.0
  %2292 = vmatpush1.msra.mxu0 0.0
  %2293 = vmatprep.subr.mxu0 0.0
  %2294 = vmatpush1.msra.mxu0 0.0
  %2295 = vmatprep.subr.mxu0 0.0
  %2296 = vmatpush1.msra.mxu0 0.0
  %2297 = vmatprep.subr.mxu0 0.0
  %2298 = vmatpush1.msra.mxu0 0.0
  %2299 = vmatprep.subr.mxu0 0.0
  %2300 = vmatpush1.msra.mxu0 0.0
  %2301 = vmatprep.subr.mxu0 0.0
  %2302 = vmatpush1.msra.mxu0 0.0
  %2303 = vmatprep.subr.mxu0 0.0
  %2304 = vmatpush1.msra.mxu0 0.0
  %2305 = vmatprep.subr.mxu0 0.0
  %2306 = vmatpush1.msra.mxu0 0.0
  %2307 = vmatprep.subr.mxu0 0.0
  %2308 = vmatpush1.msra.mxu0 0.0
  %2309 = vmatprep.subr.mxu0 0.0
  %2310 = vmatpush1.msra.mxu0 0.0
  %2311 = vmatprep.subr.mxu0 0.0
  %2312 = vmatpush1.msra.mxu0 0.0
  %2313 = vmatprep.subr.mxu0 0.0
  %2314 = vmatpush1.msra.mxu0 0.0
  %2315 = vmatprep.subr.mxu0 0.0
  %2316 = vmatpush1.msra.mxu0 0.0
  %2317 = vmatprep.subr.mxu0 0.0
  %2318 = vmatpush1.msra.mxu0 0.0
  %2319 = vmatprep.subr.mxu0 0.0
  %2320 = vmatpush1.msra.mxu0 0.0
  %2321 = vmatprep.mubr.f32.mxu0 0.0
  %2322 = vmatmul.mubr.f32.gmra.mrb[0].mxu0 %v2237
  %v2323 = vpop.f32.mrb[0].mxu0
  %v2324 = vadd.f32 0.0, %v2323
  %v2325 = vpop.f32.mrb[0].mxu0
  %2326 = vdwg.mxu0
  %v2327 = vadd.f32 %v2164, %v2324
  %v2328 = vld [vmem:[%s9] sm:$0x1]
  %v2330 = vlaneseq
  %v2331 = vshrl.u32 %v2330, 7
  %v2332 = vsub.s32 0, %v2331
  %v2333 = vrot.slane %v2328, %v2332
  %v2335 = vadd.f32 %v2327, %v2333
  %vm2336 = vcmp.ge.f32.partialorder %v2335, 0.0
  %v2337 = vmul.f32 %v2335, 0.2
  %v2338 = vsel %vm2336, %v2335, %v2337
  %v2339 = vld [vmem:[%s10] sm:$0xff]
  %v2340 = vld [vmem:[%s10 + $0x8] sm:$0xff]
  %v2341 = vld [vmem:[%s10 + $0x10] sm:$0x1]
  %v2343 = vsel %vm877, %v2339, 0
  %v2346 = vsel %vm877, %v2340, 0
  %v2349 = vsel %vm877, %v2341, 0
  %2351 = vmatprep.subr.mxu0 0.0
  %2352 = vmatpush1.msra.mxu0 %v2338
  %2353 = vmatprep.subr.mxu0 0.0
  %2354 = vmatpush1.msra.mxu0 0.0
  %2355 = vmatprep.subr.mxu0 0.0
  %2356 = vmatpush1.msra.mxu0 0.0
  %2357 = vmatprep.subr.mxu0 0.0
  %2358 = vmatpush1.msra.mxu0 0.0
  %2359 = vmatprep.subr.mxu0 0.0
  %2360 = vmatpush1.msra.mxu0 0.0
  %2361 = vmatprep.subr.mxu0 0.0
  %2362 = vmatpush1.msra.mxu0 0.0
  %2363 = vmatprep.subr.mxu0 0.0
  %2364 = vmatpush1.msra.mxu0 0.0
  %2365 = vmatprep.subr.mxu0 0.0
  %2366 = vmatpush1.msra.mxu0 0.0
  %2367 = vmatprep.subr.mxu0 0.0
  %2368 = vmatpush1.msra.mxu0 0.0
  %2369 = vmatprep.subr.mxu0 0.0
  %2370 = vmatpush1.msra.mxu0 0.0
  %2371 = vmatprep.subr.mxu0 0.0
  %2372 = vmatpush1.msra.mxu0 0.0
  %2373 = vmatprep.subr.mxu0 0.0
  %2374 = vmatpush1.msra.mxu0 0.0
  %2375 = vmatprep.subr.mxu0 0.0
  %2376 = vmatpush1.msra.mxu0 0.0
  %2377 = vmatprep.subr.mxu0 0.0
  %2378 = vmatpush1.msra.mxu0 0.0
  %2379 = vmatprep.subr.mxu0 0.0
  %2380 = vmatpush1.msra.mxu0 0.0
  %2381 = vmatprep.subr.mxu0 0.0
  %2382 = vmatpush1.msra.mxu0 0.0
  %2383 = vmatprep.subr.mxu0 0.0
  %2384 = vmatpush1.msra.mxu0 0.0
  %2385 = vmatprep.subr.mxu0 0.0
  %2386 = vmatpush1.msra.mxu0 0.0
  %2387 = vmatprep.subr.mxu0 0.0
  %2388 = vmatpush1.msra.mxu0 0.0
  %2389 = vmatprep.subr.mxu0 0.0
  %2390 = vmatpush1.msra.mxu0 0.0
  %2391 = vmatprep.subr.mxu0 0.0
  %2392 = vmatpush1.msra.mxu0 0.0
  %2393 = vmatprep.subr.mxu0 0.0
  %2394 = vmatpush1.msra.mxu0 0.0
  %2395 = vmatprep.subr.mxu0 0.0
  %2396 = vmatpush1.msra.mxu0 0.0
  %2397 = vmatprep.subr.mxu0 0.0
  %2398 = vmatpush1.msra.mxu0 0.0
  %2399 = vmatprep.subr.mxu0 0.0
  %2400 = vmatpush1.msra.mxu0 0.0
  %2401 = vmatprep.subr.mxu0 0.0
  %2402 = vmatpush1.msra.mxu0 0.0
  %2403 = vmatprep.subr.mxu0 0.0
  %2404 = vmatpush1.msra.mxu0 0.0
  %2405 = vmatprep.subr.mxu0 0.0
  %2406 = vmatpush1.msra.mxu0 0.0
  %2407 = vmatprep.subr.mxu0 0.0
  %2408 = vmatpush1.msra.mxu0 0.0
  %2409 = vmatprep.subr.mxu0 0.0
  %2410 = vmatpush1.msra.mxu0 0.0
  %2411 = vmatprep.subr.mxu0 0.0
  %2412 = vmatpush1.msra.mxu0 0.0
  %2413 = vmatprep.subr.mxu0 0.0
  %2414 = vmatpush1.msra.mxu0 0.0
  %2415 = vmatprep.mubr.f32.mxu0 0.0
  %2416 = vmatmul.mubr.f32.gmra.mrb[0].mxu0 %v2343
  %v2417 = vpop.f32.mrb[0].mxu0
  %v2418 = vadd.f32 0.0, %v2417
  %v2419 = vpop.f32.mrb[0].mxu0
  %2420 = vmatprep.mubr.f32.mxu0 0.0
  %2421 = vmatmul.mubr.f32.gmra.mrb[0].mxu0 %v2346
  %v2422 = vpop.f32.mrb[0].mxu0
  %v2423 = vadd.f32 0.0, %v2422
  %v2424 = vpop.f32.mrb[0].mxu0
  %2425 = vmatprep.mubr.f32.mxu0 0.0
  %2426 = vmatmul.mubr.f32.gmra.mrb[0].mxu0 %v2349
  %v2427 = vpop.f32.mrb[0].mxu0
  %v2428 = vadd.f32 0.0, %v2427
  %v2429 = vpop.f32.mrb[0].mxu0
  %2430 = vdwg.mxu0
  %v2431 = vld [vmem:[%s11] sm:$0xff]
  %v2432 = vld [vmem:[%s11 + $0x8] sm:$0xff]
  %v2433 = vld [vmem:[%s11 + $0x10] sm:$0xff]
  %v2434 = vld [vmem:[%s11 + $0x18] sm:$0xff]
  %v2435 = vld [vmem:[%s11 + $0x20] sm:$0xff]
  %v2436 = vld [vmem:[%s11 + $0x28] sm:$0xff]
  %v2437 = vld [vmem:[%s11 + $0x30] sm:$0xff]
  %v2438 = vld [vmem:[%s11 + $0x38] sm:$0xff]
  %2439 = vmatprep.subr.mxu0 0.0
  %2440 = vmatpush1.msra.mxu0 %v875
  %2441 = vmatprep.subr.mxu0 0.0
  %2442 = vmatpush1.msra.mxu0 0.0
  %2443 = vmatprep.subr.mxu0 0.0
  %2444 = vmatpush1.msra.mxu0 0.0
  %2445 = vmatprep.subr.mxu0 0.0
  %2446 = vmatpush1.msra.mxu0 0.0
  %2447 = vmatprep.subr.mxu0 0.0
  %2448 = vmatpush1.msra.mxu0 0.0
  %2449 = vmatprep.subr.mxu0 0.0
  %2450 = vmatpush1.msra.mxu0 0.0
  %2451 = vmatprep.subr.mxu0 0.0
  %2452 = vmatpush1.msra.mxu0 0.0
  %2453 = vmatprep.subr.mxu0 0.0
  %2454 = vmatpush1.msra.mxu0 0.0
  %2455 = vmatprep.subr.mxu0 0.0
  %2456 = vmatpush1.msra.mxu0 0.0
  %2457 = vmatprep.subr.mxu0 0.0
  %2458 = vmatpush1.msra.mxu0 0.0
  %2459 = vmatprep.subr.mxu0 0.0
  %2460 = vmatpush1.msra.mxu0 0.0
  %2461 = vmatprep.subr.mxu0 0.0
  %2462 = vmatpush1.msra.mxu0 0.0
  %2463 = vmatprep.subr.mxu0 0.0
  %2464 = vmatpush1.msra.mxu0 0.0
  %2465 = vmatprep.subr.mxu0 0.0
  %2466 = vmatpush1.msra.mxu0 0.0
  %2467 = vmatprep.subr.mxu0 0.0
  %2468 = vmatpush1.msra.mxu0 0.0
  %2469 = vmatprep.subr.mxu0 0.0
  %2470 = vmatpush1.msra.mxu0 0.0
  %2471 = vmatprep.subr.mxu0 0.0
  %2472 = vmatpush1.msra.mxu0 0.0
  %2473 = vmatprep.subr.mxu0 0.0
  %2474 = vmatpush1.msra.mxu0 0.0
  %2475 = vmatprep.subr.mxu0 0.0
  %2476 = vmatpush1.msra.mxu0 0.0
  %2477 = vmatprep.subr.mxu0 0.0
  %2478 = vmatpush1.msra.mxu0 0.0
  %2479 = vmatprep.subr.mxu0 0.0
  %2480 = vmatpush1.msra.mxu0 0.0
  %2481 = vmatprep.subr.mxu0 0.0
  %2482 = vmatpush1.msra.mxu0 0.0
  %2483 = vmatprep.subr.mxu0 0.0
  %2484 = vmatpush1.msra.mxu0 0.0
  %2485 = vmatprep.subr.mxu0 0.0
  %2486 = vmatpush1.msra.mxu0 0.0
  %2487 = vmatprep.subr.mxu0 0.0
  %2488 = vmatpush1.msra.mxu0 0.0
  %2489 = vmatprep.subr.mxu0 0.0
  %2490 = vmatpush1.msra.mxu0 0.0
  %2491 = vmatprep.subr.mxu0 0.0
  %2492 = vmatpush1.msra.mxu0 0.0
  %2493 = vmatprep.subr.mxu0 0.0
  %2494 = vmatpush1.msra.mxu0 0.0
  %2495 = vmatprep.subr.mxu0 0.0
  %2496 = vmatpush1.msra.mxu0 0.0
  %2497 = vmatprep.subr.mxu0 0.0
  %2498 = vmatpush1.msra.mxu0 0.0
  %2499 = vmatprep.subr.mxu0 0.0
  %2500 = vmatpush1.msra.mxu0 0.0
  %2501 = vmatprep.subr.mxu0 0.0
  %2502 = vmatpush1.msra.mxu0 0.0
  %2503 = vmatprep.mubr.f32.mxu0 0.0
  %2504 = vmatmul.mubr.f32.gmra.mrb[0].mxu0 %v2343
  %v2505 = vpop.f32.mrb[0].mxu0
  %v2506 = vadd.f32 0.0, %v2505
  %v2507 = vpop.f32.mrb[0].mxu0
  %2508 = vmatprep.mubr.f32.mxu0 0.0
  %2509 = vmatmul.mubr.f32.gmra.mrb[0].mxu0 %v2346
  %v2510 = vpop.f32.mrb[0].mxu0
  %v2511 = vadd.f32 0.0, %v2510
  %v2512 = vpop.f32.mrb[0].mxu0
  %2513 = vmatprep.mubr.f32.mxu0 0.0
  %2514 = vmatmul.mubr.f32.gmra.mrb[0].mxu0 %v2349
  %v2515 = vpop.f32.mrb[0].mxu0
  %v2516 = vadd.f32 0.0, %v2515
  %v2517 = vpop.f32.mrb[0].mxu0
  %2518 = vdwg.mxu0
  %v2519 = vld [vmem:[%s12] sm:$0xff]
  %v2520 = vld [vmem:[%s12 + $0x8] sm:$0xff]
  %v2521 = vld [vmem:[%s12 + $0x10] sm:$0xff]
  %v2522 = vld [vmem:[%s12 + $0x18] sm:$0xff]
  %v2523 = vld [vmem:[%s12 + $0x20] sm:$0xff]
  %v2524 = vld [vmem:[%s12 + $0x28] sm:$0xff]
  %v2525 = vld [vmem:[%s12 + $0x30] sm:$0xff]
  %v2526 = vld [vmem:[%s12 + $0x38] sm:$0xff]
  %v2528 = vsel %vm1043, %v2506, 0
  %v2531 = vsel %vm1043, %v2511, 0
  %v2534 = vsel %vm1043, %v2516, 0
  %2536 = vmatprep.subr.mxu0 0.0
  %2537 = vmatpush1.msra.mxu0 %v2519
  %2538 = vmatprep.subr.mxu0 0.0
  %2539 = vmatpush1.msra.mxu0 %v2520
  %2540 = vmatprep.subr.mxu0 0.0
  %2541 = vmatpush1.msra.mxu0 %v2521
  %2542 = vmatprep.subr.mxu0 0.0
  %2543 = vmatpush1.msra.mxu0 %v2522
  %2544 = vmatprep.subr.mxu0 0.0
  %2545 = vmatpush1.msra.mxu0 %v2523
  %2546 = vmatprep.subr.mxu0 0.0
  %2547 = vmatpush1.msra.mxu0 %v2524
  %2548 = vmatprep.subr.mxu0 0.0
  %2549 = vmatpush1.msra.mxu0 %v2525
  %2550 = vmatprep.subr.mxu0 0.0
  %2551 = vmatpush1.msra.mxu0 %v2526
  %2552 = vmatprep.subr.mxu0 0.0
  %2553 = vmatpush1.msra.mxu0 0.0
  %2554 = vmatprep.subr.mxu0 0.0
  %2555 = vmatpush1.msra.mxu0 0.0
  %2556 = vmatprep.subr.mxu0 0.0
  %2557 = vmatpush1.msra.mxu0 0.0
  %2558 = vmatprep.subr.mxu0 0.0
  %2559 = vmatpush1.msra.mxu0 0.0
  %2560 = vmatprep.subr.mxu0 0.0
  %2561 = vmatpush1.msra.mxu0 0.0
  %2562 = vmatprep.subr.mxu0 0.0
  %2563 = vmatpush1.msra.mxu0 0.0
  %2564 = vmatprep.subr.mxu0 0.0
  %2565 = vmatpush1.msra.mxu0 0.0
  %2566 = vmatprep.subr.mxu0 0.0
  %2567 = vmatpush1.msra.mxu0 0.0
  %2568 = vmatprep.subr.mxu0 0.0
  %2569 = vmatpush1.msra.mxu0 0.0
  %2570 = vmatprep.subr.mxu0 0.0
  %2571 = vmatpush1.msra.mxu0 0.0
  %2572 = vmatprep.subr.mxu0 0.0
  %2573 = vmatpush1.msra.mxu0 0.0
  %2574 = vmatprep.subr.mxu0 0.0
  %2575 = vmatpush1.msra.mxu0 0.0
  %2576 = vmatprep.subr.mxu0 0.0
  %2577 = vmatpush1.msra.mxu0 0.0
  %2578 = vmatprep.subr.mxu0 0.0
  %2579 = vmatpush1.msra.mxu0 0.0
  %2580 = vmatprep.subr.mxu0 0.0
  %2581 = vmatpush1.msra.mxu0 0.0
  %2582 = vmatprep.subr.mxu0 0.0
  %2583 = vmatpush1.msra.mxu0 0.0
  %2584 = vmatprep.subr.mxu0 0.0
  %2585 = vmatpush1.msra.mxu0 0.0
  %2586 = vmatprep.subr.mxu0 0.0
  %2587 = vmatpush1.msra.mxu0 0.0
  %2588 = vmatprep.subr.mxu0 0.0
  %2589 = vmatpush1.msra.mxu0 0.0
  %2590 = vmatprep.subr.mxu0 0.0
  %2591 = vmatpush1.msra.mxu0 0.0
  %2592 = vmatprep.subr.mxu0 0.0
  %2593 = vmatpush1.msra.mxu0 0.0
  %2594 = vmatprep.subr.mxu0 0.0
  %2595 = vmatpush1.msra.mxu0 0.0
  %2596 = vmatprep.subr.mxu0 0.0
  %2597 = vmatpush1.msra.mxu0 0.0
  %2598 = vmatprep.subr.mxu0 0.0
  %2599 = vmatpush1.msra.mxu0 0.0
  %2600 = vmatprep.mubr.f32.mxu0 0.0
  %2601 = vmatmul.mubr.f32.gmra.mrb[0].mxu0 %v2528
  %v2602 = vpop.f32.mrb[0].mxu0
  %v2603 = vadd.f32 0.0, %v2602
  %v2604 = vpop.f32.mrb[0].mxu0
  %2605 = vmatprep.mubr.f32.mxu0 0.0
  %2606 = vmatmul.mubr.f32.gmra.mrb[0].mxu0 %v2531
  %v2607 = vpop.f32.mrb[0].mxu0
  %v2608 = vadd.f32 0.0, %v2607
  %v2609 = vpop.f32.mrb[0].mxu0
  %2610 = vmatprep.mubr.f32.mxu0 0.0
  %2611 = vmatmul.mubr.f32.gmra.mrb[0].mxu0 %v2534
  %v2612 = vpop.f32.mrb[0].mxu0
  %v2613 = vadd.f32 0.0, %v2612
  %v2614 = vpop.f32.mrb[0].mxu0
  %2615 = vdwg.mxu0
  %v2617 = vsel %vm1043, %v2418, 0
  %v2620 = vsel %vm1043, %v2423, 0
  %v2623 = vsel %vm1043, %v2428, 0
  %2625 = vmatprep.subr.mxu0 0.0
  %2626 = vmatpush1.msra.mxu0 %v2431
  %2627 = vmatprep.subr.mxu0 0.0
  %2628 = vmatpush1.msra.mxu0 %v2432
  %2629 = vmatprep.subr.mxu0 0.0
  %2630 = vmatpush1.msra.mxu0 %v2433
  %2631 = vmatprep.subr.mxu0 0.0
  %2632 = vmatpush1.msra.mxu0 %v2434
  %2633 = vmatprep.subr.mxu0 0.0
  %2634 = vmatpush1.msra.mxu0 %v2435
  %2635 = vmatprep.subr.mxu0 0.0
  %2636 = vmatpush1.msra.mxu0 %v2436
  %2637 = vmatprep.subr.mxu0 0.0
  %2638 = vmatpush1.msra.mxu0 %v2437
  %2639 = vmatprep.subr.mxu0 0.0
  %2640 = vmatpush1.msra.mxu0 %v2438
  %2641 = vmatprep.subr.mxu0 0.0
  %2642 = vmatpush1.msra.mxu0 0.0
  %2643 = vmatprep.subr.mxu0 0.0
  %2644 = vmatpush1.msra.mxu0 0.0
  %2645 = vmatprep.subr.mxu0 0.0
  %2646 = vmatpush1.msra.mxu0 0.0
  %2647 = vmatprep.subr.mxu0 0.0
  %2648 = vmatpush1.msra.mxu0 0.0
  %2649 = vmatprep.subr.mxu0 0.0
  %2650 = vmatpush1.msra.mxu0 0.0
  %2651 = vmatprep.subr.mxu0 0.0
  %2652 = vmatpush1.msra.mxu0 0.0
  %2653 = vmatprep.subr.mxu0 0.0
  %2654 = vmatpush1.msra.mxu0 0.0
  %2655 = vmatprep.subr.mxu0 0.0
  %2656 = vmatpush1.msra.mxu0 0.0
  %2657 = vmatprep.subr.mxu0 0.0
  %2658 = vmatpush1.msra.mxu0 0.0
  %2659 = vmatprep.subr.mxu0 0.0
  %2660 = vmatpush1.msra.mxu0 0.0
  %2661 = vmatprep.subr.mxu0 0.0
  %2662 = vmatpush1.msra.mxu0 0.0
  %2663 = vmatprep.subr.mxu0 0.0
  %2664 = vmatpush1.msra.mxu0 0.0
  %2665 = vmatprep.subr.mxu0 0.0
  %2666 = vmatpush1.msra.mxu0 0.0
  %2667 = vmatprep.subr.mxu0 0.0
  %2668 = vmatpush1.msra.mxu0 0.0
  %2669 = vmatprep.subr.mxu0 0.0
  %2670 = vmatpush1.msra.mxu0 0.0
  %2671 = vmatprep.subr.mxu0 0.0
  %2672 = vmatpush1.msra.mxu0 0.0
  %2673 = vmatprep.subr.mxu0 0.0
  %2674 = vmatpush1.msra.mxu0 0.0
  %2675 = vmatprep.subr.mxu0 0.0
  %2676 = vmatpush1.msra.mxu0 0.0
  %2677 = vmatprep.subr.mxu0 0.0
  %2678 = vmatpush1.msra.mxu0 0.0
  %2679 = vmatprep.subr.mxu0 0.0
  %2680 = vmatpush1.msra.mxu0 0.0
  %2681 = vmatprep.subr.mxu0 0.0
  %2682 = vmatpush1.msra.mxu0 0.0
  %2683 = vmatprep.subr.mxu0 0.0
  %2684 = vmatpush1.msra.mxu0 0.0
  %2685 = vmatprep.subr.mxu0 0.0
  %2686 = vmatpush1.msra.mxu0 0.0
  %2687 = vmatprep.subr.mxu0 0.0
  %2688 = vmatpush1.msra.mxu0 0.0
  %2689 = vmatprep.mubr.f32.mxu0 0.0
  %2690 = vmatmul.mubr.f32.gmra.mrb[0].mxu0 %v2617
  %v2691 = vpop.f32.mrb[0].mxu0
  %v2692 = vadd.f32 %v2603, %v2691
  %v2693 = vpop.f32.mrb[0].mxu0
  %2694 = vmatprep.mubr.f32.mxu0 0.0
  %2695 = vmatmul.mubr.f32.gmra.mrb[0].mxu0 %v2620
  %v2696 = vpop.f32.mrb[0].mxu0
  %v2697 = vadd.f32 %v2608, %v2696
  %v2698 = vpop.f32.mrb[0].mxu0
  %2699 = vmatprep.mubr.f32.mxu0 0.0
  %2700 = vmatmul.mubr.f32.gmra.mrb[0].mxu0 %v2623
  %v2701 = vpop.f32.mrb[0].mxu0
  %v2702 = vadd.f32 %v2613, %v2701
  %v2703 = vpop.f32.mrb[0].mxu0
  %2704 = vdwg.mxu0
  %s2705 = scalar_lea.vmem %s10, 24
  %v2706 = vld [vmem:[%s2705] sm:$0xff]
  %v2707 = vld [vmem:[%s2705 + $0x8] sm:$0xff]
  %v2708 = vld [vmem:[%s2705 + $0x10] sm:$0x1]
  %v2710 = vsel %vm877, %v2706, 0
  %v2713 = vsel %vm877, %v2707, 0
  %v2716 = vsel %vm877, %v2708, 0
  %2718 = vmatprep.subr.mxu0 0.0
  %2719 = vmatpush1.msra.mxu0 %v2338
  %2720 = vmatprep.subr.mxu0 0.0
  %2721 = vmatpush1.msra.mxu0 0.0
  %2722 = vmatprep.subr.mxu0 0.0
  %2723 = vmatpush1.msra.mxu0 0.0
  %2724 = vmatprep.subr.mxu0 0.0
  %2725 = vmatpush1.msra.mxu0 0.0
  %2726 = vmatprep.subr.mxu0 0.0
  %2727 = vmatpush1.msra.mxu0 0.0
  %2728 = vmatprep.subr.mxu0 0.0
  %2729 = vmatpush1.msra.mxu0 0.0
  %2730 = vmatprep.subr.mxu0 0.0
  %2731 = vmatpush1.msra.mxu0 0.0
  %2732 = vmatprep.subr.mxu0 0.0
  %2733 = vmatpush1.msra.mxu0 0.0
  %2734 = vmatprep.subr.mxu0 0.0
  %2735 = vmatpush1.msra.mxu0 0.0
  %2736 = vmatprep.subr.mxu0 0.0
  %2737 = vmatpush1.msra.mxu0 0.0
  %2738 = vmatprep.subr.mxu0 0.0
  %2739 = vmatpush1.msra.mxu0 0.0
  %2740 = vmatprep.subr.mxu0 0.0
  %2741 = vmatpush1.msra.mxu0 0.0
  %2742 = vmatprep.subr.mxu0 0.0
  %2743 = vmatpush1.msra.mxu0 0.0
  %2744 = vmatprep.subr.mxu0 0.0
  %2745 = vmatpush1.msra.mxu0 0.0
  %2746 = vmatprep.subr.mxu0 0.0
  %2747 = vmatpush1.msra.mxu0 0.0
  %2748 = vmatprep.subr.mxu0 0.0
  %2749 = vmatpush1.msra.mxu0 0.0
  %2750 = vmatprep.subr.mxu0 0.0
  %2751 = vmatpush1.msra.mxu0 0.0
  %2752 = vmatprep.subr.mxu0 0.0
  %2753 = vmatpush1.msra.mxu0 0.0
  %2754 = vmatprep.subr.mxu0 0.0
  %2755 = vmatpush1.msra.mxu0 0.0
  %2756 = vmatprep.subr.mxu0 0.0
  %2757 = vmatpush1.msra.mxu0 0.0
  %2758 = vmatprep.subr.mxu0 0.0
  %2759 = vmatpush1.msra.mxu0 0.0
  %2760 = vmatprep.subr.mxu0 0.0
  %2761 = vmatpush1.msra.mxu0 0.0
  %2762 = vmatprep.subr.mxu0 0.0
  %2763 = vmatpush1.msra.mxu0 0.0
  %2764 = vmatprep.subr.mxu0 0.0
  %2765 = vmatpush1.msra.mxu0 0.0
  %2766 = vmatprep.subr.mxu0 0.0
  %2767 = vmatpush1.msra.mxu0 0.0
  %2768 = vmatprep.subr.mxu0 0.0
  %2769 = vmatpush1.msra.mxu0 0.0
  %2770 = vmatprep.subr.mxu0 0.0
  %2771 = vmatpush1.msra.mxu0 0.0
  %2772 = vmatprep.subr.mxu0 0.0
  %2773 = vmatpush1.msra.mxu0 0.0
  %2774 = vmatprep.subr.mxu0 0.0
  %2775 = vmatpush1.msra.mxu0 0.0
  %2776 = vmatprep.subr.mxu0 0.0
  %2777 = vmatpush1.msra.mxu0 0.0
  %2778 = vmatprep.subr.mxu0 0.0
  %2779 = vmatpush1.msra.mxu0 0.0
  %2780 = vmatprep.subr.mxu0 0.0
  %2781 = vmatpush1.msra.mxu0 0.0
  %2782 = vmatprep.mubr.f32.mxu0 0.0
  %2783 = vmatmul.mubr.f32.gmra.mrb[0].mxu0 %v2710
  %v2784 = vpop.f32.mrb[0].mxu0
  %v2785 = vadd.f32 0.0, %v2784
  %v2786 = vpop.f32.mrb[0].mxu0
  %2787 = vmatprep.mubr.f32.mxu0 0.0
  %2788 = vmatmul.mubr.f32.gmra.mrb[0].mxu0 %v2713
  %v2789 = vpop.f32.mrb[0].mxu0
  %v2790 = vadd.f32 0.0, %v2789
  %v2791 = vpop.f32.mrb[0].mxu0
  %2792 = vmatprep.mubr.f32.mxu0 0.0
  %2793 = vmatmul.mubr.f32.gmra.mrb[0].mxu0 %v2716
  %v2794 = vpop.f32.mrb[0].mxu0
  %v2795 = vadd.f32 0.0, %v2794
  %v2796 = vpop.f32.mrb[0].mxu0
  %2797 = vdwg.mxu0
  %s2798 = scalar_lea.vmem %s11, 64
  %v2799 = vld [vmem:[%s2798] sm:$0xff]
  %v2800 = vld [vmem:[%s2798 + $0x8] sm:$0xff]
  %v2801 = vld [vmem:[%s2798 + $0x10] sm:$0xff]
  %v2802 = vld [vmem:[%s2798 + $0x18] sm:$0xff]
  %v2803 = vld [vmem:[%s2798 + $0x20] sm:$0xff]
  %v2804 = vld [vmem:[%s2798 + $0x28] sm:$0xff]
  %v2805 = vld [vmem:[%s2798 + $0x30] sm:$0xff]
  %v2806 = vld [vmem:[%s2798 + $0x38] sm:$0xff]
  %v2808 = vsel %vm1043, %v2785, 0
  %v2811 = vsel %vm1043, %v2790, 0
  %v2814 = vsel %vm1043, %v2795, 0
  %2816 = vmatprep.subr.mxu0 0.0
  %2817 = vmatpush1.msra.mxu0 %v2799
  %2818 = vmatprep.subr.mxu0 0.0
  %2819 = vmatpush1.msra.mxu0 %v2800
  %2820 = vmatprep.subr.mxu0 0.0
  %2821 = vmatpush1.msra.mxu0 %v2801
  %2822 = vmatprep.subr.mxu0 0.0
  %2823 = vmatpush1.msra.mxu0 %v2802
  %2824 = vmatprep.subr.mxu0 0.0
  %2825 = vmatpush1.msra.mxu0 %v2803
  %2826 = vmatprep.subr.mxu0 0.0
  %2827 = vmatpush1.msra.mxu0 %v2804
  %2828 = vmatprep.subr.mxu0 0.0
  %2829 = vmatpush1.msra.mxu0 %v2805
  %2830 = vmatprep.subr.mxu0 0.0
  %2831 = vmatpush1.msra.mxu0 %v2806
  %2832 = vmatprep.subr.mxu0 0.0
  %2833 = vmatpush1.msra.mxu0 0.0
  %2834 = vmatprep.subr.mxu0 0.0
  %2835 = vmatpush1.msra.mxu0 0.0
  %2836 = vmatprep.subr.mxu0 0.0
  %2837 = vmatpush1.msra.mxu0 0.0
  %2838 = vmatprep.subr.mxu0 0.0
  %2839 = vmatpush1.msra.mxu0 0.0
  %2840 = vmatprep.subr.mxu0 0.0
  %2841 = vmatpush1.msra.mxu0 0.0
  %2842 = vmatprep.subr.mxu0 0.0
  %2843 = vmatpush1.msra.mxu0 0.0
  %2844 = vmatprep.subr.mxu0 0.0
  %2845 = vmatpush1.msra.mxu0 0.0
  %2846 = vmatprep.subr.mxu0 0.0
  %2847 = vmatpush1.msra.mxu0 0.0
  %2848 = vmatprep.subr.mxu0 0.0
  %2849 = vmatpush1.msra.mxu0 0.0
  %2850 = vmatprep.subr.mxu0 0.0
  %2851 = vmatpush1.msra.mxu0 0.0
  %2852 = vmatprep.subr.mxu0 0.0
  %2853 = vmatpush1.msra.mxu0 0.0
  %2854 = vmatprep.subr.mxu0 0.0
  %2855 = vmatpush1.msra.mxu0 0.0
  %2856 = vmatprep.subr.mxu0 0.0
  %2857 = vmatpush1.msra.mxu0 0.0
  %2858 = vmatprep.subr.mxu0 0.0
  %2859 = vmatpush1.msra.mxu0 0.0
  %2860 = vmatprep.subr.mxu0 0.0
  %2861 = vmatpush1.msra.mxu0 0.0
  %2862 = vmatprep.subr.mxu0 0.0
  %2863 = vmatpush1.msra.mxu0 0.0
  %2864 = vmatprep.subr.mxu0 0.0
  %2865 = vmatpush1.msra.mxu0 0.0
  %2866 = vmatprep.subr.mxu0 0.0
  %2867 = vmatpush1.msra.mxu0 0.0
  %2868 = vmatprep.subr.mxu0 0.0
  %2869 = vmatpush1.msra.mxu0 0.0
  %2870 = vmatprep.subr.mxu0 0.0
  %2871 = vmatpush1.msra.mxu0 0.0
  %2872 = vmatprep.subr.mxu0 0.0
  %2873 = vmatpush1.msra.mxu0 0.0
  %2874 = vmatprep.subr.mxu0 0.0
  %2875 = vmatpush1.msra.mxu0 0.0
  %2876 = vmatprep.subr.mxu0 0.0
  %2877 = vmatpush1.msra.mxu0 0.0
  %2878 = vmatprep.subr.mxu0 0.0
  %2879 = vmatpush1.msra.mxu0 0.0
  %2880 = vmatprep.mubr.f32.mxu0 0.0
  %2881 = vmatmul.mubr.f32.gmra.mrb[0].mxu0 %v2808
  %v2882 = vpop.f32.mrb[0].mxu0
  %v2883 = vadd.f32 0.0, %v2882
  %v2884 = vpop.f32.mrb[0].mxu0
  %2885 = vmatprep.mubr.f32.mxu0 0.0
  %2886 = vmatmul.mubr.f32.gmra.mrb[0].mxu0 %v2811
  %v2887 = vpop.f32.mrb[0].mxu0
  %v2888 = vadd.f32 0.0, %v2887
  %v2889 = vpop.f32.mrb[0].mxu0
  %2890 = vmatprep.mubr.f32.mxu0 0.0
  %2891 = vmatmul.mubr.f32.gmra.mrb[0].mxu0 %v2814
  %v2892 = vpop.f32.mrb[0].mxu0
  %v2893 = vadd.f32 0.0, %v2892
  %v2894 = vpop.f32.mrb[0].mxu0
  %2895 = vdwg.mxu0
  %v2896 = vadd.f32 %v2692, %v2883
  %v2897 = vadd.f32 %v2697, %v2888
  %v2898 = vadd.f32 %v2702, %v2893
  %2899 = vmatprep.subr.mxu0 0.0
  %2900 = vmatpush1.msra.mxu0 %v875
  %2901 = vmatprep.subr.mxu0 0.0
  %2902 = vmatpush1.msra.mxu0 0.0
  %2903 = vmatprep.subr.mxu0 0.0
  %2904 = vmatpush1.msra.mxu0 0.0
  %2905 = vmatprep.subr.mxu0 0.0
  %2906 = vmatpush1.msra.mxu0 0.0
  %2907 = vmatprep.subr.mxu0 0.0
  %2908 = vmatpush1.msra.mxu0 0.0
  %2909 = vmatprep.subr.mxu0 0.0
  %2910 = vmatpush1.msra.mxu0 0.0
  %2911 = vmatprep.subr.mxu0 0.0
  %2912 = vmatpush1.msra.mxu0 0.0
  %2913 = vmatprep.subr.mxu0 0.0
  %2914 = vmatpush1.msra.mxu0 0.0
  %2915 = vmatprep.subr.mxu0 0.0
  %2916 = vmatpush1.msra.mxu0 0.0
  %2917 = vmatprep.subr.mxu0 0.0
  %2918 = vmatpush1.msra.mxu0 0.0
  %2919 = vmatprep.subr.mxu0 0.0
  %2920 = vmatpush1.msra.mxu0 0.0
  %2921 = vmatprep.subr.mxu0 0.0
  %2922 = vmatpush1.msra.mxu0 0.0
  %2923 = vmatprep.subr.mxu0 0.0
  %2924 = vmatpush1.msra.mxu0 0.0
  %2925 = vmatprep.subr.mxu0 0.0
  %2926 = vmatpush1.msra.mxu0 0.0
  %2927 = vmatprep.subr.mxu0 0.0
  %2928 = vmatpush1.msra.mxu0 0.0
  %2929 = vmatprep.subr.mxu0 0.0
  %2930 = vmatpush1.msra.mxu0 0.0
  %2931 = vmatprep.subr.mxu0 0.0
  %2932 = vmatpush1.msra.mxu0 0.0
  %2933 = vmatprep.subr.mxu0 0.0
  %2934 = vmatpush1.msra.mxu0 0.0
  %2935 = vmatprep.subr.mxu0 0.0
  %2936 = vmatpush1.msra.mxu0 0.0
  %2937 = vmatprep.subr.mxu0 0.0
  %2938 = vmatpush1.msra.mxu0 0.0
  %2939 = vmatprep.subr.mxu0 0.0
  %2940 = vmatpush1.msra.mxu0 0.0
  %2941 = vmatprep.subr.mxu0 0.0
  %2942 = vmatpush1.msra.mxu0 0.0
  %2943 = vmatprep.subr.mxu0 0.0
  %2944 = vmatpush1.msra.mxu0 0.0
  %2945 = vmatprep.subr.mxu0 0.0
  %2946 = vmatpush1.msra.mxu0 0.0
  %2947 = vmatprep.subr.mxu0 0.0
  %2948 = vmatpush1.msra.mxu0 0.0
  %2949 = vmatprep.subr.mxu0 0.0
  %2950 = vmatpush1.msra.mxu0 0.0
  %2951 = vmatprep.subr.mxu0 0.0
  %2952 = vmatpush1.msra.mxu0 0.0
  %2953 = vmatprep.subr.mxu0 0.0
  %2954 = vmatpush1.msra.mxu0 0.0
  %2955 = vmatprep.subr.mxu0 0.0
  %2956 = vmatpush1.msra.mxu0 0.0
  %2957 = vmatprep.subr.mxu0 0.0
  %2958 = vmatpush1.msra.mxu0 0.0
  %2959 = vmatprep.subr.mxu0 0.0
  %2960 = vmatpush1.msra.mxu0 0.0
  %2961 = vmatprep.subr.mxu0 0.0
  %2962 = vmatpush1.msra.mxu0 0.0
  %2963 = vmatprep.mubr.f32.mxu0 0.0
  %2964 = vmatmul.mubr.f32.gmra.mrb[0].mxu0 %v2710
  %v2965 = vpop.f32.mrb[0].mxu0
  %v2966 = vadd.f32 0.0, %v2965
  %v2967 = vpop.f32.mrb[0].mxu0
  %2968 = vmatprep.mubr.f32.mxu0 0.0
  %2969 = vmatmul.mubr.f32.gmra.mrb[0].mxu0 %v2713
  %v2970 = vpop.f32.mrb[0].mxu0
  %v2971 = vadd.f32 0.0, %v2970
  %v2972 = vpop.f32.mrb[0].mxu0
  %2973 = vmatprep.mubr.f32.mxu0 0.0
  %2974 = vmatmul.mubr.f32.gmra.mrb[0].mxu0 %v2716
  %v2975 = vpop.f32.mrb[0].mxu0
  %v2976 = vadd.f32 0.0, %v2975
  %v2977 = vpop.f32.mrb[0].mxu0
  %2978 = vdwg.mxu0
  %s2979 = scalar_lea.vmem %s12, 64
  %v2980 = vld [vmem:[%s2979] sm:$0xff]
  %v2981 = vld [vmem:[%s2979 + $0x8] sm:$0xff]
  %v2982 = vld [vmem:[%s2979 + $0x10] sm:$0xff]
  %v2983 = vld [vmem:[%s2979 + $0x18] sm:$0xff]
  %v2984 = vld [vmem:[%s2979 + $0x20] sm:$0xff]
  %v2985 = vld [vmem:[%s2979 + $0x28] sm:$0xff]
  %v2986 = vld [vmem:[%s2979 + $0x30] sm:$0xff]
  %v2987 = vld [vmem:[%s2979 + $0x38] sm:$0xff]
  %v2989 = vsel %vm1043, %v2966, 0
  %v2992 = vsel %vm1043, %v2971, 0
  %v2995 = vsel %vm1043, %v2976, 0
  %2997 = vmatprep.subr.mxu0 0.0
  %2998 = vmatpush1.msra.mxu0 %v2980
  %2999 = vmatprep.subr.mxu0 0.0
  %3000 = vmatpush1.msra.mxu0 %v2981
  %3001 = vmatprep.subr.mxu0 0.0
  %3002 = vmatpush1.msra.mxu0 %v2982
  %3003 = vmatprep.subr.mxu0 0.0
  %3004 = vmatpush1.msra.mxu0 %v2983
  %3005 = vmatprep.subr.mxu0 0.0
  %3006 = vmatpush1.msra.mxu0 %v2984
  %3007 = vmatprep.subr.mxu0 0.0
  %3008 = vmatpush1.msra.mxu0 %v2985
  %3009 = vmatprep.subr.mxu0 0.0
  %3010 = vmatpush1.msra.mxu0 %v2986
  %3011 = vmatprep.subr.mxu0 0.0
  %3012 = vmatpush1.msra.mxu0 %v2987
  %3013 = vmatprep.subr.mxu0 0.0
  %3014 = vmatpush1.msra.mxu0 0.0
  %3015 = vmatprep.subr.mxu0 0.0
  %3016 = vmatpush1.msra.mxu0 0.0
  %3017 = vmatprep.subr.mxu0 0.0
  %3018 = vmatpush1.msra.mxu0 0.0
  %3019 = vmatprep.subr.mxu0 0.0
  %3020 = vmatpush1.msra.mxu0 0.0
  %3021 = vmatprep.subr.mxu0 0.0
  %3022 = vmatpush1.msra.mxu0 0.0
  %3023 = vmatprep.subr.mxu0 0.0
  %3024 = vmatpush1.msra.mxu0 0.0
  %3025 = vmatprep.subr.mxu0 0.0
  %3026 = vmatpush1.msra.mxu0 0.0
  %3027 = vmatprep.subr.mxu0 0.0
  %3028 = vmatpush1.msra.mxu0 0.0
  %3029 = vmatprep.subr.mxu0 0.0
  %3030 = vmatpush1.msra.mxu0 0.0
  %3031 = vmatprep.subr.mxu0 0.0
  %3032 = vmatpush1.msra.mxu0 0.0
  %3033 = vmatprep.subr.mxu0 0.0
  %3034 = vmatpush1.msra.mxu0 0.0
  %3035 = vmatprep.subr.mxu0 0.0
  %3036 = vmatpush1.msra.mxu0 0.0
  %3037 = vmatprep.subr.mxu0 0.0
  %3038 = vmatpush1.msra.mxu0 0.0
  %3039 = vmatprep.subr.mxu0 0.0
  %3040 = vmatpush1.msra.mxu0 0.0
  %3041 = vmatprep.subr.mxu0 0.0
  %3042 = vmatpush1.msra.mxu0 0.0
  %3043 = vmatprep.subr.mxu0 0.0
  %3044 = vmatpush1.msra.mxu0 0.0
  %3045 = vmatprep.subr.mxu0 0.0
  %3046 = vmatpush1.msra.mxu0 0.0
  %3047 = vmatprep.subr.mxu0 0.0
  %3048 = vmatpush1.msra.mxu0 0.0
  %3049 = vmatprep.subr.mxu0 0.0
  %3050 = vmatpush1.msra.mxu0 0.0
  %3051 = vmatprep.subr.mxu0 0.0
  %3052 = vmatpush1.msra.mxu0 0.0
  %3053 = vmatprep.subr.mxu0 0.0
  %3054 = vmatpush1.msra.mxu0 0.0
  %3055 = vmatprep.subr.mxu0 0.0
  %3056 = vmatpush1.msra.mxu0 0.0
  %3057 = vmatprep.subr.mxu0 0.0
  %3058 = vmatpush1.msra.mxu0 0.0
  %3059 = vmatprep.subr.mxu0 0.0
  %3060 = vmatpush1.msra.mxu0 0.0
  %3061 = vmatprep.mubr.f32.mxu0 0.0
  %3062 = vmatmul.mubr.f32.gmra.mrb[0].mxu0 %v2989
  %v3063 = vpop.f32.mrb[0].mxu0
  %v3064 = vadd.f32 0.0, %v3063
  %v3065 = vpop.f32.mrb[0].mxu0
  %3066 = vmatprep.mubr.f32.mxu0 0.0
  %3067 = vmatmul.mubr.f32.gmra.mrb[0].mxu0 %v2992
  %v3068 = vpop.f32.mrb[0].mxu0
  %v3069 = vadd.f32 0.0, %v3068
  %v3070 = vpop.f32.mrb[0].mxu0
  %3071 = vmatprep.mubr.f32.mxu0 0.0
  %3072 = vmatmul.mubr.f32.gmra.mrb[0].mxu0 %v2995
  %v3073 = vpop.f32.mrb[0].mxu0
  %v3074 = vadd.f32 0.0, %v3073
  %v3075 = vpop.f32.mrb[0].mxu0
  %3076 = vdwg.mxu0
  %v3077 = vadd.f32 %v2896, %v3064
  %v3078 = vadd.f32 %v2897, %v3069
  %v3079 = vadd.f32 %v2898, %v3074
  %s3080 = scalar_lea.vmem %s10, 48
  %v3081 = vld [vmem:[%s3080] sm:$0xff]
  %v3082 = vld [vmem:[%s3080 + $0x8] sm:$0xff]
  %v3083 = vld [vmem:[%s3080 + $0x10] sm:$0x1]
  %v3085 = vsel %vm877, %v3081, 0
  %v3088 = vsel %vm877, %v3082, 0
  %v3091 = vsel %vm877, %v3083, 0
  %3093 = vmatprep.subr.mxu0 0.0
  %3094 = vmatpush1.msra.mxu0 %v2338
  %3095 = vmatprep.subr.mxu0 0.0
  %3096 = vmatpush1.msra.mxu0 0.0
  %3097 = vmatprep.subr.mxu0 0.0
  %3098 = vmatpush1.msra.mxu0 0.0
  %3099 = vmatprep.subr.mxu0 0.0
  %3100 = vmatpush1.msra.mxu0 0.0
  %3101 = vmatprep.subr.mxu0 0.0
  %3102 = vmatpush1.msra.mxu0 0.0
  %3103 = vmatprep.subr.mxu0 0.0
  %3104 = vmatpush1.msra.mxu0 0.0
  %3105 = vmatprep.subr.mxu0 0.0
  %3106 = vmatpush1.msra.mxu0 0.0
  %3107 = vmatprep.subr.mxu0 0.0
  %3108 = vmatpush1.msra.mxu0 0.0
  %3109 = vmatprep.subr.mxu0 0.0
  %3110 = vmatpush1.msra.mxu0 0.0
  %3111 = vmatprep.subr.mxu0 0.0
  %3112 = vmatpush1.msra.mxu0 0.0
  %3113 = vmatprep.subr.mxu0 0.0
  %3114 = vmatpush1.msra.mxu0 0.0
  %3115 = vmatprep.subr.mxu0 0.0
  %3116 = vmatpush1.msra.mxu0 0.0
  %3117 = vmatprep.subr.mxu0 0.0
  %3118 = vmatpush1.msra.mxu0 0.0
  %3119 = vmatprep.subr.mxu0 0.0
  %3120 = vmatpush1.msra.mxu0 0.0
  %3121 = vmatprep.subr.mxu0 0.0
  %3122 = vmatpush1.msra.mxu0 0.0
  %3123 = vmatprep.subr.mxu0 0.0
  %3124 = vmatpush1.msra.mxu0 0.0
  %3125 = vmatprep.subr.mxu0 0.0
  %3126 = vmatpush1.msra.mxu0 0.0
  %3127 = vmatprep.subr.mxu0 0.0
  %3128 = vmatpush1.msra.mxu0 0.0
  %3129 = vmatprep.subr.mxu0 0.0
  %3130 = vmatpush1.msra.mxu0 0.0
  %3131 = vmatprep.subr.mxu0 0.0
  %3132 = vmatpush1.msra.mxu0 0.0
  %3133 = vmatprep.subr.mxu0 0.0
  %3134 = vmatpush1.msra.mxu0 0.0
  %3135 = vmatprep.subr.mxu0 0.0
  %3136 = vmatpush1.msra.mxu0 0.0
  %3137 = vmatprep.subr.mxu0 0.0
  %3138 = vmatpush1.msra.mxu0 0.0
  %3139 = vmatprep.subr.mxu0 0.0
  %3140 = vmatpush1.msra.mxu0 0.0
  %3141 = vmatprep.subr.mxu0 0.0
  %3142 = vmatpush1.msra.mxu0 0.0
  %3143 = vmatprep.subr.mxu0 0.0
  %3144 = vmatpush1.msra.mxu0 0.0
  %3145 = vmatprep.subr.mxu0 0.0
  %3146 = vmatpush1.msra.mxu0 0.0
  %3147 = vmatprep.subr.mxu0 0.0
  %3148 = vmatpush1.msra.mxu0 0.0
  %3149 = vmatprep.subr.mxu0 0.0
  %3150 = vmatpush1.msra.mxu0 0.0
  %3151 = vmatprep.subr.mxu0 0.0
  %3152 = vmatpush1.msra.mxu0 0.0
  %3153 = vmatprep.subr.mxu0 0.0
  %3154 = vmatpush1.msra.mxu0 0.0
  %3155 = vmatprep.subr.mxu0 0.0
  %3156 = vmatpush1.msra.mxu0 0.0
  %3157 = vmatprep.mubr.f32.mxu0 0.0
  %3158 = vmatmul.mubr.f32.gmra.mrb[0].mxu0 %v3085
  %v3159 = vpop.f32.mrb[0].mxu0
  %v3160 = vadd.f32 0.0, %v3159
  %v3161 = vpop.f32.mrb[0].mxu0
  %3162 = vmatprep.mubr.f32.mxu0 0.0
  %3163 = vmatmul.mubr.f32.gmra.mrb[0].mxu0 %v3088
  %v3164 = vpop.f32.mrb[0].mxu0
  %v3165 = vadd.f32 0.0, %v3164
  %v3166 = vpop.f32.mrb[0].mxu0
  %3167 = vmatprep.mubr.f32.mxu0 0.0
  %3168 = vmatmul.mubr.f32.gmra.mrb[0].mxu0 %v3091
  %v3169 = vpop.f32.mrb[0].mxu0
  %v3170 = vadd.f32 0.0, %v3169
  %v3171 = vpop.f32.mrb[0].mxu0
  %3172 = vdwg.mxu0
  %s3173 = scalar_lea.vmem %s11, 128
  %v3174 = vld [vmem:[%s3173] sm:$0xff]
  %v3175 = vld [vmem:[%s3173 + $0x8] sm:$0xff]
  %v3176 = vld [vmem:[%s3173 + $0x10] sm:$0xff]
  %v3177 = vld [vmem:[%s3173 + $0x18] sm:$0xff]
  %v3178 = vld [vmem:[%s3173 + $0x20] sm:$0xff]
  %v3179 = vld [vmem:[%s3173 + $0x28] sm:$0xff]
  %v3180 = vld [vmem:[%s3173 + $0x30] sm:$0xff]
  %v3181 = vld [vmem:[%s3173 + $0x38] sm:$0xff]
  %v3183 = vsel %vm1043, %v3160, 0
  %v3186 = vsel %vm1043, %v3165, 0
  %v3189 = vsel %vm1043, %v3170, 0
  %3191 = vmatprep.subr.mxu0 0.0
  %3192 = vmatpush1.msra.mxu0 %v3174
  %3193 = vmatprep.subr.mxu0 0.0
  %3194 = vmatpush1.msra.mxu0 %v3175
  %3195 = vmatprep.subr.mxu0 0.0
  %3196 = vmatpush1.msra.mxu0 %v3176
  %3197 = vmatprep.subr.mxu0 0.0
  %3198 = vmatpush1.msra.mxu0 %v3177
  %3199 = vmatprep.subr.mxu0 0.0
  %3200 = vmatpush1.msra.mxu0 %v3178
  %3201 = vmatprep.subr.mxu0 0.0
  %3202 = vmatpush1.msra.mxu0 %v3179
  %3203 = vmatprep.subr.mxu0 0.0
  %3204 = vmatpush1.msra.mxu0 %v3180
  %3205 = vmatprep.subr.mxu0 0.0
  %3206 = vmatpush1.msra.mxu0 %v3181
  %3207 = vmatprep.subr.mxu0 0.0
  %3208 = vmatpush1.msra.mxu0 0.0
  %3209 = vmatprep.subr.mxu0 0.0
  %3210 = vmatpush1.msra.mxu0 0.0
  %3211 = vmatprep.subr.mxu0 0.0
  %3212 = vmatpush1.msra.mxu0 0.0
  %3213 = vmatprep.subr.mxu0 0.0
  %3214 = vmatpush1.msra.mxu0 0.0
  %3215 = vmatprep.subr.mxu0 0.0
  %3216 = vmatpush1.msra.mxu0 0.0
  %3217 = vmatprep.subr.mxu0 0.0
  %3218 = vmatpush1.msra.mxu0 0.0
  %3219 = vmatprep.subr.mxu0 0.0
  %3220 = vmatpush1.msra.mxu0 0.0
  %3221 = vmatprep.subr.mxu0 0.0
  %3222 = vmatpush1.msra.mxu0 0.0
  %3223 = vmatprep.subr.mxu0 0.0
  %3224 = vmatpush1.msra.mxu0 0.0
  %3225 = vmatprep.subr.mxu0 0.0
  %3226 = vmatpush1.msra.mxu0 0.0
  %3227 = vmatprep.subr.mxu0 0.0
  %3228 = vmatpush1.msra.mxu0 0.0
  %3229 = vmatprep.subr.mxu0 0.0
  %3230 = vmatpush1.msra.mxu0 0.0
  %3231 = vmatprep.subr.mxu0 0.0
  %3232 = vmatpush1.msra.mxu0 0.0
  %3233 = vmatprep.subr.mxu0 0.0
  %3234 = vmatpush1.msra.mxu0 0.0
  %3235 = vmatprep.subr.mxu0 0.0
  %3236 = vmatpush1.msra.mxu0 0.0
  %3237 = vmatprep.subr.mxu0 0.0
  %3238 = vmatpush1.msra.mxu0 0.0
  %3239 = vmatprep.subr.mxu0 0.0
  %3240 = vmatpush1.msra.mxu0 0.0
  %3241 = vmatprep.subr.mxu0 0.0
  %3242 = vmatpush1.msra.mxu0 0.0
  %3243 = vmatprep.subr.mxu0 0.0
  %3244 = vmatpush1.msra.mxu0 0.0
  %3245 = vmatprep.subr.mxu0 0.0
  %3246 = vmatpush1.msra.mxu0 0.0
  %3247 = vmatprep.subr.mxu0 0.0
  %3248 = vmatpush1.msra.mxu0 0.0
  %3249 = vmatprep.subr.mxu0 0.0
  %3250 = vmatpush1.msra.mxu0 0.0
  %3251 = vmatprep.subr.mxu0 0.0
  %3252 = vmatpush1.msra.mxu0 0.0
  %3253 = vmatprep.subr.mxu0 0.0
  %3254 = vmatpush1.msra.mxu0 0.0
  %3255 = vmatprep.mubr.f32.mxu0 0.0
  %3256 = vmatmul.mubr.f32.gmra.mrb[0].mxu0 %v3183
  %v3257 = vpop.f32.mrb[0].mxu0
  %v3258 = vadd.f32 0.0, %v3257
  %v3259 = vpop.f32.mrb[0].mxu0
  %3260 = vmatprep.mubr.f32.mxu0 0.0
  %3261 = vmatmul.mubr.f32.gmra.mrb[0].mxu0 %v3186
  %v3262 = vpop.f32.mrb[0].mxu0
  %v3263 = vadd.f32 0.0, %v3262
  %v3264 = vpop.f32.mrb[0].mxu0
  %3265 = vmatprep.mubr.f32.mxu0 0.0
  %3266 = vmatmul.mubr.f32.gmra.mrb[0].mxu0 %v3189
  %v3267 = vpop.f32.mrb[0].mxu0
  %v3268 = vadd.f32 0.0, %v3267
  %v3269 = vpop.f32.mrb[0].mxu0
  %3270 = vdwg.mxu0
  %v3271 = vadd.f32 %v3077, %v3258
  %v3272 = vadd.f32 %v3078, %v3263
  %v3273 = vadd.f32 %v3079, %v3268
  %3274 = vmatprep.subr.mxu0 0.0
  %3275 = vmatpush1.msra.mxu0 %v875
  %3276 = vmatprep.subr.mxu0 0.0
  %3277 = vmatpush1.msra.mxu0 0.0
  %3278 = vmatprep.subr.mxu0 0.0
  %3279 = vmatpush1.msra.mxu0 0.0
  %3280 = vmatprep.subr.mxu0 0.0
  %3281 = vmatpush1.msra.mxu0 0.0
  %3282 = vmatprep.subr.mxu0 0.0
  %3283 = vmatpush1.msra.mxu0 0.0
  %3284 = vmatprep.subr.mxu0 0.0
  %3285 = vmatpush1.msra.mxu0 0.0
  %3286 = vmatprep.subr.mxu0 0.0
  %3287 = vmatpush1.msra.mxu0 0.0
  %3288 = vmatprep.subr.mxu0 0.0
  %3289 = vmatpush1.msra.mxu0 0.0
  %3290 = vmatprep.subr.mxu0 0.0
  %3291 = vmatpush1.msra.mxu0 0.0
  %3292 = vmatprep.subr.mxu0 0.0
  %3293 = vmatpush1.msra.mxu0 0.0
  %3294 = vmatprep.subr.mxu0 0.0
  %3295 = vmatpush1.msra.mxu0 0.0
  %3296 = vmatprep.subr.mxu0 0.0
  %3297 = vmatpush1.msra.mxu0 0.0
  %3298 = vmatprep.subr.mxu0 0.0
  %3299 = vmatpush1.msra.mxu0 0.0
  %3300 = vmatprep.subr.mxu0 0.0
  %3301 = vmatpush1.msra.mxu0 0.0
  %3302 = vmatprep.subr.mxu0 0.0
  %3303 = vmatpush1.msra.mxu0 0.0
  %3304 = vmatprep.subr.mxu0 0.0
  %3305 = vmatpush1.msra.mxu0 0.0
  %3306 = vmatprep.subr.mxu0 0.0
  %3307 = vmatpush1.msra.mxu0 0.0
  %3308 = vmatprep.subr.mxu0 0.0
  %3309 = vmatpush1.msra.mxu0 0.0
  %3310 = vmatprep.subr.mxu0 0.0
  %3311 = vmatpush1.msra.mxu0 0.0
  %3312 = vmatprep.subr.mxu0 0.0
  %3313 = vmatpush1.msra.mxu0 0.0
  %3314 = vmatprep.subr.mxu0 0.0
  %3315 = vmatpush1.msra.mxu0 0.0
  %3316 = vmatprep.subr.mxu0 0.0
  %3317 = vmatpush1.msra.mxu0 0.0
  %3318 = vmatprep.subr.mxu0 0.0
  %3319 = vmatpush1.msra.mxu0 0.0
  %3320 = vmatprep.subr.mxu0 0.0
  %3321 = vmatpush1.msra.mxu0 0.0
  %3322 = vmatprep.subr.mxu0 0.0
  %3323 = vmatpush1.msra.mxu0 0.0
  %3324 = vmatprep.subr.mxu0 0.0
  %3325 = vmatpush1.msra.mxu0 0.0
  %3326 = vmatprep.subr.mxu0 0.0
  %3327 = vmatpush1.msra.mxu0 0.0
  %3328 = vmatprep.subr.mxu0 0.0
  %3329 = vmatpush1.msra.mxu0 0.0
  %3330 = vmatprep.subr.mxu0 0.0
  %3331 = vmatpush1.msra.mxu0 0.0
  %3332 = vmatprep.subr.mxu0 0.0
  %3333 = vmatpush1.msra.mxu0 0.0
  %3334 = vmatprep.subr.mxu0 0.0
  %3335 = vmatpush1.msra.mxu0 0.0
  %3336 = vmatprep.subr.mxu0 0.0
  %3337 = vmatpush1.msra.mxu0 0.0
  %3338 = vmatprep.mubr.f32.mxu0 0.0
  %3339 = vmatmul.mubr.f32.gmra.mrb[0].mxu0 %v3085
  %v3340 = vpop.f32.mrb[0].mxu0
  %v3341 = vadd.f32 0.0, %v3340
  %v3342 = vpop.f32.mrb[0].mxu0
  %3343 = vmatprep.mubr.f32.mxu0 0.0
  %3344 = vmatmul.mubr.f32.gmra.mrb[0].mxu0 %v3088
  %v3345 = vpop.f32.mrb[0].mxu0
  %v3346 = vadd.f32 0.0, %v3345
  %v3347 = vpop.f32.mrb[0].mxu0
  %3348 = vmatprep.mubr.f32.mxu0 0.0
  %3349 = vmatmul.mubr.f32.gmra.mrb[0].mxu0 %v3091
  %v3350 = vpop.f32.mrb[0].mxu0
  %v3351 = vadd.f32 0.0, %v3350
  %v3352 = vpop.f32.mrb[0].mxu0
  %3353 = vdwg.mxu0
  %s3354 = scalar_lea.vmem %s12, 128
  %v3355 = vld [vmem:[%s3354] sm:$0xff]
  %v3356 = vld [vmem:[%s3354 + $0x8] sm:$0xff]
  %v3357 = vld [vmem:[%s3354 + $0x10] sm:$0xff]
  %v3358 = vld [vmem:[%s3354 + $0x18] sm:$0xff]
  %v3359 = vld [vmem:[%s3354 + $0x20] sm:$0xff]
  %v3360 = vld [vmem:[%s3354 + $0x28] sm:$0xff]
  %v3361 = vld [vmem:[%s3354 + $0x30] sm:$0xff]
  %v3362 = vld [vmem:[%s3354 + $0x38] sm:$0xff]
  %v3364 = vsel %vm1043, %v3341, 0
  %v3367 = vsel %vm1043, %v3346, 0
  %v3370 = vsel %vm1043, %v3351, 0
  %3372 = vmatprep.subr.mxu0 0.0
  %3373 = vmatpush1.msra.mxu0 %v3355
  %3374 = vmatprep.subr.mxu0 0.0
  %3375 = vmatpush1.msra.mxu0 %v3356
  %3376 = vmatprep.subr.mxu0 0.0
  %3377 = vmatpush1.msra.mxu0 %v3357
  %3378 = vmatprep.subr.mxu0 0.0
  %3379 = vmatpush1.msra.mxu0 %v3358
  %3380 = vmatprep.subr.mxu0 0.0
  %3381 = vmatpush1.msra.mxu0 %v3359
  %3382 = vmatprep.subr.mxu0 0.0
  %3383 = vmatpush1.msra.mxu0 %v3360
  %3384 = vmatprep.subr.mxu0 0.0
  %3385 = vmatpush1.msra.mxu0 %v3361
  %3386 = vmatprep.subr.mxu0 0.0
  %3387 = vmatpush1.msra.mxu0 %v3362
  %3388 = vmatprep.subr.mxu0 0.0
  %3389 = vmatpush1.msra.mxu0 0.0
  %3390 = vmatprep.subr.mxu0 0.0
  %3391 = vmatpush1.msra.mxu0 0.0
  %3392 = vmatprep.subr.mxu0 0.0
  %3393 = vmatpush1.msra.mxu0 0.0
  %3394 = vmatprep.subr.mxu0 0.0
  %3395 = vmatpush1.msra.mxu0 0.0
  %3396 = vmatprep.subr.mxu0 0.0
  %3397 = vmatpush1.msra.mxu0 0.0
  %3398 = vmatprep.subr.mxu0 0.0
  %3399 = vmatpush1.msra.mxu0 0.0
  %3400 = vmatprep.subr.mxu0 0.0
  %3401 = vmatpush1.msra.mxu0 0.0
  %3402 = vmatprep.subr.mxu0 0.0
  %3403 = vmatpush1.msra.mxu0 0.0
  %3404 = vmatprep.subr.mxu0 0.0
  %3405 = vmatpush1.msra.mxu0 0.0
  %3406 = vmatprep.subr.mxu0 0.0
  %3407 = vmatpush1.msra.mxu0 0.0
  %3408 = vmatprep.subr.mxu0 0.0
  %3409 = vmatpush1.msra.mxu0 0.0
  %3410 = vmatprep.subr.mxu0 0.0
  %3411 = vmatpush1.msra.mxu0 0.0
  %3412 = vmatprep.subr.mxu0 0.0
  %3413 = vmatpush1.msra.mxu0 0.0
  %3414 = vmatprep.subr.mxu0 0.0
  %3415 = vmatpush1.msra.mxu0 0.0
  %3416 = vmatprep.subr.mxu0 0.0
  %3417 = vmatpush1.msra.mxu0 0.0
  %3418 = vmatprep.subr.mxu0 0.0
  %3419 = vmatpush1.msra.mxu0 0.0
  %3420 = vmatprep.subr.mxu0 0.0
  %3421 = vmatpush1.msra.mxu0 0.0
  %3422 = vmatprep.subr.mxu0 0.0
  %3423 = vmatpush1.msra.mxu0 0.0
  %3424 = vmatprep.subr.mxu0 0.0
  %3425 = vmatpush1.msra.mxu0 0.0
  %3426 = vmatprep.subr.mxu0 0.0
  %3427 = vmatpush1.msra.mxu0 0.0
  %3428 = vmatprep.subr.mxu0 0.0
  %3429 = vmatpush1.msra.mxu0 0.0
  %3430 = vmatprep.subr.mxu0 0.0
  %3431 = vmatpush1.msra.mxu0 0.0
  %3432 = vmatprep.subr.mxu0 0.0
  %3433 = vmatpush1.msra.mxu0 0.0
  %3434 = vmatprep.subr.mxu0 0.0
  %3435 = vmatpush1.msra.mxu0 0.0
  %3436 = vmatprep.mubr.f32.mxu0 0.0
  %3437 = vmatmul.mubr.f32.gmra.mrb[0].mxu0 %v3364
  %v3438 = vpop.f32.mrb[0].mxu0
  %v3439 = vadd.f32 0.0, %v3438
  %v3440 = vpop.f32.mrb[0].mxu0
  %3441 = vmatprep.mubr.f32.mxu0 0.0
  %3442 = vmatmul.mubr.f32.gmra.mrb[0].mxu0 %v3367
  %v3443 = vpop.f32.mrb[0].mxu0
  %v3444 = vadd.f32 0.0, %v3443
  %v3445 = vpop.f32.mrb[0].mxu0
  %3446 = vmatprep.mubr.f32.mxu0 0.0
  %3447 = vmatmul.mubr.f32.gmra.mrb[0].mxu0 %v3370
  %v3448 = vpop.f32.mrb[0].mxu0
  %v3449 = vadd.f32 0.0, %v3448
  %v3450 = vpop.f32.mrb[0].mxu0
  %3451 = vdwg.mxu0
  %v3452 = vadd.f32 %v3271, %v3439
  %v3453 = vadd.f32 %v3272, %v3444
  %v3454 = vadd.f32 %v3273, %v3449
  %s3455 = scalar_lea.vmem %s10, 72
  %v3456 = vld [vmem:[%s3455] sm:$0xff]
  %v3457 = vld [vmem:[%s3455 + $0x8] sm:$0xff]
  %v3458 = vld [vmem:[%s3455 + $0x10] sm:$0x1]
  %v3460 = vsel %vm877, %v3456, 0
  %v3463 = vsel %vm877, %v3457, 0
  %v3466 = vsel %vm877, %v3458, 0
  %3468 = vmatprep.subr.mxu0 0.0
  %3469 = vmatpush1.msra.mxu0 %v2338
  %3470 = vmatprep.subr.mxu0 0.0
  %3471 = vmatpush1.msra.mxu0 0.0
  %3472 = vmatprep.subr.mxu0 0.0
  %3473 = vmatpush1.msra.mxu0 0.0
  %3474 = vmatprep.subr.mxu0 0.0
  %3475 = vmatpush1.msra.mxu0 0.0
  %3476 = vmatprep.subr.mxu0 0.0
  %3477 = vmatpush1.msra.mxu0 0.0
  %3478 = vmatprep.subr.mxu0 0.0
  %3479 = vmatpush1.msra.mxu0 0.0
  %3480 = vmatprep.subr.mxu0 0.0
  %3481 = vmatpush1.msra.mxu0 0.0
  %3482 = vmatprep.subr.mxu0 0.0
  %3483 = vmatpush1.msra.mxu0 0.0
  %3484 = vmatprep.subr.mxu0 0.0
  %3485 = vmatpush1.msra.mxu0 0.0
  %3486 = vmatprep.subr.mxu0 0.0
  %3487 = vmatpush1.msra.mxu0 0.0
  %3488 = vmatprep.subr.mxu0 0.0
  %3489 = vmatpush1.msra.mxu0 0.0
  %3490 = vmatprep.subr.mxu0 0.0
  %3491 = vmatpush1.msra.mxu0 0.0
  %3492 = vmatprep.subr.mxu0 0.0
  %3493 = vmatpush1.msra.mxu0 0.0
  %3494 = vmatprep.subr.mxu0 0.0
  %3495 = vmatpush1.msra.mxu0 0.0
  %3496 = vmatprep.subr.mxu0 0.0
  %3497 = vmatpush1.msra.mxu0 0.0
  %3498 = vmatprep.subr.mxu0 0.0
  %3499 = vmatpush1.msra.mxu0 0.0
  %3500 = vmatprep.subr.mxu0 0.0
  %3501 = vmatpush1.msra.mxu0 0.0
  %3502 = vmatprep.subr.mxu0 0.0
  %3503 = vmatpush1.msra.mxu0 0.0
  %3504 = vmatprep.subr.mxu0 0.0
  %3505 = vmatpush1.msra.mxu0 0.0
  %3506 = vmatprep.subr.mxu0 0.0
  %3507 = vmatpush1.msra.mxu0 0.0
  %3508 = vmatprep.subr.mxu0 0.0
  %3509 = vmatpush1.msra.mxu0 0.0
  %3510 = vmatprep.subr.mxu0 0.0
  %3511 = vmatpush1.msra.mxu0 0.0
  %3512 = vmatprep.subr.mxu0 0.0
  %3513 = vmatpush1.msra.mxu0 0.0
  %3514 = vmatprep.subr.mxu0 0.0
  %3515 = vmatpush1.msra.mxu0 0.0
  %3516 = vmatprep.subr.mxu0 0.0
  %3517 = vmatpush1.msra.mxu0 0.0
  %3518 = vmatprep.subr.mxu0 0.0
  %3519 = vmatpush1.msra.mxu0 0.0
  %3520 = vmatprep.subr.mxu0 0.0
  %3521 = vmatpush1.msra.mxu0 0.0
  %3522 = vmatprep.subr.mxu0 0.0
  %3523 = vmatpush1.msra.mxu0 0.0
  %3524 = vmatprep.subr.mxu0 0.0
  %3525 = vmatpush1.msra.mxu0 0.0
  %3526 = vmatprep.subr.mxu0 0.0
  %3527 = vmatpush1.msra.mxu0 0.0
  %3528 = vmatprep.subr.mxu0 0.0
  %3529 = vmatpush1.msra.mxu0 0.0
  %3530 = vmatprep.subr.mxu0 0.0
  %3531 = vmatpush1.msra.mxu0 0.0
  %3532 = vmatprep.mubr.f32.mxu0 0.0
  %3533 = vmatmul.mubr.f32.gmra.mrb[0].mxu0 %v3460
  %v3534 = vpop.f32.mrb[0].mxu0
  %v3535 = vadd.f32 0.0, %v3534
  %v3536 = vpop.f32.mrb[0].mxu0
  %3537 = vmatprep.mubr.f32.mxu0 0.0
  %3538 = vmatmul.mubr.f32.gmra.mrb[0].mxu0 %v3463
  %v3539 = vpop.f32.mrb[0].mxu0
  %v3540 = vadd.f32 0.0, %v3539
  %v3541 = vpop.f32.mrb[0].mxu0
  %3542 = vmatprep.mubr.f32.mxu0 0.0
  %3543 = vmatmul.mubr.f32.gmra.mrb[0].mxu0 %v3466
  %v3544 = vpop.f32.mrb[0].mxu0
  %v3545 = vadd.f32 0.0, %v3544
  %v3546 = vpop.f32.mrb[0].mxu0
  %3547 = vdwg.mxu0
  %s3548 = scalar_lea.vmem %s11, 192
  %v3549 = vld [vmem:[%s3548] sm:$0xff]
  %v3550 = vld [vmem:[%s3548 + $0x8] sm:$0xff]
  %v3551 = vld [vmem:[%s3548 + $0x10] sm:$0xff]
  %v3552 = vld [vmem:[%s3548 + $0x18] sm:$0xff]
  %v3553 = vld [vmem:[%s3548 + $0x20] sm:$0xff]
  %v3554 = vld [vmem:[%s3548 + $0x28] sm:$0xff]
  %v3555 = vld [vmem:[%s3548 + $0x30] sm:$0xff]
  %v3556 = vld [vmem:[%s3548 + $0x38] sm:$0xff]
  %v3558 = vsel %vm1043, %v3535, 0
  %v3561 = vsel %vm1043, %v3540, 0
  %v3564 = vsel %vm1043, %v3545, 0
  %3566 = vmatprep.subr.mxu0 0.0
  %3567 = vmatpush1.msra.mxu0 %v3549
  %3568 = vmatprep.subr.mxu0 0.0
  %3569 = vmatpush1.msra.mxu0 %v3550
  %3570 = vmatprep.subr.mxu0 0.0
  %3571 = vmatpush1.msra.mxu0 %v3551
  %3572 = vmatprep.subr.mxu0 0.0
  %3573 = vmatpush1.msra.mxu0 %v3552
  %3574 = vmatprep.subr.mxu0 0.0
  %3575 = vmatpush1.msra.mxu0 %v3553
  %3576 = vmatprep.subr.mxu0 0.0
  %3577 = vmatpush1.msra.mxu0 %v3554
  %3578 = vmatprep.subr.mxu0 0.0
  %3579 = vmatpush1.msra.mxu0 %v3555
  %3580 = vmatprep.subr.mxu0 0.0
  %3581 = vmatpush1.msra.mxu0 %v3556
  %3582 = vmatprep.subr.mxu0 0.0
  %3583 = vmatpush1.msra.mxu0 0.0
  %3584 = vmatprep.subr.mxu0 0.0
  %3585 = vmatpush1.msra.mxu0 0.0
  %3586 = vmatprep.subr.mxu0 0.0
  %3587 = vmatpush1.msra.mxu0 0.0
  %3588 = vmatprep.subr.mxu0 0.0
  %3589 = vmatpush1.msra.mxu0 0.0
  %3590 = vmatprep.subr.mxu0 0.0
  %3591 = vmatpush1.msra.mxu0 0.0
  %3592 = vmatprep.subr.mxu0 0.0
  %3593 = vmatpush1.msra.mxu0 0.0
  %3594 = vmatprep.subr.mxu0 0.0
  %3595 = vmatpush1.msra.mxu0 0.0
  %3596 = vmatprep.subr.mxu0 0.0
  %3597 = vmatpush1.msra.mxu0 0.0
  %3598 = vmatprep.subr.mxu0 0.0
  %3599 = vmatpush1.msra.mxu0 0.0
  %3600 = vmatprep.subr.mxu0 0.0
  %3601 = vmatpush1.msra.mxu0 0.0
  %3602 = vmatprep.subr.mxu0 0.0
  %3603 = vmatpush1.msra.mxu0 0.0
  %3604 = vmatprep.subr.mxu0 0.0
  %3605 = vmatpush1.msra.mxu0 0.0
  %3606 = vmatprep.subr.mxu0 0.0
  %3607 = vmatpush1.msra.mxu0 0.0
  %3608 = vmatprep.subr.mxu0 0.0
  %3609 = vmatpush1.msra.mxu0 0.0
  %3610 = vmatprep.subr.mxu0 0.0
  %3611 = vmatpush1.msra.mxu0 0.0
  %3612 = vmatprep.subr.mxu0 0.0
  %3613 = vmatpush1.msra.mxu0 0.0
  %3614 = vmatprep.subr.mxu0 0.0
  %3615 = vmatpush1.msra.mxu0 0.0
  %3616 = vmatprep.subr.mxu0 0.0
  %3617 = vmatpush1.msra.mxu0 0.0
  %3618 = vmatprep.subr.mxu0 0.0
  %3619 = vmatpush1.msra.mxu0 0.0
  %3620 = vmatprep.subr.mxu0 0.0
  %3621 = vmatpush1.msra.mxu0 0.0
  %3622 = vmatprep.subr.mxu0 0.0
  %3623 = vmatpush1.msra.mxu0 0.0
  %3624 = vmatprep.subr.mxu0 0.0
  %3625 = vmatpush1.msra.mxu0 0.0
  %3626 = vmatprep.subr.mxu0 0.0
  %3627 = vmatpush1.msra.mxu0 0.0
  %3628 = vmatprep.subr.mxu0 0.0
  %3629 = vmatpush1.msra.mxu0 0.0
  %3630 = vmatprep.mubr.f32.mxu0 0.0
  %3631 = vmatmul.mubr.f32.gmra.mrb[0].mxu0 %v3558
  %v3632 = vpop.f32.mrb[0].mxu0
  %v3633 = vadd.f32 0.0, %v3632
  %v3634 = vpop.f32.mrb[0].mxu0
  %3635 = vmatprep.mubr.f32.mxu0 0.0
  %3636 = vmatmul.mubr.f32.gmra.mrb[0].mxu0 %v3561
  %v3637 = vpop.f32.mrb[0].mxu0
  %v3638 = vadd.f32 0.0, %v3637
  %v3639 = vpop.f32.mrb[0].mxu0
  %3640 = vmatprep.mubr.f32.mxu0 0.0
  %3641 = vmatmul.mubr.f32.gmra.mrb[0].mxu0 %v3564
  %v3642 = vpop.f32.mrb[0].mxu0
  %v3643 = vadd.f32 0.0, %v3642
  %v3644 = vpop.f32.mrb[0].mxu0
  %3645 = vdwg.mxu0
  %v3646 = vadd.f32 %v3452, %v3633
  %v3647 = vadd.f32 %v3453, %v3638
  %v3648 = vadd.f32 %v3454, %v3643
  %3649 = vmatprep.subr.mxu0 0.0
  %3650 = vmatpush1.msra.mxu0 %v875
  %3651 = vmatprep.subr.mxu0 0.0
  %3652 = vmatpush1.msra.mxu0 0.0
  %3653 = vmatprep.subr.mxu0 0.0
  %3654 = vmatpush1.msra.mxu0 0.0
  %3655 = vmatprep.subr.mxu0 0.0
  %3656 = vmatpush1.msra.mxu0 0.0
  %3657 = vmatprep.subr.mxu0 0.0
  %3658 = vmatpush1.msra.mxu0 0.0
  %3659 = vmatprep.subr.mxu0 0.0
  %3660 = vmatpush1.msra.mxu0 0.0
  %3661 = vmatprep.subr.mxu0 0.0
  %3662 = vmatpush1.msra.mxu0 0.0
  %3663 = vmatprep.subr.mxu0 0.0
  %3664 = vmatpush1.msra.mxu0 0.0
  %3665 = vmatprep.subr.mxu0 0.0
  %3666 = vmatpush1.msra.mxu0 0.0
  %3667 = vmatprep.subr.mxu0 0.0
  %3668 = vmatpush1.msra.mxu0 0.0
  %3669 = vmatprep.subr.mxu0 0.0
  %3670 = vmatpush1.msra.mxu0 0.0
  %3671 = vmatprep.subr.mxu0 0.0
  %3672 = vmatpush1.msra.mxu0 0.0
  %3673 = vmatprep.subr.mxu0 0.0
  %3674 = vmatpush1.msra.mxu0 0.0
  %3675 = vmatprep.subr.mxu0 0.0
  %3676 = vmatpush1.msra.mxu0 0.0
  %3677 = vmatprep.subr.mxu0 0.0
  %3678 = vmatpush1.msra.mxu0 0.0
  %3679 = vmatprep.subr.mxu0 0.0
  %3680 = vmatpush1.msra.mxu0 0.0
  %3681 = vmatprep.subr.mxu0 0.0
  %3682 = vmatpush1.msra.mxu0 0.0
  %3683 = vmatprep.subr.mxu0 0.0
  %3684 = vmatpush1.msra.mxu0 0.0
  %3685 = vmatprep.subr.mxu0 0.0
  %3686 = vmatpush1.msra.mxu0 0.0
  %3687 = vmatprep.subr.mxu0 0.0
  %3688 = vmatpush1.msra.mxu0 0.0
  %3689 = vmatprep.subr.mxu0 0.0
  %3690 = vmatpush1.msra.mxu0 0.0
  %3691 = vmatprep.subr.mxu0 0.0
  %3692 = vmatpush1.msra.mxu0 0.0
  %3693 = vmatprep.subr.mxu0 0.0
  %3694 = vmatpush1.msra.mxu0 0.0
  %3695 = vmatprep.subr.mxu0 0.0
  %3696 = vmatpush1.msra.mxu0 0.0
  %3697 = vmatprep.subr.mxu0 0.0
  %3698 = vmatpush1.msra.mxu0 0.0
  %3699 = vmatprep.subr.mxu0 0.0
  %3700 = vmatpush1.msra.mxu0 0.0
  %3701 = vmatprep.subr.mxu0 0.0
  %3702 = vmatpush1.msra.mxu0 0.0
  %3703 = vmatprep.subr.mxu0 0.0
  %3704 = vmatpush1.msra.mxu0 0.0
  %3705 = vmatprep.subr.mxu0 0.0
  %3706 = vmatpush1.msra.mxu0 0.0
  %3707 = vmatprep.subr.mxu0 0.0
  %3708 = vmatpush1.msra.mxu0 0.0
  %3709 = vmatprep.subr.mxu0 0.0
  %3710 = vmatpush1.msra.mxu0 0.0
  %3711 = vmatprep.subr.mxu0 0.0
  %3712 = vmatpush1.msra.mxu0 0.0
  %3713 = vmatprep.mubr.f32.mxu0 0.0
  %3714 = vmatmul.mubr.f32.gmra.mrb[0].mxu0 %v3460
  %v3715 = vpop.f32.mrb[0].mxu0
  %v3716 = vadd.f32 0.0, %v3715
  %v3717 = vpop.f32.mrb[0].mxu0
  %3718 = vmatprep.mubr.f32.mxu0 0.0
  %3719 = vmatmul.mubr.f32.gmra.mrb[0].mxu0 %v3463
  %v3720 = vpop.f32.mrb[0].mxu0
  %v3721 = vadd.f32 0.0, %v3720
  %v3722 = vpop.f32.mrb[0].mxu0
  %3723 = vmatprep.mubr.f32.mxu0 0.0
  %3724 = vmatmul.mubr.f32.gmra.mrb[0].mxu0 %v3466
  %v3725 = vpop.f32.mrb[0].mxu0
  %v3726 = vadd.f32 0.0, %v3725
  %v3727 = vpop.f32.mrb[0].mxu0
  %3728 = vdwg.mxu0
  %s3729 = scalar_lea.vmem %s12, 192
  %v3730 = vld [vmem:[%s3729] sm:$0xff]
  %v3731 = vld [vmem:[%s3729 + $0x8] sm:$0xff]
  %v3732 = vld [vmem:[%s3729 + $0x10] sm:$0xff]
  %v3733 = vld [vmem:[%s3729 + $0x18] sm:$0xff]
  %v3734 = vld [vmem:[%s3729 + $0x20] sm:$0xff]
  %v3735 = vld [vmem:[%s3729 + $0x28] sm:$0xff]
  %v3736 = vld [vmem:[%s3729 + $0x30] sm:$0xff]
  %v3737 = vld [vmem:[%s3729 + $0x38] sm:$0xff]
  %v3739 = vsel %vm1043, %v3716, 0
  %v3742 = vsel %vm1043, %v3721, 0
  %v3745 = vsel %vm1043, %v3726, 0
  %3747 = vmatprep.subr.mxu0 0.0
  %3748 = vmatpush1.msra.mxu0 %v3730
  %3749 = vmatprep.subr.mxu0 0.0
  %3750 = vmatpush1.msra.mxu0 %v3731
  %3751 = vmatprep.subr.mxu0 0.0
  %3752 = vmatpush1.msra.mxu0 %v3732
  %3753 = vmatprep.subr.mxu0 0.0
  %3754 = vmatpush1.msra.mxu0 %v3733
  %3755 = vmatprep.subr.mxu0 0.0
  %3756 = vmatpush1.msra.mxu0 %v3734
  %3757 = vmatprep.subr.mxu0 0.0
  %3758 = vmatpush1.msra.mxu0 %v3735
  %3759 = vmatprep.subr.mxu0 0.0
  %3760 = vmatpush1.msra.mxu0 %v3736
  %3761 = vmatprep.subr.mxu0 0.0
  %3762 = vmatpush1.msra.mxu0 %v3737
  %3763 = vmatprep.subr.mxu0 0.0
  %3764 = vmatpush1.msra.mxu0 0.0
  %3765 = vmatprep.subr.mxu0 0.0
  %3766 = vmatpush1.msra.mxu0 0.0
  %3767 = vmatprep.subr.mxu0 0.0
  %3768 = vmatpush1.msra.mxu0 0.0
  %3769 = vmatprep.subr.mxu0 0.0
  %3770 = vmatpush1.msra.mxu0 0.0
  %3771 = vmatprep.subr.mxu0 0.0
  %3772 = vmatpush1.msra.mxu0 0.0
  %3773 = vmatprep.subr.mxu0 0.0
  %3774 = vmatpush1.msra.mxu0 0.0
  %3775 = vmatprep.subr.mxu0 0.0
  %3776 = vmatpush1.msra.mxu0 0.0
  %3777 = vmatprep.subr.mxu0 0.0
  %3778 = vmatpush1.msra.mxu0 0.0
  %3779 = vmatprep.subr.mxu0 0.0
  %3780 = vmatpush1.msra.mxu0 0.0
  %3781 = vmatprep.subr.mxu0 0.0
  %3782 = vmatpush1.msra.mxu0 0.0
  %3783 = vmatprep.subr.mxu0 0.0
  %3784 = vmatpush1.msra.mxu0 0.0
  %3785 = vmatprep.subr.mxu0 0.0
  %3786 = vmatpush1.msra.mxu0 0.0
  %3787 = vmatprep.subr.mxu0 0.0
  %3788 = vmatpush1.msra.mxu0 0.0
  %3789 = vmatprep.subr.mxu0 0.0
  %3790 = vmatpush1.msra.mxu0 0.0
  %3791 = vmatprep.subr.mxu0 0.0
  %3792 = vmatpush1.msra.mxu0 0.0
  %3793 = vmatprep.subr.mxu0 0.0
  %3794 = vmatpush1.msra.mxu0 0.0
  %3795 = vmatprep.subr.mxu0 0.0
  %3796 = vmatpush1.msra.mxu0 0.0
  %3797 = vmatprep.subr.mxu0 0.0
  %3798 = vmatpush1.msra.mxu0 0.0
  %3799 = vmatprep.subr.mxu0 0.0
  %3800 = vmatpush1.msra.mxu0 0.0
  %3801 = vmatprep.subr.mxu0 0.0
  %3802 = vmatpush1.msra.mxu0 0.0
  %3803 = vmatprep.subr.mxu0 0.0
  %3804 = vmatpush1.msra.mxu0 0.0
  %3805 = vmatprep.subr.mxu0 0.0
  %3806 = vmatpush1.msra.mxu0 0.0
  %3807 = vmatprep.subr.mxu0 0.0
  %3808 = vmatpush1.msra.mxu0 0.0
  %3809 = vmatprep.subr.mxu0 0.0
  %3810 = vmatpush1.msra.mxu0 0.0
  %3811 = vmatprep.mubr.f32.mxu0 0.0
  %3812 = vmatmul.mubr.f32.gmra.mrb[0].mxu0 %v3739
  %v3813 = vpop.f32.mrb[0].mxu0
  %v3814 = vadd.f32 0.0, %v3813
  %v3815 = vpop.f32.mrb[0].mxu0
  %3816 = vmatprep.mubr.f32.mxu0 0.0
  %3817 = vmatmul.mubr.f32.gmra.mrb[0].mxu0 %v3742
  %v3818 = vpop.f32.mrb[0].mxu0
  %v3819 = vadd.f32 0.0, %v3818
  %v3820 = vpop.f32.mrb[0].mxu0
  %3821 = vmatprep.mubr.f32.mxu0 0.0
  %3822 = vmatmul.mubr.f32.gmra.mrb[0].mxu0 %v3745
  %v3823 = vpop.f32.mrb[0].mxu0
  %v3824 = vadd.f32 0.0, %v3823
  %v3825 = vpop.f32.mrb[0].mxu0
  %3826 = vdwg.mxu0
  %v3827 = vadd.f32 %v3646, %v3814
  %v3828 = vadd.f32 %v3647, %v3819
  %v3829 = vadd.f32 %v3648, %v3824
  %s3830 = scalar_lea.vmem %s10, 96
  %v3831 = vld [vmem:[%s3830] sm:$0xff]
  %v3832 = vld [vmem:[%s3830 + $0x8] sm:$0xff]
  %v3833 = vld [vmem:[%s3830 + $0x10] sm:$0x1]
  %v3835 = vsel %vm877, %v3831, 0
  %v3838 = vsel %vm877, %v3832, 0
  %v3841 = vsel %vm877, %v3833, 0
  %3843 = vmatprep.subr.mxu0 0.0
  %3844 = vmatpush1.msra.mxu0 %v2338
  %3845 = vmatprep.subr.mxu0 0.0
  %3846 = vmatpush1.msra.mxu0 0.0
  %3847 = vmatprep.subr.mxu0 0.0
  %3848 = vmatpush1.msra.mxu0 0.0
  %3849 = vmatprep.subr.mxu0 0.0
  %3850 = vmatpush1.msra.mxu0 0.0
  %3851 = vmatprep.subr.mxu0 0.0
  %3852 = vmatpush1.msra.mxu0 0.0
  %3853 = vmatprep.subr.mxu0 0.0
  %3854 = vmatpush1.msra.mxu0 0.0
  %3855 = vmatprep.subr.mxu0 0.0
  %3856 = vmatpush1.msra.mxu0 0.0
  %3857 = vmatprep.subr.mxu0 0.0
  %3858 = vmatpush1.msra.mxu0 0.0
  %3859 = vmatprep.subr.mxu0 0.0
  %3860 = vmatpush1.msra.mxu0 0.0
  %3861 = vmatprep.subr.mxu0 0.0
  %3862 = vmatpush1.msra.mxu0 0.0
  %3863 = vmatprep.subr.mxu0 0.0
  %3864 = vmatpush1.msra.mxu0 0.0
  %3865 = vmatprep.subr.mxu0 0.0
  %3866 = vmatpush1.msra.mxu0 0.0
  %3867 = vmatprep.subr.mxu0 0.0
  %3868 = vmatpush1.msra.mxu0 0.0
  %3869 = vmatprep.subr.mxu0 0.0
  %3870 = vmatpush1.msra.mxu0 0.0
  %3871 = vmatprep.subr.mxu0 0.0
  %3872 = vmatpush1.msra.mxu0 0.0
  %3873 = vmatprep.subr.mxu0 0.0
  %3874 = vmatpush1.msra.mxu0 0.0
  %3875 = vmatprep.subr.mxu0 0.0
  %3876 = vmatpush1.msra.mxu0 0.0
  %3877 = vmatprep.subr.mxu0 0.0
  %3878 = vmatpush1.msra.mxu0 0.0
  %3879 = vmatprep.subr.mxu0 0.0
  %3880 = vmatpush1.msra.mxu0 0.0
  %3881 = vmatprep.subr.mxu0 0.0
  %3882 = vmatpush1.msra.mxu0 0.0
  %3883 = vmatprep.subr.mxu0 0.0
  %3884 = vmatpush1.msra.mxu0 0.0
  %3885 = vmatprep.subr.mxu0 0.0
  %3886 = vmatpush1.msra.mxu0 0.0
  %3887 = vmatprep.subr.mxu0 0.0
  %3888 = vmatpush1.msra.mxu0 0.0
  %3889 = vmatprep.subr.mxu0 0.0
  %3890 = vmatpush1.msra.mxu0 0.0
  %3891 = vmatprep.subr.mxu0 0.0
  %3892 = vmatpush1.msra.mxu0 0.0
  %3893 = vmatprep.subr.mxu0 0.0
  %3894 = vmatpush1.msra.mxu0 0.0
  %3895 = vmatprep.subr.mxu0 0.0
  %3896 = vmatpush1.msra.mxu0 0.0
  %3897 = vmatprep.subr.mxu0 0.0
  %3898 = vmatpush1.msra.mxu0 0.0
  %3899 = vmatprep.subr.mxu0 0.0
  %3900 = vmatpush1.msra.mxu0 0.0
  %3901 = vmatprep.subr.mxu0 0.0
  %3902 = vmatpush1.msra.mxu0 0.0
  %3903 = vmatprep.subr.mxu0 0.0
  %3904 = vmatpush1.msra.mxu0 0.0
  %3905 = vmatprep.subr.mxu0 0.0
  %3906 = vmatpush1.msra.mxu0 0.0
  %3907 = vmatprep.mubr.f32.mxu0 0.0
  %3908 = vmatmul.mubr.f32.gmra.mrb[0].mxu0 %v3835
  %v3909 = vpop.f32.mrb[0].mxu0
  %v3910 = vadd.f32 0.0, %v3909
  %v3911 = vpop.f32.mrb[0].mxu0
  %3912 = vmatprep.mubr.f32.mxu0 0.0
  %3913 = vmatmul.mubr.f32.gmra.mrb[0].mxu0 %v3838
  %v3914 = vpop.f32.mrb[0].mxu0
  %v3915 = vadd.f32 0.0, %v3914
  %v3916 = vpop.f32.mrb[0].mxu0
  %3917 = vmatprep.mubr.f32.mxu0 0.0
  %3918 = vmatmul.mubr.f32.gmra.mrb[0].mxu0 %v3841
  %v3919 = vpop.f32.mrb[0].mxu0
  %v3920 = vadd.f32 0.0, %v3919
  %v3921 = vpop.f32.mrb[0].mxu0
  %3922 = vdwg.mxu0
  %s3923 = scalar_lea.vmem %s11, 256
  %v3924 = vld [vmem:[%s3923] sm:$0xff]
  %v3925 = vld [vmem:[%s3923 + $0x8] sm:$0xff]
  %v3926 = vld [vmem:[%s3923 + $0x10] sm:$0xff]
  %v3927 = vld [vmem:[%s3923 + $0x18] sm:$0xff]
  %v3928 = vld [vmem:[%s3923 + $0x20] sm:$0xff]
  %v3929 = vld [vmem:[%s3923 + $0x28] sm:$0xff]
  %v3930 = vld [vmem:[%s3923 + $0x30] sm:$0xff]
  %v3931 = vld [vmem:[%s3923 + $0x38] sm:$0xff]
  %v3933 = vsel %vm1043, %v3910, 0
  %v3936 = vsel %vm1043, %v3915, 0
  %v3939 = vsel %vm1043, %v3920, 0
  %3941 = vmatprep.subr.mxu0 0.0
  %3942 = vmatpush1.msra.mxu0 %v3924
  %3943 = vmatprep.subr.mxu0 0.0
  %3944 = vmatpush1.msra.mxu0 %v3925
  %3945 = vmatprep.subr.mxu0 0.0
  %3946 = vmatpush1.msra.mxu0 %v3926
  %3947 = vmatprep.subr.mxu0 0.0
  %3948 = vmatpush1.msra.mxu0 %v3927
  %3949 = vmatprep.subr.mxu0 0.0
  %3950 = vmatpush1.msra.mxu0 %v3928
  %3951 = vmatprep.subr.mxu0 0.0
  %3952 = vmatpush1.msra.mxu0 %v3929
  %3953 = vmatprep.subr.mxu0 0.0
  %3954 = vmatpush1.msra.mxu0 %v3930
  %3955 = vmatprep.subr.mxu0 0.0
  %3956 = vmatpush1.msra.mxu0 %v3931
  %3957 = vmatprep.subr.mxu0 0.0
  %3958 = vmatpush1.msra.mxu0 0.0
  %3959 = vmatprep.subr.mxu0 0.0
  %3960 = vmatpush1.msra.mxu0 0.0
  %3961 = vmatprep.subr.mxu0 0.0
  %3962 = vmatpush1.msra.mxu0 0.0
  %3963 = vmatprep.subr.mxu0 0.0
  %3964 = vmatpush1.msra.mxu0 0.0
  %3965 = vmatprep.subr.mxu0 0.0
  %3966 = vmatpush1.msra.mxu0 0.0
  %3967 = vmatprep.subr.mxu0 0.0
  %3968 = vmatpush1.msra.mxu0 0.0
  %3969 = vmatprep.subr.mxu0 0.0
  %3970 = vmatpush1.msra.mxu0 0.0
  %3971 = vmatprep.subr.mxu0 0.0
  %3972 = vmatpush1.msra.mxu0 0.0
  %3973 = vmatprep.subr.mxu0 0.0
  %3974 = vmatpush1.msra.mxu0 0.0
  %3975 = vmatprep.subr.mxu0 0.0
  %3976 = vmatpush1.msra.mxu0 0.0
  %3977 = vmatprep.subr.mxu0 0.0
  %3978 = vmatpush1.msra.mxu0 0.0
  %3979 = vmatprep.subr.mxu0 0.0
  %3980 = vmatpush1.msra.mxu0 0.0
  %3981 = vmatprep.subr.mxu0 0.0
  %3982 = vmatpush1.msra.mxu0 0.0
  %3983 = vmatprep.subr.mxu0 0.0
  %3984 = vmatpush1.msra.mxu0 0.0
  %3985 = vmatprep.subr.mxu0 0.0
  %3986 = vmatpush1.msra.mxu0 0.0
  %3987 = vmatprep.subr.mxu0 0.0
  %3988 = vmatpush1.msra.mxu0 0.0
  %3989 = vmatprep.subr.mxu0 0.0
  %3990 = vmatpush1.msra.mxu0 0.0
  %3991 = vmatprep.subr.mxu0 0.0
  %3992 = vmatpush1.msra.mxu0 0.0
  %3993 = vmatprep.subr.mxu0 0.0
  %3994 = vmatpush1.msra.mxu0 0.0
  %3995 = vmatprep.subr.mxu0 0.0
  %3996 = vmatpush1.msra.mxu0 0.0
  %3997 = vmatprep.subr.mxu0 0.0
  %3998 = vmatpush1.msra.mxu0 0.0
  %3999 = vmatprep.subr.mxu0 0.0
  %4000 = vmatpush1.msra.mxu0 0.0
  %4001 = vmatprep.subr.mxu0 0.0
  %4002 = vmatpush1.msra.mxu0 0.0
  %4003 = vmatprep.subr.mxu0 0.0
  %4004 = vmatpush1.msra.mxu0 0.0
  %4005 = vmatprep.mubr.f32.mxu0 0.0
  %4006 = vmatmul.mubr.f32.gmra.mrb[0].mxu0 %v3933
  %v4007 = vpop.f32.mrb[0].mxu0
  %v4008 = vadd.f32 0.0, %v4007
  %v4009 = vpop.f32.mrb[0].mxu0
  %4010 = vmatprep.mubr.f32.mxu0 0.0
  %4011 = vmatmul.mubr.f32.gmra.mrb[0].mxu0 %v3936
  %v4012 = vpop.f32.mrb[0].mxu0
  %v4013 = vadd.f32 0.0, %v4012
  %v4014 = vpop.f32.mrb[0].mxu0
  %4015 = vmatprep.mubr.f32.mxu0 0.0
  %4016 = vmatmul.mubr.f32.gmra.mrb[0].mxu0 %v3939
  %v4017 = vpop.f32.mrb[0].mxu0
  %v4018 = vadd.f32 0.0, %v4017
  %v4019 = vpop.f32.mrb[0].mxu0
  %4020 = vdwg.mxu0
  %v4021 = vadd.f32 %v3827, %v4008
  %v4022 = vadd.f32 %v3828, %v4013
  %v4023 = vadd.f32 %v3829, %v4018
  %4024 = vmatprep.subr.mxu0 0.0
  %4025 = vmatpush1.msra.mxu0 %v875
  %4026 = vmatprep.subr.mxu0 0.0
  %4027 = vmatpush1.msra.mxu0 0.0
  %4028 = vmatprep.subr.mxu0 0.0
  %4029 = vmatpush1.msra.mxu0 0.0
  %4030 = vmatprep.subr.mxu0 0.0
  %4031 = vmatpush1.msra.mxu0 0.0
  %4032 = vmatprep.subr.mxu0 0.0
  %4033 = vmatpush1.msra.mxu0 0.0
  %4034 = vmatprep.subr.mxu0 0.0
  %4035 = vmatpush1.msra.mxu0 0.0
  %4036 = vmatprep.subr.mxu0 0.0
  %4037 = vmatpush1.msra.mxu0 0.0
  %4038 = vmatprep.subr.mxu0 0.0
  %4039 = vmatpush1.msra.mxu0 0.0
  %4040 = vmatprep.subr.mxu0 0.0
  %4041 = vmatpush1.msra.mxu0 0.0
  %4042 = vmatprep.subr.mxu0 0.0
  %4043 = vmatpush1.msra.mxu0 0.0
  %4044 = vmatprep.subr.mxu0 0.0
  %4045 = vmatpush1.msra.mxu0 0.0
  %4046 = vmatprep.subr.mxu0 0.0
  %4047 = vmatpush1.msra.mxu0 0.0
  %4048 = vmatprep.subr.mxu0 0.0
  %4049 = vmatpush1.msra.mxu0 0.0
  %4050 = vmatprep.subr.mxu0 0.0
  %4051 = vmatpush1.msra.mxu0 0.0
  %4052 = vmatprep.subr.mxu0 0.0
  %4053 = vmatpush1.msra.mxu0 0.0
  %4054 = vmatprep.subr.mxu0 0.0
  %4055 = vmatpush1.msra.mxu0 0.0
  %4056 = vmatprep.subr.mxu0 0.0
  %4057 = vmatpush1.msra.mxu0 0.0
  %4058 = vmatprep.subr.mxu0 0.0
  %4059 = vmatpush1.msra.mxu0 0.0
  %4060 = vmatprep.subr.mxu0 0.0
  %4061 = vmatpush1.msra.mxu0 0.0
  %4062 = vmatprep.subr.mxu0 0.0
  %4063 = vmatpush1.msra.mxu0 0.0
  %4064 = vmatprep.subr.mxu0 0.0
  %4065 = vmatpush1.msra.mxu0 0.0
  %4066 = vmatprep.subr.mxu0 0.0
  %4067 = vmatpush1.msra.mxu0 0.0
  %4068 = vmatprep.subr.mxu0 0.0
  %4069 = vmatpush1.msra.mxu0 0.0
  %4070 = vmatprep.subr.mxu0 0.0
  %4071 = vmatpush1.msra.mxu0 0.0
  %4072 = vmatprep.subr.mxu0 0.0
  %4073 = vmatpush1.msra.mxu0 0.0
  %4074 = vmatprep.subr.mxu0 0.0
  %4075 = vmatpush1.msra.mxu0 0.0
  %4076 = vmatprep.subr.mxu0 0.0
  %4077 = vmatpush1.msra.mxu0 0.0
  %4078 = vmatprep.subr.mxu0 0.0
  %4079 = vmatpush1.msra.mxu0 0.0
  %4080 = vmatprep.subr.mxu0 0.0
  %4081 = vmatpush1.msra.mxu0 0.0
  %4082 = vmatprep.subr.mxu0 0.0
  %4083 = vmatpush1.msra.mxu0 0.0
  %4084 = vmatprep.subr.mxu0 0.0
  %4085 = vmatpush1.msra.mxu0 0.0
  %4086 = vmatprep.subr.mxu0 0.0
  %4087 = vmatpush1.msra.mxu0 0.0
  %4088 = vmatprep.mubr.f32.mxu0 0.0
  %4089 = vmatmul.mubr.f32.gmra.mrb[0].mxu0 %v3835
  %v4090 = vpop.f32.mrb[0].mxu0
  %v4091 = vadd.f32 0.0, %v4090
  %v4092 = vpop.f32.mrb[0].mxu0
  %4093 = vmatprep.mubr.f32.mxu0 0.0
  %4094 = vmatmul.mubr.f32.gmra.mrb[0].mxu0 %v3838
  %v4095 = vpop.f32.mrb[0].mxu0
  %v4096 = vadd.f32 0.0, %v4095
  %v4097 = vpop.f32.mrb[0].mxu0
  %4098 = vmatprep.mubr.f32.mxu0 0.0
  %4099 = vmatmul.mubr.f32.gmra.mrb[0].mxu0 %v3841
  %v4100 = vpop.f32.mrb[0].mxu0
  %v4101 = vadd.f32 0.0, %v4100
  %v4102 = vpop.f32.mrb[0].mxu0
  %4103 = vdwg.mxu0
  %s4104 = scalar_lea.vmem %s12, 256
  %v4105 = vld [vmem:[%s4104] sm:$0xff]
  %v4106 = vld [vmem:[%s4104 + $0x8] sm:$0xff]
  %v4107 = vld [vmem:[%s4104 + $0x10] sm:$0xff]
  %v4108 = vld [vmem:[%s4104 + $0x18] sm:$0xff]
  %v4109 = vld [vmem:[%s4104 + $0x20] sm:$0xff]
  %v4110 = vld [vmem:[%s4104 + $0x28] sm:$0xff]
  %v4111 = vld [vmem:[%s4104 + $0x30] sm:$0xff]
  %v4112 = vld [vmem:[%s4104 + $0x38] sm:$0xff]
  %v4114 = vsel %vm1043, %v4091, 0
  %v4117 = vsel %vm1043, %v4096, 0
  %v4120 = vsel %vm1043, %v4101, 0
  %4122 = vmatprep.subr.mxu0 0.0
  %4123 = vmatpush1.msra.mxu0 %v4105
  %4124 = vmatprep.subr.mxu0 0.0
  %4125 = vmatpush1.msra.mxu0 %v4106
  %4126 = vmatprep.subr.mxu0 0.0
  %4127 = vmatpush1.msra.mxu0 %v4107
  %4128 = vmatprep.subr.mxu0 0.0
  %4129 = vmatpush1.msra.mxu0 %v4108
  %4130 = vmatprep.subr.mxu0 0.0
  %4131 = vmatpush1.msra.mxu0 %v4109
  %4132 = vmatprep.subr.mxu0 0.0
  %4133 = vmatpush1.msra.mxu0 %v4110
  %4134 = vmatprep.subr.mxu0 0.0
  %4135 = vmatpush1.msra.mxu0 %v4111
  %4136 = vmatprep.subr.mxu0 0.0
  %4137 = vmatpush1.msra.mxu0 %v4112
  %4138 = vmatprep.subr.mxu0 0.0
  %4139 = vmatpush1.msra.mxu0 0.0
  %4140 = vmatprep.subr.mxu0 0.0
  %4141 = vmatpush1.msra.mxu0 0.0
  %4142 = vmatprep.subr.mxu0 0.0
  %4143 = vmatpush1.msra.mxu0 0.0
  %4144 = vmatprep.subr.mxu0 0.0
  %4145 = vmatpush1.msra.mxu0 0.0
  %4146 = vmatprep.subr.mxu0 0.0
  %4147 = vmatpush1.msra.mxu0 0.0
  %4148 = vmatprep.subr.mxu0 0.0
  %4149 = vmatpush1.msra.mxu0 0.0
  %4150 = vmatprep.subr.mxu0 0.0
  %4151 = vmatpush1.msra.mxu0 0.0
  %4152 = vmatprep.subr.mxu0 0.0
  %4153 = vmatpush1.msra.mxu0 0.0
  %4154 = vmatprep.subr.mxu0 0.0
  %4155 = vmatpush1.msra.mxu0 0.0
  %4156 = vmatprep.subr.mxu0 0.0
  %4157 = vmatpush1.msra.mxu0 0.0
  %4158 = vmatprep.subr.mxu0 0.0
  %4159 = vmatpush1.msra.mxu0 0.0
  %4160 = vmatprep.subr.mxu0 0.0
  %4161 = vmatpush1.msra.mxu0 0.0
  %4162 = vmatprep.subr.mxu0 0.0
  %4163 = vmatpush1.msra.mxu0 0.0
  %4164 = vmatprep.subr.mxu0 0.0
  %4165 = vmatpush1.msra.mxu0 0.0
  %4166 = vmatprep.subr.mxu0 0.0
  %4167 = vmatpush1.msra.mxu0 0.0
  %4168 = vmatprep.subr.mxu0 0.0
  %4169 = vmatpush1.msra.mxu0 0.0
  %4170 = vmatprep.subr.mxu0 0.0
  %4171 = vmatpush1.msra.mxu0 0.0
  %4172 = vmatprep.subr.mxu0 0.0
  %4173 = vmatpush1.msra.mxu0 0.0
  %4174 = vmatprep.subr.mxu0 0.0
  %4175 = vmatpush1.msra.mxu0 0.0
  %4176 = vmatprep.subr.mxu0 0.0
  %4177 = vmatpush1.msra.mxu0 0.0
  %4178 = vmatprep.subr.mxu0 0.0
  %4179 = vmatpush1.msra.mxu0 0.0
  %4180 = vmatprep.subr.mxu0 0.0
  %4181 = vmatpush1.msra.mxu0 0.0
  %4182 = vmatprep.subr.mxu0 0.0
  %4183 = vmatpush1.msra.mxu0 0.0
  %4184 = vmatprep.subr.mxu0 0.0
  %4185 = vmatpush1.msra.mxu0 0.0
  %4186 = vmatprep.mubr.f32.mxu0 0.0
  %4187 = vmatmul.mubr.f32.gmra.mrb[0].mxu0 %v4114
  %v4188 = vpop.f32.mrb[0].mxu0
  %v4189 = vadd.f32 0.0, %v4188
  %v4190 = vpop.f32.mrb[0].mxu0
  %4191 = vmatprep.mubr.f32.mxu0 0.0
  %4192 = vmatmul.mubr.f32.gmra.mrb[0].mxu0 %v4117
  %v4193 = vpop.f32.mrb[0].mxu0
  %v4194 = vadd.f32 0.0, %v4193
  %v4195 = vpop.f32.mrb[0].mxu0
  %4196 = vmatprep.mubr.f32.mxu0 0.0
  %4197 = vmatmul.mubr.f32.gmra.mrb[0].mxu0 %v4120
  %v4198 = vpop.f32.mrb[0].mxu0
  %v4199 = vadd.f32 0.0, %v4198
  %v4200 = vpop.f32.mrb[0].mxu0
  %4201 = vdwg.mxu0
  %v4202 = vadd.f32 %v4021, %v4189
  %v4203 = vadd.f32 %v4022, %v4194
  %v4204 = vadd.f32 %v4023, %v4199
  %v4205 = vld [vmem:[%s13] sm:$0x1]
  %v4207 = vlaneseq
  %v4208 = vshrl.u32 %v4207, 7
  %v4209 = vsub.s32 0, %v4208
  %v4210 = vrot.slane %v4205, %v4209
  %v4212 = vadd.f32 %v4202, %v4210
  %v4213 = vadd.f32 %v4203, %v4210
  %v4214 = vadd.f32 %v4204, %v4210
  %v4215 = vld [vmem:[%s14] sm:$0xff]
  %v4216 = vld [vmem:[%s14 + $0x8] sm:$0xff]
  %v4217 = vld [vmem:[%s14 + $0x10] sm:$0x1]
  %4219 = vset.pattern.permute.xlu0 0
  %4220 = vperm.xlu0 %4219, %v4215
  %v4221 = vpop.permute.xlu0 %4220
  %4224 = vset.pattern.permute.xlu0 0
  %4225 = vperm.xlu0 %4224, %v4216
  %v4226 = vpop.permute.xlu0 %4225
  %4229 = vset.pattern.permute.xlu0 0
  %4230 = vperm.xlu0 %4229, %v4217
  %v4231 = vpop.permute.xlu0 %4230
  %v4233 = vmul.f32 %v4212, %v4221
  %v4234 = vmul.f32 %v4213, %v4226
  %v4235 = vmul.f32 %v4214, %v4231
  %vm4236 = vcmask 261120
  %4237 = vst.msk [vmem:[%s15] sm:$0xff] %vm4236, %v4233
  %4238 = vst.msk [vmem:[%s15 + $0x8] sm:$0xff] %vm4236, %v4234
  %vm4239 = vcmask 253952
  %4240 = vst.msk [vmem:[%s15 + $0x10] sm:$0x1] %vm4239, %v4235
  // Predicated region
  $region62: #{degli_ed_forward.1} parent=0 // pred_check
    _
  $region63: #{degli_ed_forward.1} parent=0 // pred_check_branch
    %4242 = sbr.rel (0) target = $region65
  $region64: #{degli_ed_forward.1} parent=0 // pred_region
    _
  $region65: #{degli_ed_forward.1} parent=0 // pred_fallthru
    _
  // Predicated region
  $region66: #{degli_ed_forward.1} parent=0 // pred_check
    _
  $region67: #{degli_ed_forward.1} parent=0 // pred_check_branch
    %4244 = sbr.rel (0) target = $region69
  $region68: #{degli_ed_forward.1} parent=0 // pred_region
    _
  $region69: #{degli_ed_forward.1} parent=0 // pred_fallthru
    _

</llo_original>
